<compile_context>
chip_gen: v6e
topology: v6e:2x2x1
jax: 0.10.0
libtpu: 0.0.40
codegen_flags: <defaults>
</compile_context>

<pallas_src>
import jax
import jax.numpy as jnp
from jax.experimental import pallas as pl
from jax.experimental.pallas import tpu as pltpu

# ---------------- config (small synthetic BERT) ----------------
VOCAB = 100
HIDDEN = 32
N_HEADS = 2
HEAD_DIM = HIDDEN // N_HEADS
INTERMEDIATE = 64
N_LAYERS = 2
SEQ = 8
BATCH = 2
N_DOMAINS = 3
N_CLASSES = 2
SUPERVISION_LAYER = 2            # hidden_states index: 0 = embeddings, 1..N_LAYERS = layers
LN_EPS = 1e-12

R = BATCH * SEQ                  # flattened activation rows
VOCAB_PAD = ((VOCAB + 7) // 8) * 8   # 104 (keep embedding block 8-row aligned)

assert BATCH <= 8 and N_CLASSES <= 8 and 0 <= SUPERVISION_LAYER <= N_LAYERS

# ---------------- packed constant slab layout (one f32 array, lane width 64) ----
SLAB_W = 64
ROW_EMB_LN = 0                                    # rows 0..1: embeddings LN gamma / beta
ROW_POS = 8                                       # rows 8..8+R: pos+type embeddings, pre-tiled to R rows
ROW_LVEC = 24                                     # per-layer vectors, 16-row stride
ROW_LVEC_STRIDE = 16
#   per-layer vector rows: +0 bq +1 bk +2 bv +3 bo +4 b1 +5 b2 +6 ln1_g +7 ln1_b +8 ln2_g +9 ln2_b
ROW_HEADB = ROW_LVEC + ROW_LVEC_STRIDE * N_LAYERS          # 56: pool_b, then [cls_b | dom_b]
ROW_WORDEMB = ROW_HEADB + 8                                # 64: word embedding rows (VOCAB_PAD)
ROW_FFN = ROW_WORDEMB + VOCAB_PAD                          # 168: per-layer [w1 ; w2] blocks
ROW_FFN_STRIDE = HIDDEN + INTERMEDIATE                     # 96
ROW_SQ = ROW_FFN + ROW_FFN_STRIDE * N_LAYERS               # 360: (H,H) square matrices
ROW_SQ_STRIDE = HIDDEN
#   square-slot order: layer l -> 4l+0 wq, 4l+1 wk, 4l+2 wv, 4l+3 wo;
#   then 4L = pool_w; 4L+1 = [cls_w | dom_w] (lanes 0:2 / 2:5)
N_SQ = 4 * N_LAYERS + 2
SLAB_ROWS = ROW_SQ + ROW_SQ_STRIDE * N_SQ                  # 680

INT_COLS = R + 3                 # cols 0:R mask, R ids, R+1 domains, R+2 labels
OUT_CLS_CE_LANE = 8
OUT_DOM_CE_LANE = 9


# ---------------- in-kernel helpers ----------------
def _layernorm(x, g, b):
    mu = jnp.mean(x, axis=-1, keepdims=True)
    var = jnp.mean((x - mu) ** 2, axis=-1, keepdims=True)
    return (x - mu) * jax.lax.rsqrt(var + LN_EPS) * g + b


def _gelu(x):
    # TODO(synk): HF BERT uses exact erf-GELU; tanh approximation used because
    # lax.erf has no guaranteed Mosaic lowering (drift ~1e-3 vs reference).
    c = 0.7978845608028654  # sqrt(2/pi)
    return 0.5 * x * (1.0 + jnp.tanh(c * (x + 0.044715 * x * x * x)))


def _softmax_lastdim(s):
    m = jnp.max(s, axis=-1, keepdims=True)
    e = jnp.exp(s - m)
    return e / jnp.sum(e, axis=-1, keepdims=True)


def _ce_mean(logits, targets):
    """Mean cross entropy. logits (B, C) f32, targets (B, 1) int32 -> (1, 1)."""
    onehot = jax.lax.broadcasted_iota(jnp.int32, logits.shape, 1) == targets
    m = jnp.max(logits, axis=-1, keepdims=True)
    lse = jnp.log(jnp.sum(jnp.exp(logits - m), axis=-1, keepdims=True)) + m
    nll = lse - jnp.sum(jnp.where(onehot, logits, 0.0), axis=-1, keepdims=True)
    return jnp.sum(nll, axis=0, keepdims=True) * (1.0 / logits.shape[0])


# ---------------- fused forward kernel ----------------
def fused_forward_kernel(ints_ref, w_ref, out_ref):
    f32 = jnp.float32
    H, I, NH, DH, B, S = HIDDEN, INTERMEDIATE, N_HEADS, HEAD_DIM, BATCH, SEQ

    def row(r, width=HIDDEN):
        return w_ref[r:r + 1, 0:width]

    def sqmat(i):
        r = ROW_SQ + ROW_SQ_STRIDE * i
        return w_ref[r:r + H, 0:H]

    # ---- dynamic inputs (single int32 operand) ----
    key_mask = ints_ref[:, 0:R].astype(f32)          # (R, R) key mask, already broadcast over query rows
    ids_col = ints_ref[:, R:R + 1]                   # (R, 1) token ids
    dom_t = ints_ref[0:B, R + 1:R + 2]               # (B, 1)
    lab_t = ints_ref[0:B, R + 2:R + 3]               # (B, 1)

    # ---- embeddings: one-hot gather on the idle MXU + pos/type + LayerNorm ----
    word_emb = w_ref[ROW_WORDEMB:ROW_WORDEMB + VOCAB_PAD, 0:H]            # (VOCAB_PAD, H)
    onehot = (jax.lax.broadcasted_iota(jnp.int32, (R, VOCAB_PAD), 1)
              == ids_col).astype(f32)                                     # (R, VOCAB_PAD)
    x = jnp.dot(onehot, word_emb, preferred_element_type=f32)             # (R, H)
    x = x + w_ref[ROW_POS:ROW_POS + R, 0:H]                               # + position + token-type
    x = _layernorm(x, row(ROW_EMB_LN), row(ROW_EMB_LN + 1))

    # ---- additive attention bias over flattened (R, R) scores:
    #      -1e4 for masked keys (BERT convention), -1e9 for cross-batch pairs ----
    ri = jax.lax.broadcasted_iota(jnp.int32, (R, R), 0)
    ci = jax.lax.broadcasted_iota(jnp.int32, (R, R), 1)
    same_batch = jnp.zeros((R, R), jnp.bool_)
    for b in range(B):                                # static unroll, no integer div needed
        in_row = (ri >= b * S) & (ri < (b + 1) * S)
        in_col = (ci >= b * S) & (ci < (b + 1) * S)
        same_batch = same_batch | (in_row & in_col)
    attn_bias = (1.0 - key_mask) * (-10000.0) + jnp.where(same_batch, 0.0, -1e9)

    # per-head lane masks (constant): elementwise masking instead of lane slicing/concat
    lane = jax.lax.broadcasted_iota(jnp.int32, (1, H), 1)
    head_masks = [((lane >= h * DH) & (lane < (h + 1) * DH)).astype(f32) for h in range(NH)]
    scale = 1.0 / (DH ** 0.5)

    # CLS-row selector (B, R): row b picks flattened row b*S (matmul, not strided slicing)
    sel = (jax.lax.broadcasted_iota(jnp.int32, (B, R), 1)
           == jax.lax.broadcasted_iota(jnp.int32, (B, R), 0) * S).astype(f32)

    sup_cls = jnp.dot(sel, x, preferred_element_type=f32) if SUPERVISION_LAYER == 0 else None

    # ---- encoder layers (static unroll) ----
    for l in range(N_LAYERS):
        vb = ROW_LVEC + ROW_LVEC_STRIDE * l
        fb = ROW_FFN + ROW_FFN_STRIDE * l
        wq = sqmat(4 * l + 0)
        wk = sqmat(4 * l + 1)
        wv = sqmat(4 * l + 2)
        wo = sqmat(4 * l + 3)
        w1 = w_ref[fb:fb + H, 0:I]                       # (H, I)
        w2 = w_ref[fb + H:fb + H + I, 0:H]               # (I, H)

        q = (jnp.dot(x, wq, preferred_element_type=f32) + row(vb + 0)) * scale
        k = jnp.dot(x, wk, preferred_element_type=f32) + row(vb + 1)
        v = jnp.dot(x, wv, preferred_element_type=f32) + row(vb + 2)

        ctx = jnp.zeros((R, H), f32)
        for hm in head_masks:                            # static unroll over heads
            scores = jax.lax.dot_general(
                q * hm, k, dimension_numbers=(((1,), (1,)), ((), ())),
                preferred_element_type=f32) + attn_bias  # (R, R)
            p = _softmax_lastdim(scores)
            ctx = ctx + jnp.dot(p, v, preferred_element_type=f32) * hm

        attn_out = jnp.dot(ctx, wo, preferred_element_type=f32) + row(vb + 3)
        x1 = _layernorm(x + attn_out, row(vb + 6), row(vb + 7))

        hmid = _gelu(jnp.dot(x1, w1, preferred_element_type=f32) + row(vb + 4, width=I))
        ffn = jnp.dot(hmid, w2, preferred_element_type=f32) + row(vb + 5)
        x = _layernorm(x1 + ffn, row(vb + 8), row(vb + 9))

        if SUPERVISION_LAYER == l + 1:                   # capture only the CLS rows we need
            sup_cls = jnp.dot(sel, x, preferred_element_type=f32)

    # ---- pooler + (classifier | domain) heads, fused into one tiny matmul ----
    cls_tok = jnp.dot(sel, x, preferred_element_type=f32)                 # (B, H)
    pooled = jnp.tanh(jnp.dot(cls_tok, sqmat(4 * N_LAYERS),
                              preferred_element_type=f32) + row(ROW_HEADB))
    # GradientReversal.apply is the identity in the forward pass.
    # TODO(synk): attach a custom_vjp that negates/scales gradients for adversarial training.
    stacked = jnp.concatenate([pooled, sup_cls], axis=0)                  # (2B, H)
    clsdom_w = sqmat(4 * N_LAYERS + 1)[:, 0:N_CLASSES + N_DOMAINS]        # (H, 5)
    head_out = (jnp.dot(stacked, clsdom_w, preferred_element_type=f32)
                + row(ROW_HEADB + 1, width=N_CLASSES + N_DOMAINS))        # (2B, 5)
    cls_logits = head_out[0:B, 0:N_CLASSES]
    adv_logits = head_out[B:2 * B, N_CLASSES:N_CLASSES + N_DOMAINS]

    cls_ce = _ce_mean(cls_logits, lab_t)                                  # (1, 1)
    dom_ce = _ce_mean(adv_logits, dom_t)                                  # (1, 1)

    # ---- single lane-dense (8, 128) output slab, one unmasked full-tile store ----
    slab = jnp.concatenate(
        [jnp.concatenate([cls_logits, jnp.zeros((8 - B, N_CLASSES), f32)], axis=0),
         jnp.zeros((8, 128 - N_CLASSES), f32)], axis=1)                   # (8, 128)
    rr = jax.lax.broadcasted_iota(jnp.int32, (8, 128), 0)
    ll = jax.lax.broadcasted_iota(jnp.int32, (8, 128), 1)
    slab = slab + jnp.where((rr == 0) & (ll == OUT_CLS_CE_LANE), cls_ce, 0.0)
    slab = slab + jnp.where((rr == 0) & (ll == OUT_DOM_CE_LANE), dom_ce, 0.0)
    out_ref[...] = slab


# ---------------- parameters (deterministic init) + packing ----------------
def init_params(key):
    keys = iter(jax.random.split(key, 32))

    def nrm(shape):
        return 0.02 * jax.random.normal(next(keys), shape, jnp.float32)

    params = {
        "word_emb": nrm((VOCAB, HIDDEN)),
        "pos_emb": nrm((SEQ, HIDDEN)),
        "type_emb": nrm((1, HIDDEN)),
        "emb_ln_g": jnp.ones((1, HIDDEN), jnp.float32),
        "emb_ln_b": jnp.zeros((1, HIDDEN), jnp.float32),
        "layers": [],
        "pool_w": nrm((HIDDEN, HIDDEN)),
        "pool_b": jnp.zeros((1, HIDDEN), jnp.float32),
        "cls_w": nrm((HIDDEN, N_CLASSES)),
        "cls_b": jnp.zeros((1, N_CLASSES), jnp.float32),
        "dom_w": nrm((HIDDEN, N_DOMAINS)),         # self.domain_classifier
        "dom_b": jnp.zeros((1, N_DOMAINS), jnp.float32),
    }
    for _ in range(N_LAYERS):
        params["layers"].append({
            "wq": nrm((HIDDEN, HIDDEN)), "bq": jnp.zeros((1, HIDDEN), jnp.float32),
            "wk": nrm((HIDDEN, HIDDEN)), "bk": jnp.zeros((1, HIDDEN), jnp.float32),
            "wv": nrm((HIDDEN, HIDDEN)), "bv": jnp.zeros((1, HIDDEN), jnp.float32),
            "wo": nrm((HIDDEN, HIDDEN)), "bo": jnp.zeros((1, HIDDEN), jnp.float32),
            "ln1_g": jnp.ones((1, HIDDEN), jnp.float32),
            "ln1_b": jnp.zeros((1, HIDDEN), jnp.float32),
            "w1": nrm((HIDDEN, INTERMEDIATE)),
            "b1": jnp.zeros((1, INTERMEDIATE), jnp.float32),
            "w2": nrm((INTERMEDIATE, HIDDEN)),
            "b2": jnp.zeros((1, HIDDEN), jnp.float32),
            "ln2_g": jnp.ones((1, HIDDEN), jnp.float32),
            "ln2_b": jnp.zeros((1, HIDDEN), jnp.float32),
        })
    return params


def pack_params(params):
    """Pack every weight / bias / LN row and the embedding tables into ONE
    (SLAB_ROWS, 64) f32 slab -> a single weight DMA at kernel launch."""
    slab = jnp.zeros((SLAB_ROWS, SLAB_W), jnp.float32)

    def put(s, r, v):
        return s.at[r:r + v.shape[0], 0:v.shape[1]].set(v)

    slab = put(slab, ROW_EMB_LN, params["emb_ln_g"])
    slab = put(slab, ROW_EMB_LN + 1, params["emb_ln_b"])
    pos_type = params["pos_emb"] + params["type_emb"]                 # (S, H)
    slab = put(slab, ROW_POS, jnp.tile(pos_type, (BATCH, 1)))         # pre-tiled to (R, H)
    for l, lp in enumerate(params["layers"]):
        vb = ROW_LVEC + ROW_LVEC_STRIDE * l
        for i, name in enumerate(["bq", "bk", "bv", "bo", "b1", "b2",
                                  "ln1_g", "ln1_b", "ln2_g", "ln2_b"]):
            slab = put(slab, vb + i, lp[name])
        fb = ROW_FFN + ROW_FFN_STRIDE * l
        slab = put(slab, fb, lp["w1"])
        slab = put(slab, fb + HIDDEN, lp["w2"])
        for i, name in enumerate(["wq", "wk", "wv", "wo"]):
            slab = put(slab, ROW_SQ + ROW_SQ_STRIDE * (4 * l + i), lp[name])
    slab = put(slab, ROW_HEADB, params["pool_b"])
    slab = put(slab, ROW_HEADB + 1,
               jnp.concatenate([params["cls_b"], params["dom_b"]], axis=1))
    slab = put(slab, ROW_WORDEMB, params["word_emb"])
    slab = put(slab, ROW_SQ + ROW_SQ_STRIDE * (4 * N_LAYERS), params["pool_w"])
    slab = put(slab, ROW_SQ + ROW_SQ_STRIDE * (4 * N_LAYERS + 1),
               jnp.concatenate([params["cls_w"], params["dom_w"]], axis=1))
    return {"slab": slab}


def pack_inputs(input_ids, attention_mask, domains, labels):
    """Pack ids / mask / domains / labels into one (R, R+3) int32 operand."""
    mask = jnp.broadcast_to(attention_mask.reshape(1, R).astype(jnp.int32), (R, R))
    ids = input_ids.reshape(R, 1).astype(jnp.int32)
    dom = jnp.zeros((R, 1), jnp.int32)
    lab = jnp.zeros((R, 1), jnp.int32)
    if domains is not None:
        dom = dom.at[0:BATCH, 0].set(domains.astype(jnp.int32))
    if labels is not None:
        lab = lab.at[0:BATCH, 0].set(labels.astype(jnp.int32))
    return jnp.concatenate([mask, ids, dom, lab], axis=1)


# ---------------- DomainAdversarialBert.forward ----------------
def domain_adversarial_bert_forward(packed, input_ids, attention_mask,
                                    domains=None, labels=None):
    ints = pack_inputs(input_ids, attention_mask, domains, labels)
    out = pl.pallas_call(
        fused_forward_kernel,
        out_shape=jax.ShapeDtypeStruct((8, 128), jnp.float32),
        compiler_params=pltpu.CompilerParams(vmem_limit_bytes=4 * 1024 * 1024),
    )(ints, packed["slab"])

    cls_logits = out[0:BATCH, 0:N_CLASSES]
    cls_ce = out[0, OUT_CLS_CE_LANE]
    dom_ce = out[0, OUT_DOM_CE_LANE]

    # divisor exactly as written in the reference forward (min, not max)
    n_hidden_states = N_LAYERS + 1
    divisor = min(1, 2 * (n_hidden_states - SUPERVISION_LAYER))

    outputs = (cls_logits,)
    if domains is not None:
        loss = 0.001 / divisor * dom_ce
        if labels is not None:
            loss = loss + cls_ce
        outputs = (loss,) + outputs
    elif labels is not None:
        outputs = (cls_ce,) + outputs
    return outputs


if __name__ == "__main__":
    key = jax.random.PRNGKey(0)
    pkey, ikey, dkey, lkey = jax.random.split(key, 4)
    params = init_params(pkey)
    packed = pack_params(params)

    input_ids = jax.random.randint(ikey, (BATCH, SEQ), 0, VOCAB, dtype=jnp.int32)
    attention_mask = jnp.ones((BATCH, SEQ), dtype=jnp.int32)
    domains = jax.random.randint(dkey, (BATCH,), 0, N_DOMAINS, dtype=jnp.int32)
    labels = jax.random.randint(lkey, (BATCH,), 0, N_CLASSES, dtype=jnp.int32)

    loss, logits = domain_adversarial_bert_forward(
        packed, input_ids, attention_mask, domains=domains, labels=labels)
    jax.block_until_ready((loss, logits))
    assert logits.shape == (BATCH, N_CLASSES)
    assert loss.shape == ()
    print("KERNEL_OK")
</pallas_src>

<mosaic_0001>
module attributes {stable_mosaic.version = 11 : i64} {
  func.func @fused_forward_kernel(%arg0: memref<16x19xi32, #tpu.memory_space<vmem>>, %arg1: memref<680x64xf32, #tpu.memory_space<vmem>>, %arg2: memref<8x128xf32, #tpu.memory_space<vmem>>) attributes {dimension_semantics = [], scalar_prefetch = 0 : i64, scratch_operands = 0 : i64, tpu.core_type = #tpu.core_type<tc>} {
    %c0 = arith.constant 0 : index
    %c0_0 = arith.constant 0 : index
    %0 = vector.load %arg0[%c0, %c0_0] : memref<16x19xi32, #tpu.memory_space<vmem>>, vector<16x16xi32>
    %1 = arith.sitofp %0 : vector<16x16xi32> to vector<16x16xf32>
    %c0_1 = arith.constant 0 : index
    %c16 = arith.constant 16 : index
    %2 = vector.load %arg0[%c0_1, %c16] : memref<16x19xi32, #tpu.memory_space<vmem>>, vector<16x1xi32>
    %c0_2 = arith.constant 0 : index
    %c17 = arith.constant 17 : index
    %3 = vector.load %arg0[%c0_2, %c17] : memref<16x19xi32, #tpu.memory_space<vmem>>, vector<2x1xi32>
    %c0_3 = arith.constant 0 : index
    %c18 = arith.constant 18 : index
    %4 = vector.load %arg0[%c0_3, %c18] : memref<16x19xi32, #tpu.memory_space<vmem>>, vector<2x1xi32>
    %c64 = arith.constant 64 : index
    %c0_4 = arith.constant 0 : index
    %5 = vector.load %arg1[%c64, %c0_4] : memref<680x64xf32, #tpu.memory_space<vmem>>, vector<104x32xf32>
    %6 = tpu.iota {dimensions = array<i32: 1>} : vector<16x104xi32>
    %7 = vector.broadcast %2 : vector<16x1xi32> to vector<16x104xi32>
    %8 = arith.cmpi eq, %6, %7 : vector<16x104xi32>
    %9 = arith.extui %8 : vector<16x104xi1> to vector<16x104xi32>
    %10 = arith.sitofp %9 : vector<16x104xi32> to vector<16x104xf32>
    %cst = arith.constant dense<0.000000e+00> : vector<16x32xf32>
    %11 = tpu.matmul %10, %5, %cst {dimension_numbers = #tpu.dot_dimension_numbers<[1], [0], [0], [1], [0, 0, 1, 1], [], []>} : vector<16x104xf32>, vector<104x32xf32>, vector<16x32xf32> -> vector<16x32xf32>
    %c8 = arith.constant 8 : index
    %c0_5 = arith.constant 0 : index
    %12 = vector.load %arg1[%c8, %c0_5] : memref<680x64xf32, #tpu.memory_space<vmem>>, vector<16x32xf32>
    %13 = arith.addf %11, %12 : vector<16x32xf32>
    %c0_6 = arith.constant 0 : index
    %c0_7 = arith.constant 0 : index
    %14 = vector.load %arg1[%c0_6, %c0_7] : memref<680x64xf32, #tpu.memory_space<vmem>>, vector<1x32xf32>
    %c1 = arith.constant 1 : index
    %c0_8 = arith.constant 0 : index
    %15 = vector.load %arg1[%c1, %c0_8] : memref<680x64xf32, #tpu.memory_space<vmem>>, vector<1x32xf32>
    %cst_9 = arith.constant dense<0.000000e+00> : vector<16xf32>
    %16 = vector.multi_reduction <add>, %13, %cst_9 [1] : vector<16x32xf32> to vector<16xf32>
    %17 = vector.shape_cast %16 : vector<16xf32> to vector<16x1xf32>
    %cst_10 = arith.constant 3.200000e+01 : f32
    %18 = vector.broadcast %cst_10 : f32 to vector<16x1xf32>
    %19 = arith.divf %17, %18 : vector<16x1xf32>
    %20 = vector.broadcast %19 : vector<16x1xf32> to vector<16x32xf32>
    %21 = arith.subf %13, %20 : vector<16x32xf32>
    %22 = arith.mulf %21, %21 : vector<16x32xf32>
    %cst_11 = arith.constant dense<0.000000e+00> : vector<16xf32>
    %23 = vector.multi_reduction <add>, %22, %cst_11 [1] : vector<16x32xf32> to vector<16xf32>
    %24 = vector.shape_cast %23 : vector<16xf32> to vector<16x1xf32>
    %cst_12 = arith.constant 3.200000e+01 : f32
    %25 = vector.broadcast %cst_12 : f32 to vector<16x1xf32>
    %26 = arith.divf %24, %25 : vector<16x1xf32>
    %27 = vector.broadcast %19 : vector<16x1xf32> to vector<16x32xf32>
    %28 = arith.subf %13, %27 : vector<16x32xf32>
    %cst_13 = arith.constant 9.99999996E-13 : f32
    %29 = vector.broadcast %cst_13 : f32 to vector<16x1xf32>
    %30 = arith.addf %26, %29 : vector<16x1xf32>
    %31 = math.rsqrt %30 : vector<16x1xf32>
    %32 = vector.broadcast %31 : vector<16x1xf32> to vector<16x32xf32>
    %33 = arith.mulf %28, %32 : vector<16x32xf32>
    %34 = vector.broadcast %14 : vector<1x32xf32> to vector<16x32xf32>
    %35 = arith.mulf %33, %34 : vector<16x32xf32>
    %36 = vector.broadcast %15 : vector<1x32xf32> to vector<16x32xf32>
    %37 = arith.addf %35, %36 : vector<16x32xf32>
    %38 = tpu.iota {dimensions = array<i32: 0>} : vector<16x16xi32>
    %39 = tpu.iota {dimensions = array<i32: 1>} : vector<16x16xi32>
    %false = arith.constant false
    %40 = vector.broadcast %false : i1 to vector<16x16xi1>
    %c0_i32 = arith.constant 0 : i32
    %41 = vector.broadcast %c0_i32 : i32 to vector<16x16xi32>
    %42 = arith.cmpi sge, %38, %41 : vector<16x16xi32>
    %c8_i32 = arith.constant 8 : i32
    %43 = vector.broadcast %c8_i32 : i32 to vector<16x16xi32>
    %44 = arith.cmpi slt, %38, %43 : vector<16x16xi32>
    %45 = arith.andi %42, %44 : vector<16x16xi1>
    %c0_i32_14 = arith.constant 0 : i32
    %46 = vector.broadcast %c0_i32_14 : i32 to vector<16x16xi32>
    %47 = arith.cmpi sge, %39, %46 : vector<16x16xi32>
    %c8_i32_15 = arith.constant 8 : i32
    %48 = vector.broadcast %c8_i32_15 : i32 to vector<16x16xi32>
    %49 = arith.cmpi slt, %39, %48 : vector<16x16xi32>
    %50 = arith.andi %47, %49 : vector<16x16xi1>
    %51 = arith.andi %45, %50 : vector<16x16xi1>
    %52 = arith.ori %40, %51 : vector<16x16xi1>
    %c8_i32_16 = arith.constant 8 : i32
    %53 = vector.broadcast %c8_i32_16 : i32 to vector<16x16xi32>
    %54 = arith.cmpi sge, %38, %53 : vector<16x16xi32>
    %c16_i32 = arith.constant 16 : i32
    %55 = vector.broadcast %c16_i32 : i32 to vector<16x16xi32>
    %56 = arith.cmpi slt, %38, %55 : vector<16x16xi32>
    %57 = arith.andi %54, %56 : vector<16x16xi1>
    %c8_i32_17 = arith.constant 8 : i32
    %58 = vector.broadcast %c8_i32_17 : i32 to vector<16x16xi32>
    %59 = arith.cmpi sge, %39, %58 : vector<16x16xi32>
    %c16_i32_18 = arith.constant 16 : i32
    %60 = vector.broadcast %c16_i32_18 : i32 to vector<16x16xi32>
    %61 = arith.cmpi slt, %39, %60 : vector<16x16xi32>
    %62 = arith.andi %59, %61 : vector<16x16xi1>
    %63 = arith.andi %57, %62 : vector<16x16xi1>
    %64 = arith.ori %52, %63 : vector<16x16xi1>
    %cst_19 = arith.constant 1.000000e+00 : f32
    %65 = vector.broadcast %cst_19 : f32 to vector<16x16xf32>
    %66 = arith.subf %65, %1 : vector<16x16xf32>
    %cst_20 = arith.constant -1.000000e+04 : f32
    %67 = vector.broadcast %cst_20 : f32 to vector<16x16xf32>
    %68 = arith.mulf %66, %67 : vector<16x16xf32>
    %cst_21 = arith.constant 0.000000e+00 : f32
    %cst_22 = arith.constant -1.000000e+09 : f32
    %69 = vector.broadcast %cst_21 : f32 to vector<16x16xf32>
    %70 = vector.broadcast %cst_22 : f32 to vector<16x16xf32>
    %71 = arith.select %64, %69, %70 : vector<16x16xi1>, vector<16x16xf32>
    %72 = arith.addf %68, %71 : vector<16x16xf32>
    %73 = tpu.iota {dimensions = array<i32: 1>} : vector<1x32xi32>
    %c0_i32_23 = arith.constant 0 : i32
    %74 = vector.broadcast %c0_i32_23 : i32 to vector<1x32xi32>
    %75 = arith.cmpi sge, %73, %74 : vector<1x32xi32>
    %c16_i32_24 = arith.constant 16 : i32
    %76 = vector.broadcast %c16_i32_24 : i32 to vector<1x32xi32>
    %77 = arith.cmpi slt, %73, %76 : vector<1x32xi32>
    %78 = arith.andi %75, %77 : vector<1x32xi1>
    %79 = arith.extui %78 : vector<1x32xi1> to vector<1x32xi32>
    %80 = arith.sitofp %79 : vector<1x32xi32> to vector<1x32xf32>
    %c16_i32_25 = arith.constant 16 : i32
    %81 = vector.broadcast %c16_i32_25 : i32 to vector<1x32xi32>
    %82 = arith.cmpi sge, %73, %81 : vector<1x32xi32>
    %c32_i32 = arith.constant 32 : i32
    %83 = vector.broadcast %c32_i32 : i32 to vector<1x32xi32>
    %84 = arith.cmpi slt, %73, %83 : vector<1x32xi32>
    %85 = arith.andi %82, %84 : vector<1x32xi1>
    %86 = arith.extui %85 : vector<1x32xi1> to vector<1x32xi32>
    %87 = arith.sitofp %86 : vector<1x32xi32> to vector<1x32xf32>
    %88 = tpu.iota {dimensions = array<i32: 1>} : vector<2x16xi32>
    %89 = tpu.iota {dimensions = array<i32: 0>} : vector<2x16xi32>
    %c8_i32_26 = arith.constant 8 : i32
    %90 = vector.broadcast %c8_i32_26 : i32 to vector<2x16xi32>
    %91 = arith.muli %89, %90 : vector<2x16xi32>
    %92 = arith.cmpi eq, %88, %91 : vector<2x16xi32>
    %93 = arith.extui %92 : vector<2x16xi1> to vector<2x16xi32>
    %94 = arith.sitofp %93 : vector<2x16xi32> to vector<2x16xf32>
    %c360 = arith.constant 360 : index
    %c0_27 = arith.constant 0 : index
    %95 = vector.load %arg1[%c360, %c0_27] : memref<680x64xf32, #tpu.memory_space<vmem>>, vector<32x32xf32>
    %c392 = arith.constant 392 : index
    %c0_28 = arith.constant 0 : index
    %96 = vector.load %arg1[%c392, %c0_28] : memref<680x64xf32, #tpu.memory_space<vmem>>, vector<32x32xf32>
    %c424 = arith.constant 424 : index
    %c0_29 = arith.constant 0 : index
    %97 = vector.load %arg1[%c424, %c0_29] : memref<680x64xf32, #tpu.memory_space<vmem>>, vector<32x32xf32>
    %c456 = arith.constant 456 : index
    %c0_30 = arith.constant 0 : index
    %98 = vector.load %arg1[%c456, %c0_30] : memref<680x64xf32, #tpu.memory_space<vmem>>, vector<32x32xf32>
    %c168 = arith.constant 168 : index
    %c0_31 = arith.constant 0 : index
    %99 = vector.load %arg1[%c168, %c0_31] : memref<680x64xf32, #tpu.memory_space<vmem>>, vector<32x64xf32>
    %c200 = arith.constant 200 : index
    %c0_32 = arith.constant 0 : index
    %100 = vector.load %arg1[%c200, %c0_32] : memref<680x64xf32, #tpu.memory_space<vmem>>, vector<64x32xf32>
    %cst_33 = arith.constant dense<0.000000e+00> : vector<16x32xf32>
    %101 = tpu.matmul %37, %95, %cst_33 {dimension_numbers = #tpu.dot_dimension_numbers<[1], [0], [0], [1], [0, 0, 1, 1], [], []>} : vector<16x32xf32>, vector<32x32xf32>, vector<16x32xf32> -> vector<16x32xf32>
    %c24 = arith.constant 24 : index
    %c0_34 = arith.constant 0 : index
    %102 = vector.load %arg1[%c24, %c0_34] : memref<680x64xf32, #tpu.memory_space<vmem>>, vector<1x32xf32>
    %103 = vector.broadcast %102 : vector<1x32xf32> to vector<16x32xf32>
    %104 = arith.addf %101, %103 : vector<16x32xf32>
    %cst_35 = arith.constant 2.500000e-01 : f32
    %105 = vector.broadcast %cst_35 : f32 to vector<16x32xf32>
    %106 = arith.mulf %104, %105 : vector<16x32xf32>
    %cst_36 = arith.constant dense<0.000000e+00> : vector<16x32xf32>
    %107 = tpu.matmul %37, %96, %cst_36 {dimension_numbers = #tpu.dot_dimension_numbers<[1], [0], [0], [1], [0, 0, 1, 1], [], []>} : vector<16x32xf32>, vector<32x32xf32>, vector<16x32xf32> -> vector<16x32xf32>
    %c25 = arith.constant 25 : index
    %c0_37 = arith.constant 0 : index
    %108 = vector.load %arg1[%c25, %c0_37] : memref<680x64xf32, #tpu.memory_space<vmem>>, vector<1x32xf32>
    %109 = vector.broadcast %108 : vector<1x32xf32> to vector<16x32xf32>
    %110 = arith.addf %107, %109 : vector<16x32xf32>
    %cst_38 = arith.constant dense<0.000000e+00> : vector<16x32xf32>
    %111 = tpu.matmul %37, %97, %cst_38 {dimension_numbers = #tpu.dot_dimension_numbers<[1], [0], [0], [1], [0, 0, 1, 1], [], []>} : vector<16x32xf32>, vector<32x32xf32>, vector<16x32xf32> -> vector<16x32xf32>
    %c26 = arith.constant 26 : index
    %c0_39 = arith.constant 0 : index
    %112 = vector.load %arg1[%c26, %c0_39] : memref<680x64xf32, #tpu.memory_space<vmem>>, vector<1x32xf32>
    %113 = vector.broadcast %112 : vector<1x32xf32> to vector<16x32xf32>
    %114 = arith.addf %111, %113 : vector<16x32xf32>
    %cst_40 = arith.constant 0.000000e+00 : f32
    %115 = vector.broadcast %cst_40 : f32 to vector<16x32xf32>
    %116 = vector.broadcast %80 : vector<1x32xf32> to vector<16x32xf32>
    %117 = arith.mulf %106, %116 : vector<16x32xf32>
    %cst_41 = arith.constant dense<0.000000e+00> : vector<16x16xf32>
    %118 = tpu.matmul %117, %110, %cst_41 {dimension_numbers = #tpu.dot_dimension_numbers<[1], [1], [0], [0], [0, 0, 1, 0], [], []>} : vector<16x32xf32>, vector<16x32xf32>, vector<16x16xf32> -> vector<16x16xf32>
    %119 = arith.addf %118, %72 : vector<16x16xf32>
    %cst_42 = arith.constant dense<0xFF800000> : vector<16xf32>
    %120 = vector.multi_reduction <maximumf>, %119, %cst_42 [1] : vector<16x16xf32> to vector<16xf32>
    %121 = vector.shape_cast %120 : vector<16xf32> to vector<16x1xf32>
    %122 = vector.broadcast %121 : vector<16x1xf32> to vector<16x16xf32>
    %123 = arith.subf %119, %122 : vector<16x16xf32>
    %124 = math.exp %123 : vector<16x16xf32>
    %cst_43 = arith.constant dense<0.000000e+00> : vector<16xf32>
    %125 = vector.multi_reduction <add>, %124, %cst_43 [1] : vector<16x16xf32> to vector<16xf32>
    %126 = vector.shape_cast %125 : vector<16xf32> to vector<16x1xf32>
    %127 = vector.broadcast %126 : vector<16x1xf32> to vector<16x16xf32>
    %128 = arith.divf %124, %127 : vector<16x16xf32>
    %cst_44 = arith.constant dense<0.000000e+00> : vector<16x32xf32>
    %129 = tpu.matmul %128, %114, %cst_44 {dimension_numbers = #tpu.dot_dimension_numbers<[1], [0], [0], [1], [0, 0, 1, 1], [], []>} : vector<16x16xf32>, vector<16x32xf32>, vector<16x32xf32> -> vector<16x32xf32>
    %130 = vector.broadcast %80 : vector<1x32xf32> to vector<16x32xf32>
    %131 = arith.mulf %129, %130 : vector<16x32xf32>
    %132 = arith.addf %115, %131 : vector<16x32xf32>
    %133 = vector.broadcast %87 : vector<1x32xf32> to vector<16x32xf32>
    %134 = arith.mulf %106, %133 : vector<16x32xf32>
    %cst_45 = arith.constant dense<0.000000e+00> : vector<16x16xf32>
    %135 = tpu.matmul %134, %110, %cst_45 {dimension_numbers = #tpu.dot_dimension_numbers<[1], [1], [0], [0], [0, 0, 1, 0], [], []>} : vector<16x32xf32>, vector<16x32xf32>, vector<16x16xf32> -> vector<16x16xf32>
    %136 = arith.addf %135, %72 : vector<16x16xf32>
    %cst_46 = arith.constant dense<0xFF800000> : vector<16xf32>
    %137 = vector.multi_reduction <maximumf>, %136, %cst_46 [1] : vector<16x16xf32> to vector<16xf32>
    %138 = vector.shape_cast %137 : vector<16xf32> to vector<16x1xf32>
    %139 = vector.broadcast %138 : vector<16x1xf32> to vector<16x16xf32>
    %140 = arith.subf %136, %139 : vector<16x16xf32>
    %141 = math.exp %140 : vector<16x16xf32>
    %cst_47 = arith.constant dense<0.000000e+00> : vector<16xf32>
    %142 = vector.multi_reduction <add>, %141, %cst_47 [1] : vector<16x16xf32> to vector<16xf32>
    %143 = vector.shape_cast %142 : vector<16xf32> to vector<16x1xf32>
    %144 = vector.broadcast %143 : vector<16x1xf32> to vector<16x16xf32>
    %145 = arith.divf %141, %144 : vector<16x16xf32>
    %cst_48 = arith.constant dense<0.000000e+00> : vector<16x32xf32>
    %146 = tpu.matmul %145, %114, %cst_48 {dimension_numbers = #tpu.dot_dimension_numbers<[1], [0], [0], [1], [0, 0, 1, 1], [], []>} : vector<16x16xf32>, vector<16x32xf32>, vector<16x32xf32> -> vector<16x32xf32>
    %147 = vector.broadcast %87 : vector<1x32xf32> to vector<16x32xf32>
    %148 = arith.mulf %146, %147 : vector<16x32xf32>
    %149 = arith.addf %132, %148 : vector<16x32xf32>
    %cst_49 = arith.constant dense<0.000000e+00> : vector<16x32xf32>
    %150 = tpu.matmul %149, %98, %cst_49 {dimension_numbers = #tpu.dot_dimension_numbers<[1], [0], [0], [1], [0, 0, 1, 1], [], []>} : vector<16x32xf32>, vector<32x32xf32>, vector<16x32xf32> -> vector<16x32xf32>
    %c27 = arith.constant 27 : index
    %c0_50 = arith.constant 0 : index
    %151 = vector.load %arg1[%c27, %c0_50] : memref<680x64xf32, #tpu.memory_space<vmem>>, vector<1x32xf32>
    %152 = vector.broadcast %151 : vector<1x32xf32> to vector<16x32xf32>
    %153 = arith.addf %150, %152 : vector<16x32xf32>
    %154 = arith.addf %37, %153 : vector<16x32xf32>
    %c30 = arith.constant 30 : index
    %c0_51 = arith.constant 0 : index
    %155 = vector.load %arg1[%c30, %c0_51] : memref<680x64xf32, #tpu.memory_space<vmem>>, vector<1x32xf32>
    %c31 = arith.constant 31 : index
    %c0_52 = arith.constant 0 : index
    %156 = vector.load %arg1[%c31, %c0_52] : memref<680x64xf32, #tpu.memory_space<vmem>>, vector<1x32xf32>
    %cst_53 = arith.constant dense<0.000000e+00> : vector<16xf32>
    %157 = vector.multi_reduction <add>, %154, %cst_53 [1] : vector<16x32xf32> to vector<16xf32>
    %158 = vector.shape_cast %157 : vector<16xf32> to vector<16x1xf32>
    %cst_54 = arith.constant 3.200000e+01 : f32
    %159 = vector.broadcast %cst_54 : f32 to vector<16x1xf32>
    %160 = arith.divf %158, %159 : vector<16x1xf32>
    %161 = vector.broadcast %160 : vector<16x1xf32> to vector<16x32xf32>
    %162 = arith.subf %154, %161 : vector<16x32xf32>
    %163 = arith.mulf %162, %162 : vector<16x32xf32>
    %cst_55 = arith.constant dense<0.000000e+00> : vector<16xf32>
    %164 = vector.multi_reduction <add>, %163, %cst_55 [1] : vector<16x32xf32> to vector<16xf32>
    %165 = vector.shape_cast %164 : vector<16xf32> to vector<16x1xf32>
    %cst_56 = arith.constant 3.200000e+01 : f32
    %166 = vector.broadcast %cst_56 : f32 to vector<16x1xf32>
    %167 = arith.divf %165, %166 : vector<16x1xf32>
    %168 = vector.broadcast %160 : vector<16x1xf32> to vector<16x32xf32>
    %169 = arith.subf %154, %168 : vector<16x32xf32>
    %cst_57 = arith.constant 9.99999996E-13 : f32
    %170 = vector.broadcast %cst_57 : f32 to vector<16x1xf32>
    %171 = arith.addf %167, %170 : vector<16x1xf32>
    %172 = math.rsqrt %171 : vector<16x1xf32>
    %173 = vector.broadcast %172 : vector<16x1xf32> to vector<16x32xf32>
    %174 = arith.mulf %169, %173 : vector<16x32xf32>
    %175 = vector.broadcast %155 : vector<1x32xf32> to vector<16x32xf32>
    %176 = arith.mulf %174, %175 : vector<16x32xf32>
    %177 = vector.broadcast %156 : vector<1x32xf32> to vector<16x32xf32>
    %178 = arith.addf %176, %177 : vector<16x32xf32>
    %cst_58 = arith.constant dense<0.000000e+00> : vector<16x64xf32>
    %179 = tpu.matmul %178, %99, %cst_58 {dimension_numbers = #tpu.dot_dimension_numbers<[1], [0], [0], [1], [0, 0, 1, 1], [], []>} : vector<16x32xf32>, vector<32x64xf32>, vector<16x64xf32> -> vector<16x64xf32>
    %c28 = arith.constant 28 : index
    %c0_59 = arith.constant 0 : index
    %180 = vector.load %arg1[%c28, %c0_59] : memref<680x64xf32, #tpu.memory_space<vmem>>, vector<1x64xf32>
    %181 = vector.broadcast %180 : vector<1x64xf32> to vector<16x64xf32>
    %182 = arith.addf %179, %181 : vector<16x64xf32>
    %cst_60 = arith.constant 5.000000e-01 : f32
    %183 = vector.broadcast %cst_60 : f32 to vector<16x64xf32>
    %184 = arith.mulf %183, %182 : vector<16x64xf32>
    %cst_61 = arith.constant 4.471500e-02 : f32
    %185 = vector.broadcast %cst_61 : f32 to vector<16x64xf32>
    %186 = arith.mulf %185, %182 : vector<16x64xf32>
    %187 = arith.mulf %186, %182 : vector<16x64xf32>
    %188 = arith.mulf %187, %182 : vector<16x64xf32>
    %189 = arith.addf %182, %188 : vector<16x64xf32>
    %cst_62 = arith.constant 0.797884583 : f32
    %190 = vector.broadcast %cst_62 : f32 to vector<16x64xf32>
    %191 = arith.mulf %190, %189 : vector<16x64xf32>
    %192 = math.tanh %191 : vector<16x64xf32>
    %cst_63 = arith.constant 1.000000e+00 : f32
    %193 = vector.broadcast %cst_63 : f32 to vector<16x64xf32>
    %194 = arith.addf %193, %192 : vector<16x64xf32>
    %195 = arith.mulf %184, %194 : vector<16x64xf32>
    %cst_64 = arith.constant dense<0.000000e+00> : vector<16x32xf32>
    %196 = tpu.matmul %195, %100, %cst_64 {dimension_numbers = #tpu.dot_dimension_numbers<[1], [0], [0], [1], [0, 0, 1, 1], [], []>} : vector<16x64xf32>, vector<64x32xf32>, vector<16x32xf32> -> vector<16x32xf32>
    %c29 = arith.constant 29 : index
    %c0_65 = arith.constant 0 : index
    %197 = vector.load %arg1[%c29, %c0_65] : memref<680x64xf32, #tpu.memory_space<vmem>>, vector<1x32xf32>
    %198 = vector.broadcast %197 : vector<1x32xf32> to vector<16x32xf32>
    %199 = arith.addf %196, %198 : vector<16x32xf32>
    %200 = arith.addf %178, %199 : vector<16x32xf32>
    %c32 = arith.constant 32 : index
    %c0_66 = arith.constant 0 : index
    %201 = vector.load %arg1[%c32, %c0_66] : memref<680x64xf32, #tpu.memory_space<vmem>>, vector<1x32xf32>
    %c33 = arith.constant 33 : index
    %c0_67 = arith.constant 0 : index
    %202 = vector.load %arg1[%c33, %c0_67] : memref<680x64xf32, #tpu.memory_space<vmem>>, vector<1x32xf32>
    %cst_68 = arith.constant dense<0.000000e+00> : vector<16xf32>
    %203 = vector.multi_reduction <add>, %200, %cst_68 [1] : vector<16x32xf32> to vector<16xf32>
    %204 = vector.shape_cast %203 : vector<16xf32> to vector<16x1xf32>
    %cst_69 = arith.constant 3.200000e+01 : f32
    %205 = vector.broadcast %cst_69 : f32 to vector<16x1xf32>
    %206 = arith.divf %204, %205 : vector<16x1xf32>
    %207 = vector.broadcast %206 : vector<16x1xf32> to vector<16x32xf32>
    %208 = arith.subf %200, %207 : vector<16x32xf32>
    %209 = arith.mulf %208, %208 : vector<16x32xf32>
    %cst_70 = arith.constant dense<0.000000e+00> : vector<16xf32>
    %210 = vector.multi_reduction <add>, %209, %cst_70 [1] : vector<16x32xf32> to vector<16xf32>
    %211 = vector.shape_cast %210 : vector<16xf32> to vector<16x1xf32>
    %cst_71 = arith.constant 3.200000e+01 : f32
    %212 = vector.broadcast %cst_71 : f32 to vector<16x1xf32>
    %213 = arith.divf %211, %212 : vector<16x1xf32>
    %214 = vector.broadcast %206 : vector<16x1xf32> to vector<16x32xf32>
    %215 = arith.subf %200, %214 : vector<16x32xf32>
    %cst_72 = arith.constant 9.99999996E-13 : f32
    %216 = vector.broadcast %cst_72 : f32 to vector<16x1xf32>
    %217 = arith.addf %213, %216 : vector<16x1xf32>
    %218 = math.rsqrt %217 : vector<16x1xf32>
    %219 = vector.broadcast %218 : vector<16x1xf32> to vector<16x32xf32>
    %220 = arith.mulf %215, %219 : vector<16x32xf32>
    %221 = vector.broadcast %201 : vector<1x32xf32> to vector<16x32xf32>
    %222 = arith.mulf %220, %221 : vector<16x32xf32>
    %223 = vector.broadcast %202 : vector<1x32xf32> to vector<16x32xf32>
    %224 = arith.addf %222, %223 : vector<16x32xf32>
    %c488 = arith.constant 488 : index
    %c0_73 = arith.constant 0 : index
    %225 = vector.load %arg1[%c488, %c0_73] : memref<680x64xf32, #tpu.memory_space<vmem>>, vector<32x32xf32>
    %c520 = arith.constant 520 : index
    %c0_74 = arith.constant 0 : index
    %226 = vector.load %arg1[%c520, %c0_74] : memref<680x64xf32, #tpu.memory_space<vmem>>, vector<32x32xf32>
    %c552 = arith.constant 552 : index
    %c0_75 = arith.constant 0 : index
    %227 = vector.load %arg1[%c552, %c0_75] : memref<680x64xf32, #tpu.memory_space<vmem>>, vector<32x32xf32>
    %c584 = arith.constant 584 : index
    %c0_76 = arith.constant 0 : index
    %228 = vector.load %arg1[%c584, %c0_76] : memref<680x64xf32, #tpu.memory_space<vmem>>, vector<32x32xf32>
    %c264 = arith.constant 264 : index
    %c0_77 = arith.constant 0 : index
    %229 = vector.load %arg1[%c264, %c0_77] : memref<680x64xf32, #tpu.memory_space<vmem>>, vector<32x64xf32>
    %c296 = arith.constant 296 : index
    %c0_78 = arith.constant 0 : index
    %230 = vector.load %arg1[%c296, %c0_78] : memref<680x64xf32, #tpu.memory_space<vmem>>, vector<64x32xf32>
    %cst_79 = arith.constant dense<0.000000e+00> : vector<16x32xf32>
    %231 = tpu.matmul %224, %225, %cst_79 {dimension_numbers = #tpu.dot_dimension_numbers<[1], [0], [0], [1], [0, 0, 1, 1], [], []>} : vector<16x32xf32>, vector<32x32xf32>, vector<16x32xf32> -> vector<16x32xf32>
    %c40 = arith.constant 40 : index
    %c0_80 = arith.constant 0 : index
    %232 = vector.load %arg1[%c40, %c0_80] : memref<680x64xf32, #tpu.memory_space<vmem>>, vector<1x32xf32>
    %233 = vector.broadcast %232 : vector<1x32xf32> to vector<16x32xf32>
    %234 = arith.addf %231, %233 : vector<16x32xf32>
    %cst_81 = arith.constant 2.500000e-01 : f32
    %235 = vector.broadcast %cst_81 : f32 to vector<16x32xf32>
    %236 = arith.mulf %234, %235 : vector<16x32xf32>
    %cst_82 = arith.constant dense<0.000000e+00> : vector<16x32xf32>
    %237 = tpu.matmul %224, %226, %cst_82 {dimension_numbers = #tpu.dot_dimension_numbers<[1], [0], [0], [1], [0, 0, 1, 1], [], []>} : vector<16x32xf32>, vector<32x32xf32>, vector<16x32xf32> -> vector<16x32xf32>
    %c41 = arith.constant 41 : index
    %c0_83 = arith.constant 0 : index
    %238 = vector.load %arg1[%c41, %c0_83] : memref<680x64xf32, #tpu.memory_space<vmem>>, vector<1x32xf32>
    %239 = vector.broadcast %238 : vector<1x32xf32> to vector<16x32xf32>
    %240 = arith.addf %237, %239 : vector<16x32xf32>
    %cst_84 = arith.constant dense<0.000000e+00> : vector<16x32xf32>
    %241 = tpu.matmul %224, %227, %cst_84 {dimension_numbers = #tpu.dot_dimension_numbers<[1], [0], [0], [1], [0, 0, 1, 1], [], []>} : vector<16x32xf32>, vector<32x32xf32>, vector<16x32xf32> -> vector<16x32xf32>
    %c42 = arith.constant 42 : index
    %c0_85 = arith.constant 0 : index
    %242 = vector.load %arg1[%c42, %c0_85] : memref<680x64xf32, #tpu.memory_space<vmem>>, vector<1x32xf32>
    %243 = vector.broadcast %242 : vector<1x32xf32> to vector<16x32xf32>
    %244 = arith.addf %241, %243 : vector<16x32xf32>
    %cst_86 = arith.constant 0.000000e+00 : f32
    %245 = vector.broadcast %cst_86 : f32 to vector<16x32xf32>
    %246 = vector.broadcast %80 : vector<1x32xf32> to vector<16x32xf32>
    %247 = arith.mulf %236, %246 : vector<16x32xf32>
    %cst_87 = arith.constant dense<0.000000e+00> : vector<16x16xf32>
    %248 = tpu.matmul %247, %240, %cst_87 {dimension_numbers = #tpu.dot_dimension_numbers<[1], [1], [0], [0], [0, 0, 1, 0], [], []>} : vector<16x32xf32>, vector<16x32xf32>, vector<16x16xf32> -> vector<16x16xf32>
    %249 = arith.addf %248, %72 : vector<16x16xf32>
    %cst_88 = arith.constant dense<0xFF800000> : vector<16xf32>
    %250 = vector.multi_reduction <maximumf>, %249, %cst_88 [1] : vector<16x16xf32> to vector<16xf32>
    %251 = vector.shape_cast %250 : vector<16xf32> to vector<16x1xf32>
    %252 = vector.broadcast %251 : vector<16x1xf32> to vector<16x16xf32>
    %253 = arith.subf %249, %252 : vector<16x16xf32>
    %254 = math.exp %253 : vector<16x16xf32>
    %cst_89 = arith.constant dense<0.000000e+00> : vector<16xf32>
    %255 = vector.multi_reduction <add>, %254, %cst_89 [1] : vector<16x16xf32> to vector<16xf32>
    %256 = vector.shape_cast %255 : vector<16xf32> to vector<16x1xf32>
    %257 = vector.broadcast %256 : vector<16x1xf32> to vector<16x16xf32>
    %258 = arith.divf %254, %257 : vector<16x16xf32>
    %cst_90 = arith.constant dense<0.000000e+00> : vector<16x32xf32>
    %259 = tpu.matmul %258, %244, %cst_90 {dimension_numbers = #tpu.dot_dimension_numbers<[1], [0], [0], [1], [0, 0, 1, 1], [], []>} : vector<16x16xf32>, vector<16x32xf32>, vector<16x32xf32> -> vector<16x32xf32>
    %260 = vector.broadcast %80 : vector<1x32xf32> to vector<16x32xf32>
    %261 = arith.mulf %259, %260 : vector<16x32xf32>
    %262 = arith.addf %245, %261 : vector<16x32xf32>
    %263 = vector.broadcast %87 : vector<1x32xf32> to vector<16x32xf32>
    %264 = arith.mulf %236, %263 : vector<16x32xf32>
    %cst_91 = arith.constant dense<0.000000e+00> : vector<16x16xf32>
    %265 = tpu.matmul %264, %240, %cst_91 {dimension_numbers = #tpu.dot_dimension_numbers<[1], [1], [0], [0], [0, 0, 1, 0], [], []>} : vector<16x32xf32>, vector<16x32xf32>, vector<16x16xf32> -> vector<16x16xf32>
    %266 = arith.addf %265, %72 : vector<16x16xf32>
    %cst_92 = arith.constant dense<0xFF800000> : vector<16xf32>
    %267 = vector.multi_reduction <maximumf>, %266, %cst_92 [1] : vector<16x16xf32> to vector<16xf32>
    %268 = vector.shape_cast %267 : vector<16xf32> to vector<16x1xf32>
    %269 = vector.broadcast %268 : vector<16x1xf32> to vector<16x16xf32>
    %270 = arith.subf %266, %269 : vector<16x16xf32>
    %271 = math.exp %270 : vector<16x16xf32>
    %cst_93 = arith.constant dense<0.000000e+00> : vector<16xf32>
    %272 = vector.multi_reduction <add>, %271, %cst_93 [1] : vector<16x16xf32> to vector<16xf32>
    %273 = vector.shape_cast %272 : vector<16xf32> to vector<16x1xf32>
    %274 = vector.broadcast %273 : vector<16x1xf32> to vector<16x16xf32>
    %275 = arith.divf %271, %274 : vector<16x16xf32>
    %cst_94 = arith.constant dense<0.000000e+00> : vector<16x32xf32>
    %276 = tpu.matmul %275, %244, %cst_94 {dimension_numbers = #tpu.dot_dimension_numbers<[1], [0], [0], [1], [0, 0, 1, 1], [], []>} : vector<16x16xf32>, vector<16x32xf32>, vector<16x32xf32> -> vector<16x32xf32>
    %277 = vector.broadcast %87 : vector<1x32xf32> to vector<16x32xf32>
    %278 = arith.mulf %276, %277 : vector<16x32xf32>
    %279 = arith.addf %262, %278 : vector<16x32xf32>
    %cst_95 = arith.constant dense<0.000000e+00> : vector<16x32xf32>
    %280 = tpu.matmul %279, %228, %cst_95 {dimension_numbers = #tpu.dot_dimension_numbers<[1], [0], [0], [1], [0, 0, 1, 1], [], []>} : vector<16x32xf32>, vector<32x32xf32>, vector<16x32xf32> -> vector<16x32xf32>
    %c43 = arith.constant 43 : index
    %c0_96 = arith.constant 0 : index
    %281 = vector.load %arg1[%c43, %c0_96] : memref<680x64xf32, #tpu.memory_space<vmem>>, vector<1x32xf32>
    %282 = vector.broadcast %281 : vector<1x32xf32> to vector<16x32xf32>
    %283 = arith.addf %280, %282 : vector<16x32xf32>
    %284 = arith.addf %224, %283 : vector<16x32xf32>
    %c46 = arith.constant 46 : index
    %c0_97 = arith.constant 0 : index
    %285 = vector.load %arg1[%c46, %c0_97] : memref<680x64xf32, #tpu.memory_space<vmem>>, vector<1x32xf32>
    %c47 = arith.constant 47 : index
    %c0_98 = arith.constant 0 : index
    %286 = vector.load %arg1[%c47, %c0_98] : memref<680x64xf32, #tpu.memory_space<vmem>>, vector<1x32xf32>
    %cst_99 = arith.constant dense<0.000000e+00> : vector<16xf32>
    %287 = vector.multi_reduction <add>, %284, %cst_99 [1] : vector<16x32xf32> to vector<16xf32>
    %288 = vector.shape_cast %287 : vector<16xf32> to vector<16x1xf32>
    %cst_100 = arith.constant 3.200000e+01 : f32
    %289 = vector.broadcast %cst_100 : f32 to vector<16x1xf32>
    %290 = arith.divf %288, %289 : vector<16x1xf32>
    %291 = vector.broadcast %290 : vector<16x1xf32> to vector<16x32xf32>
    %292 = arith.subf %284, %291 : vector<16x32xf32>
    %293 = arith.mulf %292, %292 : vector<16x32xf32>
    %cst_101 = arith.constant dense<0.000000e+00> : vector<16xf32>
    %294 = vector.multi_reduction <add>, %293, %cst_101 [1] : vector<16x32xf32> to vector<16xf32>
    %295 = vector.shape_cast %294 : vector<16xf32> to vector<16x1xf32>
    %cst_102 = arith.constant 3.200000e+01 : f32
    %296 = vector.broadcast %cst_102 : f32 to vector<16x1xf32>
    %297 = arith.divf %295, %296 : vector<16x1xf32>
    %298 = vector.broadcast %290 : vector<16x1xf32> to vector<16x32xf32>
    %299 = arith.subf %284, %298 : vector<16x32xf32>
    %cst_103 = arith.constant 9.99999996E-13 : f32
    %300 = vector.broadcast %cst_103 : f32 to vector<16x1xf32>
    %301 = arith.addf %297, %300 : vector<16x1xf32>
    %302 = math.rsqrt %301 : vector<16x1xf32>
    %303 = vector.broadcast %302 : vector<16x1xf32> to vector<16x32xf32>
    %304 = arith.mulf %299, %303 : vector<16x32xf32>
    %305 = vector.broadcast %285 : vector<1x32xf32> to vector<16x32xf32>
    %306 = arith.mulf %304, %305 : vector<16x32xf32>
    %307 = vector.broadcast %286 : vector<1x32xf32> to vector<16x32xf32>
    %308 = arith.addf %306, %307 : vector<16x32xf32>
    %cst_104 = arith.constant dense<0.000000e+00> : vector<16x64xf32>
    %309 = tpu.matmul %308, %229, %cst_104 {dimension_numbers = #tpu.dot_dimension_numbers<[1], [0], [0], [1], [0, 0, 1, 1], [], []>} : vector<16x32xf32>, vector<32x64xf32>, vector<16x64xf32> -> vector<16x64xf32>
    %c44 = arith.constant 44 : index
    %c0_105 = arith.constant 0 : index
    %310 = vector.load %arg1[%c44, %c0_105] : memref<680x64xf32, #tpu.memory_space<vmem>>, vector<1x64xf32>
    %311 = vector.broadcast %310 : vector<1x64xf32> to vector<16x64xf32>
    %312 = arith.addf %309, %311 : vector<16x64xf32>
    %cst_106 = arith.constant 5.000000e-01 : f32
    %313 = vector.broadcast %cst_106 : f32 to vector<16x64xf32>
    %314 = arith.mulf %313, %312 : vector<16x64xf32>
    %cst_107 = arith.constant 4.471500e-02 : f32
    %315 = vector.broadcast %cst_107 : f32 to vector<16x64xf32>
    %316 = arith.mulf %315, %312 : vector<16x64xf32>
    %317 = arith.mulf %316, %312 : vector<16x64xf32>
    %318 = arith.mulf %317, %312 : vector<16x64xf32>
    %319 = arith.addf %312, %318 : vector<16x64xf32>
    %cst_108 = arith.constant 0.797884583 : f32
    %320 = vector.broadcast %cst_108 : f32 to vector<16x64xf32>
    %321 = arith.mulf %320, %319 : vector<16x64xf32>
    %322 = math.tanh %321 : vector<16x64xf32>
    %cst_109 = arith.constant 1.000000e+00 : f32
    %323 = vector.broadcast %cst_109 : f32 to vector<16x64xf32>
    %324 = arith.addf %323, %322 : vector<16x64xf32>
    %325 = arith.mulf %314, %324 : vector<16x64xf32>
    %cst_110 = arith.constant dense<0.000000e+00> : vector<16x32xf32>
    %326 = tpu.matmul %325, %230, %cst_110 {dimension_numbers = #tpu.dot_dimension_numbers<[1], [0], [0], [1], [0, 0, 1, 1], [], []>} : vector<16x64xf32>, vector<64x32xf32>, vector<16x32xf32> -> vector<16x32xf32>
    %c45 = arith.constant 45 : index
    %c0_111 = arith.constant 0 : index
    %327 = vector.load %arg1[%c45, %c0_111] : memref<680x64xf32, #tpu.memory_space<vmem>>, vector<1x32xf32>
    %328 = vector.broadcast %327 : vector<1x32xf32> to vector<16x32xf32>
    %329 = arith.addf %326, %328 : vector<16x32xf32>
    %330 = arith.addf %308, %329 : vector<16x32xf32>
    %c48 = arith.constant 48 : index
    %c0_112 = arith.constant 0 : index
    %331 = vector.load %arg1[%c48, %c0_112] : memref<680x64xf32, #tpu.memory_space<vmem>>, vector<1x32xf32>
    %c49 = arith.constant 49 : index
    %c0_113 = arith.constant 0 : index
    %332 = vector.load %arg1[%c49, %c0_113] : memref<680x64xf32, #tpu.memory_space<vmem>>, vector<1x32xf32>
    %cst_114 = arith.constant dense<0.000000e+00> : vector<16xf32>
    %333 = vector.multi_reduction <add>, %330, %cst_114 [1] : vector<16x32xf32> to vector<16xf32>
    %334 = vector.shape_cast %333 : vector<16xf32> to vector<16x1xf32>
    %cst_115 = arith.constant 3.200000e+01 : f32
    %335 = vector.broadcast %cst_115 : f32 to vector<16x1xf32>
    %336 = arith.divf %334, %335 : vector<16x1xf32>
    %337 = vector.broadcast %336 : vector<16x1xf32> to vector<16x32xf32>
    %338 = arith.subf %330, %337 : vector<16x32xf32>
    %339 = arith.mulf %338, %338 : vector<16x32xf32>
    %cst_116 = arith.constant dense<0.000000e+00> : vector<16xf32>
    %340 = vector.multi_reduction <add>, %339, %cst_116 [1] : vector<16x32xf32> to vector<16xf32>
    %341 = vector.shape_cast %340 : vector<16xf32> to vector<16x1xf32>
    %cst_117 = arith.constant 3.200000e+01 : f32
    %342 = vector.broadcast %cst_117 : f32 to vector<16x1xf32>
    %343 = arith.divf %341, %342 : vector<16x1xf32>
    %344 = vector.broadcast %336 : vector<16x1xf32> to vector<16x32xf32>
    %345 = arith.subf %330, %344 : vector<16x32xf32>
    %cst_118 = arith.constant 9.99999996E-13 : f32
    %346 = vector.broadcast %cst_118 : f32 to vector<16x1xf32>
    %347 = arith.addf %343, %346 : vector<16x1xf32>
    %348 = math.rsqrt %347 : vector<16x1xf32>
    %349 = vector.broadcast %348 : vector<16x1xf32> to vector<16x32xf32>
    %350 = arith.mulf %345, %349 : vector<16x32xf32>
    %351 = vector.broadcast %331 : vector<1x32xf32> to vector<16x32xf32>
    %352 = arith.mulf %350, %351 : vector<16x32xf32>
    %353 = vector.broadcast %332 : vector<1x32xf32> to vector<16x32xf32>
    %354 = arith.addf %352, %353 : vector<16x32xf32>
    %cst_119 = arith.constant dense<0.000000e+00> : vector<2x32xf32>
    %355 = tpu.matmul %94, %354, %cst_119 {dimension_numbers = #tpu.dot_dimension_numbers<[1], [0], [0], [1], [0, 0, 1, 1], [], []>} : vector<2x16xf32>, vector<16x32xf32>, vector<2x32xf32> -> vector<2x32xf32>
    %cst_120 = arith.constant dense<0.000000e+00> : vector<2x32xf32>
    %356 = tpu.matmul %94, %354, %cst_120 {dimension_numbers = #tpu.dot_dimension_numbers<[1], [0], [0], [1], [0, 0, 1, 1], [], []>} : vector<2x16xf32>, vector<16x32xf32>, vector<2x32xf32> -> vector<2x32xf32>
    %c616 = arith.constant 616 : index
    %c0_121 = arith.constant 0 : index
    %357 = vector.load %arg1[%c616, %c0_121] : memref<680x64xf32, #tpu.memory_space<vmem>>, vector<32x32xf32>
    %cst_122 = arith.constant dense<0.000000e+00> : vector<2x32xf32>
    %358 = tpu.matmul %356, %357, %cst_122 {dimension_numbers = #tpu.dot_dimension_numbers<[1], [0], [0], [1], [0, 0, 1, 1], [], []>} : vector<2x32xf32>, vector<32x32xf32>, vector<2x32xf32> -> vector<2x32xf32>
    %c56 = arith.constant 56 : index
    %c0_123 = arith.constant 0 : index
    %359 = vector.load %arg1[%c56, %c0_123] : memref<680x64xf32, #tpu.memory_space<vmem>>, vector<1x32xf32>
    %360 = vector.broadcast %359 : vector<1x32xf32> to vector<2x32xf32>
    %361 = arith.addf %358, %360 : vector<2x32xf32>
    %362 = math.tanh %361 : vector<2x32xf32>
    %363 = tpu.concatenate %362, %355 in 0 : vector<2x32xf32>, vector<2x32xf32> -> vector<4x32xf32>
    %c648 = arith.constant 648 : index
    %c0_124 = arith.constant 0 : index
    %364 = vector.load %arg1[%c648, %c0_124] : memref<680x64xf32, #tpu.memory_space<vmem>>, vector<32x32xf32>
    %365 = vector.extract_strided_slice %364 {offsets = [0, 0], sizes = [32, 5], strides = [1, 1]} : vector<32x32xf32> to vector<32x5xf32>
    %cst_125 = arith.constant dense<0.000000e+00> : vector<4x5xf32>
    %366 = tpu.matmul %363, %365, %cst_125 {dimension_numbers = #tpu.dot_dimension_numbers<[1], [0], [0], [1], [0, 0, 1, 1], [], []>} : vector<4x32xf32>, vector<32x5xf32>, vector<4x5xf32> -> vector<4x5xf32>
    %c57 = arith.constant 57 : index
    %c0_126 = arith.constant 0 : index
    %367 = vector.load %arg1[%c57, %c0_126] : memref<680x64xf32, #tpu.memory_space<vmem>>, vector<1x5xf32>
    %368 = vector.broadcast %367 : vector<1x5xf32> to vector<4x5xf32>
    %369 = arith.addf %366, %368 : vector<4x5xf32>
    %370 = vector.extract_strided_slice %369 {offsets = [0, 0], sizes = [2, 2], strides = [1, 1]} : vector<4x5xf32> to vector<2x2xf32>
    %371 = vector.extract_strided_slice %369 {offsets = [2, 2], sizes = [2, 3], strides = [1, 1]} : vector<4x5xf32> to vector<2x3xf32>
    %372 = tpu.iota {dimensions = array<i32: 1>} : vector<2x2xi32>
    %373 = vector.broadcast %4 : vector<2x1xi32> to vector<2x2xi32>
    %374 = arith.cmpi eq, %372, %373 : vector<2x2xi32>
    %cst_127 = arith.constant dense<0xFF800000> : vector<2xf32>
    %375 = vector.multi_reduction <maximumf>, %370, %cst_127 [1] : vector<2x2xf32> to vector<2xf32>
    %376 = vector.shape_cast %375 : vector<2xf32> to vector<2x1xf32>
    %377 = vector.broadcast %376 : vector<2x1xf32> to vector<2x2xf32>
    %378 = arith.subf %370, %377 : vector<2x2xf32>
    %379 = math.exp %378 : vector<2x2xf32>
    %cst_128 = arith.constant dense<0.000000e+00> : vector<2xf32>
    %380 = vector.multi_reduction <add>, %379, %cst_128 [1] : vector<2x2xf32> to vector<2xf32>
    %381 = vector.shape_cast %380 : vector<2xf32> to vector<2x1xf32>
    %382 = math.log %381 : vector<2x1xf32>
    %383 = arith.addf %382, %376 : vector<2x1xf32>
    %cst_129 = arith.constant 0.000000e+00 : f32
    %384 = vector.broadcast %cst_129 : f32 to vector<2x2xf32>
    %385 = arith.select %374, %370, %384 : vector<2x2xi1>, vector<2x2xf32>
    %cst_130 = arith.constant dense<0.000000e+00> : vector<2xf32>
    %386 = vector.multi_reduction <add>, %385, %cst_130 [1] : vector<2x2xf32> to vector<2xf32>
    %387 = vector.shape_cast %386 : vector<2xf32> to vector<2x1xf32>
    %388 = arith.subf %383, %387 : vector<2x1xf32>
    %cst_131 = arith.constant dense<0.000000e+00> : vector<1xf32>
    %389 = vector.multi_reduction <add>, %388, %cst_131 [0] : vector<2x1xf32> to vector<1xf32>
    %390 = vector.shape_cast %389 : vector<1xf32> to vector<1x1xf32>
    %cst_132 = arith.constant 5.000000e-01 : f32
    %391 = vector.broadcast %cst_132 : f32 to vector<1x1xf32>
    %392 = arith.mulf %390, %391 : vector<1x1xf32>
    %393 = tpu.iota {dimensions = array<i32: 1>} : vector<2x3xi32>
    %394 = vector.broadcast %3 : vector<2x1xi32> to vector<2x3xi32>
    %395 = arith.cmpi eq, %393, %394 : vector<2x3xi32>
    %cst_133 = arith.constant dense<0xFF800000> : vector<2xf32>
    %396 = vector.multi_reduction <maximumf>, %371, %cst_133 [1] : vector<2x3xf32> to vector<2xf32>
    %397 = vector.shape_cast %396 : vector<2xf32> to vector<2x1xf32>
    %398 = vector.broadcast %397 : vector<2x1xf32> to vector<2x3xf32>
    %399 = arith.subf %371, %398 : vector<2x3xf32>
    %400 = math.exp %399 : vector<2x3xf32>
    %cst_134 = arith.constant dense<0.000000e+00> : vector<2xf32>
    %401 = vector.multi_reduction <add>, %400, %cst_134 [1] : vector<2x3xf32> to vector<2xf32>
    %402 = vector.shape_cast %401 : vector<2xf32> to vector<2x1xf32>
    %403 = math.log %402 : vector<2x1xf32>
    %404 = arith.addf %403, %397 : vector<2x1xf32>
    %cst_135 = arith.constant 0.000000e+00 : f32
    %405 = vector.broadcast %cst_135 : f32 to vector<2x3xf32>
    %406 = arith.select %395, %371, %405 : vector<2x3xi1>, vector<2x3xf32>
    %cst_136 = arith.constant dense<0.000000e+00> : vector<2xf32>
    %407 = vector.multi_reduction <add>, %406, %cst_136 [1] : vector<2x3xf32> to vector<2xf32>
    %408 = vector.shape_cast %407 : vector<2xf32> to vector<2x1xf32>
    %409 = arith.subf %404, %408 : vector<2x1xf32>
    %cst_137 = arith.constant dense<0.000000e+00> : vector<1xf32>
    %410 = vector.multi_reduction <add>, %409, %cst_137 [0] : vector<2x1xf32> to vector<1xf32>
    %411 = vector.shape_cast %410 : vector<1xf32> to vector<1x1xf32>
    %cst_138 = arith.constant 5.000000e-01 : f32
    %412 = vector.broadcast %cst_138 : f32 to vector<1x1xf32>
    %413 = arith.mulf %411, %412 : vector<1x1xf32>
    %cst_139 = arith.constant 0.000000e+00 : f32
    %414 = vector.broadcast %cst_139 : f32 to vector<6x2xf32>
    %415 = tpu.concatenate %370, %414 in 0 : vector<2x2xf32>, vector<6x2xf32> -> vector<8x2xf32>
    %cst_140 = arith.constant 0.000000e+00 : f32
    %416 = vector.broadcast %cst_140 : f32 to vector<8x126xf32>
    %417 = tpu.concatenate %415, %416 in 1 : vector<8x2xf32>, vector<8x126xf32> -> vector<8x128xf32>
    %418 = tpu.iota {dimensions = array<i32: 0>} : vector<8x128xi32>
    %419 = tpu.iota {dimensions = array<i32: 1>} : vector<8x128xi32>
    %c0_i32_141 = arith.constant 0 : i32
    %420 = vector.broadcast %c0_i32_141 : i32 to vector<8x128xi32>
    %421 = arith.cmpi eq, %418, %420 : vector<8x128xi32>
    %c8_i32_142 = arith.constant 8 : i32
    %422 = vector.broadcast %c8_i32_142 : i32 to vector<8x128xi32>
    %423 = arith.cmpi eq, %419, %422 : vector<8x128xi32>
    %424 = arith.andi %421, %423 : vector<8x128xi1>
    %cst_143 = arith.constant 0.000000e+00 : f32
    %425 = vector.shape_cast %392 : vector<1x1xf32> to vector<1x1xf32>
    %426 = vector.broadcast %425 : vector<1x1xf32> to vector<8x128xf32>
    %427 = vector.broadcast %cst_143 : f32 to vector<8x128xf32>
    %428 = arith.select %424, %426, %427 : vector<8x128xi1>, vector<8x128xf32>
    %429 = arith.addf %417, %428 : vector<8x128xf32>
    %c0_i32_144 = arith.constant 0 : i32
    %430 = vector.broadcast %c0_i32_144 : i32 to vector<8x128xi32>
    %431 = arith.cmpi eq, %418, %430 : vector<8x128xi32>
    %c9_i32 = arith.constant 9 : i32
    %432 = vector.broadcast %c9_i32 : i32 to vector<8x128xi32>
    %433 = arith.cmpi eq, %419, %432 : vector<8x128xi32>
    %434 = arith.andi %431, %433 : vector<8x128xi1>
    %cst_145 = arith.constant 0.000000e+00 : f32
    %435 = vector.shape_cast %413 : vector<1x1xf32> to vector<1x1xf32>
    %436 = vector.broadcast %435 : vector<1x1xf32> to vector<8x128xf32>
    %437 = vector.broadcast %cst_145 : f32 to vector<8x128xf32>
    %438 = arith.select %434, %436, %437 : vector<8x128xi1>, vector<8x128xf32>
    %439 = arith.addf %429, %438 : vector<8x128xf32>
    %c0_146 = arith.constant 0 : index
    %c0_147 = arith.constant 0 : index
    %440 = vector.load %arg2[%c0_146, %c0_147] : memref<8x128xf32, #tpu.memory_space<vmem>>, vector<8x128xf32>
    tpu.vector_store %arg2[%c0_146, %c0_147], %439 {strides = array<i32>} : memref<8x128xf32, #tpu.memory_space<vmem>>, vector<8x128xf32>,
    return
  }
}

</mosaic_0001>

<llo_original>
// kernel: tpu_custom_call.1
$region0: #{tpu_custom_call.1}
  #allocation0 [shape = 'u32[]', space=smem, size = 0x4, offset = 0x4, fixed_abs, tag = 'smem constant byte address 0x4 - core index']
  #allocation1 [shape = 'u32[144,128]{1,0:T(1,128)}', space=vmem, size = 0x12000, scoped, tag = 'internal scratch']
  %s0 = inlined_call_operand.vmem [shape: s32[16,19], index: 0, kind: input, shape index: {}]
  %s1 = inlined_call_operand.vmem [shape: f32[680,64], index: 1, kind: input, shape index: {}]
  %s2 = inlined_call_operand.hbm [shape: f32[8,128], index: 2, kind: output, shape index: {}]
  %s3 = sld [smem:[#allocation0]]
  $region18: #{tpu_custom_call.1} parent=0
    _
  %s5 = ssub.s32 1, %s3
  %s6 = scalar_select 0, %s5, %s3
  $region1: #{tpu_custom_call.1} parent=0
    #allocation2 [shape = 'u8[4096]{0}', space=vmem, size = 0x1000, scoped, tag = 'output window, operand 0, single buffered']
    #allocation3 [shape = 's32[1]{0}', space=sflag, size = 0x4, scoped, tag = 'scoped memory for tpu_custom_call.1']
    %7 = vsyncpa [#allocation3], 0
    // Predicated region
    $region2: #{tpu_custom_call.1} parent=1 // pred_check
      _
    $region3: #{tpu_custom_call.1} parent=1 // pred_check_branch
      %9 = sbr.rel (0) target = $region5
    $region4: #{tpu_custom_call.1} parent=1 // pred_region
      _
    $region5: #{tpu_custom_call.1} parent=1 // pred_fallthru
      _
    // Predicated region
    $region6: #{tpu_custom_call.1} parent=1 // pred_check
      _
    $region7: #{tpu_custom_call.1} parent=1 // pred_check_branch
      %11 = sbr.rel (0) target = $region9
    $region8: #{tpu_custom_call.1} parent=1 // pred_region
      _
    $region9: #{tpu_custom_call.1} parent=1 // pred_fallthru
      _
    %v12 = vld [vmem:[%s0] sm:$0xff]
    %v13 = vld [vmem:[%s0 + $0x8] sm:$0xff]
    %v14 = vcvt.s32.f32 %v12
    %v15 = vcvt.s32.f32 %v13
    %v16 = vld [vmem:[%s0] sm:$0x3]
    %v17 = vld [vmem:[%s1 + $0x40] sm:$0xff]
    %v18 = vld [vmem:[%s1 + $0x48] sm:$0xff]
    %v19 = vld [vmem:[%s1 + $0x50] sm:$0xff]
    %v20 = vld [vmem:[%s1 + $0x58] sm:$0xff]
    %v21 = vld [vmem:[%s1 + $0x60] sm:$0xff]
    %v22 = vld [vmem:[%s1 + $0x68] sm:$0xff]
    %v23 = vld [vmem:[%s1 + $0x70] sm:$0xff]
    %v24 = vld [vmem:[%s1 + $0x78] sm:$0xff]
    %v25 = vld [vmem:[%s1 + $0x80] sm:$0xff]
    %v26 = vld [vmem:[%s1 + $0x88] sm:$0xff]
    %v27 = vld [vmem:[%s1 + $0x90] sm:$0xff]
    %v28 = vld [vmem:[%s1 + $0x98] sm:$0xff]
    %v29 = vld [vmem:[%s1 + $0xa0] sm:$0xff]
    %v30 = vlaneseq
    %v31 = vand.u32 %v30, 127
    %32 = vset.pattern.permute.xlu0 16
    %33 = vperm.xlu0 %32, %v12
    %v34 = vpop.permute.xlu0 %33
    %35 = vset.pattern.permute.xlu0 16
    %36 = vperm.xlu0 %35, %v13
    %v37 = vpop.permute.xlu0 %36
    %vm38 = vcmp.eq.s32.totalorder %v31, %v34
    %vm39 = vcmp.eq.s32.totalorder %v31, %v37
    %v40 = vsel %vm38, 1, 0
    %v41 = vsel %vm39, 1, 0
    %v42 = vcvt.s32.f32 %v40
    %v43 = vcvt.s32.f32 %v41
    %v44 = vld [vmem:[%s1 + $0x8] sm:$0xff]
    %v45 = vld [vmem:[%s1 + $0x10] sm:$0xff]
    %vm46 = vcmask 850944
    %v48 = vsel %vm46, %v42, 0
    %v51 = vsel %vm46, %v43, 0
    %53 = vmatprep.subr.mxu0 0.0
    %54 = vmatpush1.msra.mxu0 0.0
    %55 = vmatprep.subr.mxu0 0.0
    %56 = vmatpush1.msra.mxu0 0.0
    %57 = vmatprep.subr.mxu0 0.0
    %58 = vmatpush1.msra.mxu0 0.0
    %59 = vmatprep.subr.mxu0 0.0
    %60 = vmatpush1.msra.mxu0 %v29
    %61 = vmatprep.subr.mxu0 0.0
    %62 = vmatpush1.msra.mxu0 %v28
    %63 = vmatprep.subr.mxu0 0.0
    %64 = vmatpush1.msra.mxu0 %v27
    %65 = vmatprep.subr.mxu0 0.0
    %66 = vmatpush1.msra.mxu0 %v26
    %67 = vmatprep.subr.mxu0 0.0
    %68 = vmatpush1.msra.mxu0 %v25
    %69 = vmatprep.subr.mxu0 0.0
    %70 = vmatpush1.msra.mxu0 %v24
    %71 = vmatprep.subr.mxu0 0.0
    %72 = vmatpush1.msra.mxu0 %v23
    %73 = vmatprep.subr.mxu0 0.0
    %74 = vmatpush1.msra.mxu0 %v22
    %75 = vmatprep.subr.mxu0 0.0
    %76 = vmatpush1.msra.mxu0 %v21
    %77 = vmatprep.subr.mxu0 0.0
    %78 = vmatpush1.msra.mxu0 %v20
    %79 = vmatprep.subr.mxu0 0.0
    %80 = vmatpush1.msra.mxu0 %v19
    %81 = vmatprep.subr.mxu0 0.0
    %82 = vmatpush1.msra.mxu0 %v18
    %83 = vmatprep.subr.mxu0 0.0
    %84 = vmatpush1.msra.mxu0 %v17
    %85 = vmatprep.subr.mxu0 0.0
    %86 = vmatpush2.msra.mxu0 0.0
    %87 = vmatprep.subr.mxu0 0.0
    %88 = vmatpush2.msra.mxu0 0.0
    %89 = vmatprep.subr.mxu0 0.0
    %90 = vmatpush2.msra.mxu0 0.0
    %91 = vmatprep.subr.mxu0 0.0
    %92 = vmatpush2.msra.mxu0 0.0
    %93 = vmatprep.subr.mxu0 0.0
    %94 = vmatpush2.msra.mxu0 0.0
    %95 = vmatprep.subr.mxu0 0.0
    %96 = vmatpush2.msra.mxu0 0.0
    %97 = vmatprep.subr.mxu0 0.0
    %98 = vmatpush2.msra.mxu0 0.0
    %99 = vmatprep.subr.mxu0 0.0
    %100 = vmatpush2.msra.mxu0 0.0
    %101 = vmatprep.subr.mxu0 0.0
    %102 = vmatpush2.msra.mxu0 0.0
    %103 = vmatprep.subr.mxu0 0.0
    %104 = vmatpush2.msra.mxu0 0.0
    %105 = vmatprep.subr.mxu0 0.0
    %106 = vmatpush2.msra.mxu0 0.0
    %107 = vmatprep.subr.mxu0 0.0
    %108 = vmatpush2.msra.mxu0 0.0
    %109 = vmatprep.subr.mxu0 0.0
    %110 = vmatpush2.msra.mxu0 0.0
    %111 = vmatprep.subr.mxu0 0.0
    %112 = vmatpush2.msra.mxu0 0.0
    %113 = vmatprep.subr.mxu0 0.0
    %114 = vmatpush2.msra.mxu0 0.0
    %115 = vmatprep.subr.mxu0 0.0
    %116 = vmatpush2.msra.mxu0 0.0
    %117 = vmatprep.mubr.f32.mxu0 0.0
    %118 = vmatmul.mubr.f32.gmra.mxu0 %v48
    %v119 = vpop.f32.mrf.mxu0
    %v120 = vadd.f32 %v44, %v119
    %v121 = vpop.f32.mrf.mxu0
    %122 = vmatprep.mubr.f32.mxu0 0.0
    %123 = vmatmul.mubr.f32.gmra.mxu0 %v51
    %v124 = vpop.f32.mrf.mxu0
    %v125 = vadd.f32 %v45, %v124
    %v126 = vpop.f32.mrf.mxu0
    %127 = vdwg.mxu0
    %v128 = vld [vmem:[%s1] sm:$0x1]
    %v129 = vld [vmem:[%s1 + $0x1] sm:$0x1]
    %vm130 = vcmask 261120
    %v131 = vsel %vm130, %v120, 0.0
    %132 = vadd.xlane.f32.xlu0 %v131
    %v133 = vpop.xlane.xlu0 %132
    %v134 = vsel %vm130, %v125, 0.0
    %135 = vadd.xlane.f32.xlu0 %v134
    %v136 = vpop.xlane.xlu0 %135
    %v137 = vrcp.pop 32.0
    %v138 = vmul.f32 %v133, %v137
    %v139 = vmul.f32 %v136, %v137
    %v140 = vsub.f32 %v120, %v138
    %v141 = vsub.f32 %v125, %v139
    %v142 = vmul.f32 %v140, %v140
    %v143 = vmul.f32 %v141, %v141
    %v144 = vsel %vm130, %v142, 0.0
    %145 = vadd.xlane.f32.xlu0 %v144
    %v146 = vpop.xlane.xlu0 %145
    %v147 = vsel %vm130, %v143, 0.0
    %148 = vadd.xlane.f32.xlu0 %v147
    %v149 = vpop.xlane.xlu0 %148
    %v150 = vmul.f32 %v146, %v137
    %v151 = vmul.f32 %v149, %v137
    %v152 = vadd.f32 %v150, 1e-12
    %v153 = vadd.f32 %v151, 1e-12
    %v154 = vrsqrt.pop %v152
    %v155 = vrsqrt.pop %v153
    %v156 = vmul.f32 %v140, %v154
    %v157 = vmul.f32 %v141, %v155
    %v158 = vlaneseq
    %v159 = vshrl.u32 %v158, 7
    %v160 = vsub.s32 0, %v159
    %v161 = vrot.slane %v128, %v160
    %v162 = vmul.f32 %v156, %v161
    %v163 = vmul.f32 %v157, %v161
    %v164 = vlaneseq
    %v165 = vshrl.u32 %v164, 7
    %v166 = vsub.s32 0, %v165
    %v167 = vrot.slane %v129, %v166
    %v168 = vadd.f32 %v162, %v167
    %v169 = vadd.f32 %v163, %v167
    %v170 = vlaneseq
    %v171 = vshrl.u32 %v170, 7
    %v172 = vadd.s32 %v171, 8
    %vm173 = vcmp.ge.s32.totalorder %v171, 0
    %vm174 = vcmp.ge.s32.totalorder %v172, 0
    %vm175 = vcmp.lt.s32.totalorder %v171, 8
    %vm176 = vcmp.lt.s32.totalorder %v172, 8
    %vm177 = vmand %vm173, %vm175
    %vm178 = vmand %vm174, %vm176
    %vm179 = vcmp.ge.s32.totalorder %v31, 0
    %vm180 = vcmp.lt.s32.totalorder %v31, 8
    %vm181 = vmand %vm179, %vm180
    %vm182 = vmand %vm177, %vm181
    %vm183 = vmand %vm178, %vm181
    %vm184 = vcmp.ge.s32.totalorder %v171, 8
    %vm185 = vcmp.ge.s32.totalorder %v172, 8
    %vm186 = vcmp.lt.s32.totalorder %v171, 16
    %vm187 = vcmp.lt.s32.totalorder %v172, 16
    %vm188 = vmand %vm184, %vm186
    %vm189 = vmand %vm185, %vm187
    %vm190 = vcmp.ge.s32.totalorder %v31, 8
    %vm191 = vcmp.lt.s32.totalorder %v31, 16
    %vm192 = vmand %vm190, %vm191
    %vm193 = vmand %vm188, %vm192
    %vm194 = vmand %vm189, %vm192
    %vm195 = vmor %vm182, %vm193
    %vm196 = vmor %vm183, %vm194
    %v197 = vsub.f32 1.0, %v14
    %v198 = vsub.f32 1.0, %v15
    %v199 = vmul.f32 %v197, -10000.0
    %v200 = vmul.f32 %v198, -10000.0
    %v201 = vsel %vm195, 0.0, -1e+09
    %v202 = vsel %vm196, 0.0, -1e+09
    %v203 = vadd.f32 %v199, %v201
    %v204 = vadd.f32 %v200, %v202
    %vm205 = vmand %vm179, %vm191
    %v206 = vsel %vm205, 1, 0
    %v207 = vcvt.s32.f32 %v206
    %vm208 = vcmp.ge.s32.totalorder %v31, 16
    %vm209 = vcmp.lt.s32.totalorder %v31, 32
    %vm210 = vmand %vm208, %vm209
    %v211 = vsel %vm210, 1, 0
    %v212 = vcvt.s32.f32 %v211
    %v213 = vmul.u32 %v171, 8
    %vm214 = vcmp.eq.s32.totalorder %v31, %v213
    %v215 = vsel %vm214, 1, 0
    %v216 = vcvt.s32.f32 %v215
    %v217 = vld [vmem:[%s1 + $0x168] sm:$0xff]
    %v218 = vld [vmem:[%s1 + $0x170] sm:$0xff]
    %v219 = vld [vmem:[%s1 + $0x178] sm:$0xff]
    %v220 = vld [vmem:[%s1 + $0x180] sm:$0xff]
    %v221 = vld [vmem:[%s1 + $0x188] sm:$0xff]
    %v222 = vld [vmem:[%s1 + $0x190] sm:$0xff]
    %v223 = vld [vmem:[%s1 + $0x198] sm:$0xff]
    %v224 = vld [vmem:[%s1 + $0x1a0] sm:$0xff]
    %v225 = vld [vmem:[%s1 + $0x1a8] sm:$0xff]
    %v226 = vld [vmem:[%s1 + $0x1b0] sm:$0xff]
    %v227 = vld [vmem:[%s1 + $0x1b8] sm:$0xff]
    %v228 = vld [vmem:[%s1 + $0x1c0] sm:$0xff]
    %v229 = vld [vmem:[%s1 + $0x1c8] sm:$0xff]
    %v230 = vld [vmem:[%s1 + $0x1d0] sm:$0xff]
    %v231 = vld [vmem:[%s1 + $0x1d8] sm:$0xff]
    %v232 = vld [vmem:[%s1 + $0x1e0] sm:$0xff]
    %v233 = vld [vmem:[%s1 + $0xa8] sm:$0xff]
    %v234 = vld [vmem:[%s1 + $0xb0] sm:$0xff]
    %v235 = vld [vmem:[%s1 + $0xb8] sm:$0xff]
    %v236 = vld [vmem:[%s1 + $0xc0] sm:$0xff]
    %v237 = vld [vmem:[%s1 + $0xc8] sm:$0xff]
    %v238 = vld [vmem:[%s1 + $0xd0] sm:$0xff]
    %v239 = vld [vmem:[%s1 + $0xd8] sm:$0xff]
    %v240 = vld [vmem:[%s1 + $0xe0] sm:$0xff]
    %v241 = vld [vmem:[%s1 + $0xe8] sm:$0xff]
    %v242 = vld [vmem:[%s1 + $0xf0] sm:$0xff]
    %v243 = vld [vmem:[%s1 + $0xf8] sm:$0xff]
    %v244 = vld [vmem:[%s1 + $0x100] sm:$0xff]
    %v245 = vld [vmem:[%s1 + $0x18] sm:$0x1]
    %v246 = vlaneseq
    %v247 = vshrl.u32 %v246, 7
    %v248 = vsub.s32 0, %v247
    %v249 = vrot.slane %v245, %v248
    %v251 = vsel %vm130, %v168, 0
    %v254 = vsel %vm130, %v169, 0
    %256 = vmatprep.subr.mxu0 0.0
    %257 = vmatpush1.msra.mxu0 0.0
    %258 = vmatprep.subr.mxu0 0.0
    %259 = vmatpush1.msra.mxu0 0.0
    %260 = vmatprep.subr.mxu0 0.0
    %261 = vmatpush1.msra.mxu0 0.0
    %262 = vmatprep.subr.mxu0 0.0
    %263 = vmatpush1.msra.mxu0 0.0
    %264 = vmatprep.subr.mxu0 0.0
    %265 = vmatpush1.msra.mxu0 0.0
    %266 = vmatprep.subr.mxu0 0.0
    %267 = vmatpush1.msra.mxu0 0.0
    %268 = vmatprep.subr.mxu0 0.0
    %269 = vmatpush1.msra.mxu0 0.0
    %270 = vmatprep.subr.mxu0 0.0
    %271 = vmatpush1.msra.mxu0 0.0
    %272 = vmatprep.subr.mxu0 0.0
    %273 = vmatpush1.msra.mxu0 0.0
    %274 = vmatprep.subr.mxu0 0.0
    %275 = vmatpush1.msra.mxu0 0.0
    %276 = vmatprep.subr.mxu0 0.0
    %277 = vmatpush1.msra.mxu0 0.0
    %278 = vmatprep.subr.mxu0 0.0
    %279 = vmatpush1.msra.mxu0 0.0
    %280 = vmatprep.subr.mxu0 0.0
    %281 = vmatpush1.msra.mxu0 %v220
    %282 = vmatprep.subr.mxu0 0.0
    %283 = vmatpush1.msra.mxu0 %v219
    %284 = vmatprep.subr.mxu0 0.0
    %285 = vmatpush1.msra.mxu0 %v218
    %286 = vmatprep.subr.mxu0 0.0
    %287 = vmatpush1.msra.mxu0 %v217
    %288 = vmatprep.subr.mxu0 0.0
    %289 = vmatpush2.msra.mxu0 0.0
    %290 = vmatprep.subr.mxu0 0.0
    %291 = vmatpush2.msra.mxu0 0.0
    %292 = vmatprep.subr.mxu0 0.0
    %293 = vmatpush2.msra.mxu0 0.0
    %294 = vmatprep.subr.mxu0 0.0
    %295 = vmatpush2.msra.mxu0 0.0
    %296 = vmatprep.subr.mxu0 0.0
    %297 = vmatpush2.msra.mxu0 0.0
    %298 = vmatprep.subr.mxu0 0.0
    %299 = vmatpush2.msra.mxu0 0.0
    %300 = vmatprep.subr.mxu0 0.0
    %301 = vmatpush2.msra.mxu0 0.0
    %302 = vmatprep.subr.mxu0 0.0
    %303 = vmatpush2.msra.mxu0 0.0
    %304 = vmatprep.subr.mxu0 0.0
    %305 = vmatpush2.msra.mxu0 0.0
    %306 = vmatprep.subr.mxu0 0.0
    %307 = vmatpush2.msra.mxu0 0.0
    %308 = vmatprep.subr.mxu0 0.0
    %309 = vmatpush2.msra.mxu0 0.0
    %310 = vmatprep.subr.mxu0 0.0
    %311 = vmatpush2.msra.mxu0 0.0
    %312 = vmatprep.subr.mxu0 0.0
    %313 = vmatpush2.msra.mxu0 0.0
    %314 = vmatprep.subr.mxu0 0.0
    %315 = vmatpush2.msra.mxu0 0.0
    %316 = vmatprep.subr.mxu0 0.0
    %317 = vmatpush2.msra.mxu0 0.0
    %318 = vmatprep.subr.mxu0 0.0
    %319 = vmatpush2.msra.mxu0 0.0
    %320 = vmatprep.mubr.f32.mxu0 0.0
    %321 = vmatmul.mubr.f32.gmra.mxu0 %v251
    %v322 = vpop.f32.mrf.mxu0
    %v323 = vadd.f32 %v249, %v322
    %v324 = vpop.f32.mrf.mxu0
    %325 = vmatprep.mubr.f32.mxu0 0.0
    %326 = vmatmul.mubr.f32.gmra.mxu0 %v254
    %v327 = vpop.f32.mrf.mxu0
    %v328 = vadd.f32 %v249, %v327
    %v329 = vpop.f32.mrf.mxu0
    %330 = vdwg.mxu0
    %v331 = vmul.f32 %v323, 0.25
    %v332 = vmul.f32 %v328, 0.25
    %v333 = vld [vmem:[%s1 + $0x19] sm:$0x1]
    %v334 = vlaneseq
    %v335 = vshrl.u32 %v334, 7
    %v336 = vsub.s32 0, %v335
    %v337 = vrot.slane %v333, %v336
    %338 = vmatprep.subr.mxu0 0.0
    %339 = vmatpush1.msra.mxu0 0.0
    %340 = vmatprep.subr.mxu0 0.0
    %341 = vmatpush1.msra.mxu0 0.0
    %342 = vmatprep.subr.mxu0 0.0
    %343 = vmatpush1.msra.mxu0 0.0
    %344 = vmatprep.subr.mxu0 0.0
    %345 = vmatpush1.msra.mxu0 0.0
    %346 = vmatprep.subr.mxu0 0.0
    %347 = vmatpush1.msra.mxu0 0.0
    %348 = vmatprep.subr.mxu0 0.0
    %349 = vmatpush1.msra.mxu0 0.0
    %350 = vmatprep.subr.mxu0 0.0
    %351 = vmatpush1.msra.mxu0 0.0
    %352 = vmatprep.subr.mxu0 0.0
    %353 = vmatpush1.msra.mxu0 0.0
    %354 = vmatprep.subr.mxu0 0.0
    %355 = vmatpush1.msra.mxu0 0.0
    %356 = vmatprep.subr.mxu0 0.0
    %357 = vmatpush1.msra.mxu0 0.0
    %358 = vmatprep.subr.mxu0 0.0
    %359 = vmatpush1.msra.mxu0 0.0
    %360 = vmatprep.subr.mxu0 0.0
    %361 = vmatpush1.msra.mxu0 0.0
    %362 = vmatprep.subr.mxu0 0.0
    %363 = vmatpush1.msra.mxu0 %v224
    %364 = vmatprep.subr.mxu0 0.0
    %365 = vmatpush1.msra.mxu0 %v223
    %366 = vmatprep.subr.mxu0 0.0
    %367 = vmatpush1.msra.mxu0 %v222
    %368 = vmatprep.subr.mxu0 0.0
    %369 = vmatpush1.msra.mxu0 %v221
    %370 = vmatprep.subr.mxu0 0.0
    %371 = vmatpush2.msra.mxu0 0.0
    %372 = vmatprep.subr.mxu0 0.0
    %373 = vmatpush2.msra.mxu0 0.0
    %374 = vmatprep.subr.mxu0 0.0
    %375 = vmatpush2.msra.mxu0 0.0
    %376 = vmatprep.subr.mxu0 0.0
    %377 = vmatpush2.msra.mxu0 0.0
    %378 = vmatprep.subr.mxu0 0.0
    %379 = vmatpush2.msra.mxu0 0.0
    %380 = vmatprep.subr.mxu0 0.0
    %381 = vmatpush2.msra.mxu0 0.0
    %382 = vmatprep.subr.mxu0 0.0
    %383 = vmatpush2.msra.mxu0 0.0
    %384 = vmatprep.subr.mxu0 0.0
    %385 = vmatpush2.msra.mxu0 0.0
    %386 = vmatprep.subr.mxu0 0.0
    %387 = vmatpush2.msra.mxu0 0.0
    %388 = vmatprep.subr.mxu0 0.0
    %389 = vmatpush2.msra.mxu0 0.0
    %390 = vmatprep.subr.mxu0 0.0
    %391 = vmatpush2.msra.mxu0 0.0
    %392 = vmatprep.subr.mxu0 0.0
    %393 = vmatpush2.msra.mxu0 0.0
    %394 = vmatprep.subr.mxu0 0.0
    %395 = vmatpush2.msra.mxu0 0.0
    %396 = vmatprep.subr.mxu0 0.0
    %397 = vmatpush2.msra.mxu0 0.0
    %398 = vmatprep.subr.mxu0 0.0
    %399 = vmatpush2.msra.mxu0 0.0
    %400 = vmatprep.subr.mxu0 0.0
    %401 = vmatpush2.msra.mxu0 0.0
    %402 = vmatprep.mubr.f32.mxu0 0.0
    %403 = vmatmul.mubr.f32.gmra.mxu0 %v251
    %v404 = vpop.f32.mrf.mxu0
    %v405 = vadd.f32 %v337, %v404
    %v406 = vpop.f32.mrf.mxu0
    %407 = vmatprep.mubr.f32.mxu0 0.0
    %408 = vmatmul.mubr.f32.gmra.mxu0 %v254
    %v409 = vpop.f32.mrf.mxu0
    %v410 = vadd.f32 %v337, %v409
    %v411 = vpop.f32.mrf.mxu0
    %412 = vdwg.mxu0
    %v413 = vld [vmem:[%s1 + $0x1a] sm:$0x1]
    %v414 = vlaneseq
    %v415 = vshrl.u32 %v414, 7
    %v416 = vsub.s32 0, %v415
    %v417 = vrot.slane %v413, %v416
    %418 = vmatprep.subr.mxu0 0.0
    %419 = vmatpush1.msra.mxu0 0.0
    %420 = vmatprep.subr.mxu0 0.0
    %421 = vmatpush1.msra.mxu0 0.0
    %422 = vmatprep.subr.mxu0 0.0
    %423 = vmatpush1.msra.mxu0 0.0
    %424 = vmatprep.subr.mxu0 0.0
    %425 = vmatpush1.msra.mxu0 0.0
    %426 = vmatprep.subr.mxu0 0.0
    %427 = vmatpush1.msra.mxu0 0.0
    %428 = vmatprep.subr.mxu0 0.0
    %429 = vmatpush1.msra.mxu0 0.0
    %430 = vmatprep.subr.mxu0 0.0
    %431 = vmatpush1.msra.mxu0 0.0
    %432 = vmatprep.subr.mxu0 0.0
    %433 = vmatpush1.msra.mxu0 0.0
    %434 = vmatprep.subr.mxu0 0.0
    %435 = vmatpush1.msra.mxu0 0.0
    %436 = vmatprep.subr.mxu0 0.0
    %437 = vmatpush1.msra.mxu0 0.0
    %438 = vmatprep.subr.mxu0 0.0
    %439 = vmatpush1.msra.mxu0 0.0
    %440 = vmatprep.subr.mxu0 0.0
    %441 = vmatpush1.msra.mxu0 0.0
    %442 = vmatprep.subr.mxu0 0.0
    %443 = vmatpush1.msra.mxu0 %v228
    %444 = vmatprep.subr.mxu0 0.0
    %445 = vmatpush1.msra.mxu0 %v227
    %446 = vmatprep.subr.mxu0 0.0
    %447 = vmatpush1.msra.mxu0 %v226
    %448 = vmatprep.subr.mxu0 0.0
    %449 = vmatpush1.msra.mxu0 %v225
    %450 = vmatprep.subr.mxu0 0.0
    %451 = vmatpush2.msra.mxu0 0.0
    %452 = vmatprep.subr.mxu0 0.0
    %453 = vmatpush2.msra.mxu0 0.0
    %454 = vmatprep.subr.mxu0 0.0
    %455 = vmatpush2.msra.mxu0 0.0
    %456 = vmatprep.subr.mxu0 0.0
    %457 = vmatpush2.msra.mxu0 0.0
    %458 = vmatprep.subr.mxu0 0.0
    %459 = vmatpush2.msra.mxu0 0.0
    %460 = vmatprep.subr.mxu0 0.0
    %461 = vmatpush2.msra.mxu0 0.0
    %462 = vmatprep.subr.mxu0 0.0
    %463 = vmatpush2.msra.mxu0 0.0
    %464 = vmatprep.subr.mxu0 0.0
    %465 = vmatpush2.msra.mxu0 0.0
    %466 = vmatprep.subr.mxu0 0.0
    %467 = vmatpush2.msra.mxu0 0.0
    %468 = vmatprep.subr.mxu0 0.0
    %469 = vmatpush2.msra.mxu0 0.0
    %470 = vmatprep.subr.mxu0 0.0
    %471 = vmatpush2.msra.mxu0 0.0
    %472 = vmatprep.subr.mxu0 0.0
    %473 = vmatpush2.msra.mxu0 0.0
    %474 = vmatprep.subr.mxu0 0.0
    %475 = vmatpush2.msra.mxu0 0.0
    %476 = vmatprep.subr.mxu0 0.0
    %477 = vmatpush2.msra.mxu0 0.0
    %478 = vmatprep.subr.mxu0 0.0
    %479 = vmatpush2.msra.mxu0 0.0
    %480 = vmatprep.subr.mxu0 0.0
    %481 = vmatpush2.msra.mxu0 0.0
    %482 = vmatprep.mubr.f32.mxu0 0.0
    %483 = vmatmul.mubr.f32.gmra.mxu0 %v251
    %v484 = vpop.f32.mrf.mxu0
    %v485 = vadd.f32 %v417, %v484
    %v486 = vpop.f32.mrf.mxu0
    %487 = vmatprep.mubr.f32.mxu0 0.0
    %488 = vmatmul.mubr.f32.gmra.mxu0 %v254
    %v489 = vpop.f32.mrf.mxu0
    %v490 = vadd.f32 %v417, %v489
    %v491 = vpop.f32.mrf.mxu0
    %492 = vdwg.mxu0
    %v493 = vmul.f32 %v331, %v207
    %v494 = vmul.f32 %v332, %v207
    %v496 = vsel %vm130, %v493, 0
    %v499 = vsel %vm130, %v494, 0
    %v502 = vsel %vm130, %v405, 0
    %v505 = vsel %vm130, %v410, 0
    %507 = vmatprep.subr.mxu0 0.0
    %508 = vmatpush1.xpose.msra.mxu0 0.0
    %509 = vmatprep.subr.mxu0 0.0
    %510 = vmatpush1.xpose.msra.mxu0 0.0
    %511 = vmatprep.subr.mxu0 0.0
    %512 = vmatpush1.xpose.msra.mxu0 0.0
    %513 = vmatprep.subr.mxu0 0.0
    %514 = vmatpush1.xpose.msra.mxu0 0.0
    %515 = vmatprep.subr.mxu0 0.0
    %516 = vmatpush1.xpose.msra.mxu0 0.0
    %517 = vmatprep.subr.mxu0 0.0
    %518 = vmatpush1.xpose.msra.mxu0 0.0
    %519 = vmatprep.subr.mxu0 0.0
    %520 = vmatpush1.xpose.msra.mxu0 0.0
    %521 = vmatprep.subr.mxu0 0.0
    %522 = vmatpush1.xpose.msra.mxu0 0.0
    %523 = vmatprep.subr.mxu0 0.0
    %524 = vmatpush1.xpose.msra.mxu0 0.0
    %525 = vmatprep.subr.mxu0 0.0
    %526 = vmatpush1.xpose.msra.mxu0 0.0
    %527 = vmatprep.subr.mxu0 0.0
    %528 = vmatpush1.xpose.msra.mxu0 0.0
    %529 = vmatprep.subr.mxu0 0.0
    %530 = vmatpush1.xpose.msra.mxu0 0.0
    %531 = vmatprep.subr.mxu0 0.0
    %532 = vmatpush1.xpose.msra.mxu0 0.0
    %533 = vmatprep.subr.mxu0 0.0
    %534 = vmatpush1.xpose.msra.mxu0 0.0
    %535 = vmatprep.subr.mxu0 0.0
    %536 = vmatpush1.xpose.msra.mxu0 %v505
    %537 = vmatprep.subr.mxu0 0.0
    %538 = vmatpush1.xpose.msra.mxu0 %v502
    %539 = vmatprep.subr.mxu0 0.0
    %540 = vmatpush2.xpose.msra.mxu0 0.0
    %541 = vmatprep.subr.mxu0 0.0
    %542 = vmatpush2.xpose.msra.mxu0 0.0
    %543 = vmatprep.subr.mxu0 0.0
    %544 = vmatpush2.xpose.msra.mxu0 0.0
    %545 = vmatprep.subr.mxu0 0.0
    %546 = vmatpush2.xpose.msra.mxu0 0.0
    %547 = vmatprep.subr.mxu0 0.0
    %548 = vmatpush2.xpose.msra.mxu0 0.0
    %549 = vmatprep.subr.mxu0 0.0
    %550 = vmatpush2.xpose.msra.mxu0 0.0
    %551 = vmatprep.subr.mxu0 0.0
    %552 = vmatpush2.xpose.msra.mxu0 0.0
    %553 = vmatprep.subr.mxu0 0.0
    %554 = vmatpush2.xpose.msra.mxu0 0.0
    %555 = vmatprep.subr.mxu0 0.0
    %556 = vmatpush2.xpose.msra.mxu0 0.0
    %557 = vmatprep.subr.mxu0 0.0
    %558 = vmatpush2.xpose.msra.mxu0 0.0
    %559 = vmatprep.subr.mxu0 0.0
    %560 = vmatpush2.xpose.msra.mxu0 0.0
    %561 = vmatprep.subr.mxu0 0.0
    %562 = vmatpush2.xpose.msra.mxu0 0.0
    %563 = vmatprep.subr.mxu0 0.0
    %564 = vmatpush2.xpose.msra.mxu0 0.0
    %565 = vmatprep.subr.mxu0 0.0
    %566 = vmatpush2.xpose.msra.mxu0 0.0
    %567 = vmatprep.subr.mxu0 0.0
    %568 = vmatpush2.xpose.msra.mxu0 0.0
    %569 = vmatprep.subr.mxu0 0.0
    %570 = vmatpush2.xpose.msra.mxu0 0.0
    %571 = vmatprep.mubr.f32.mxu0 0.0
    %572 = vmatmul.mubr.f32.gmra.mxu0 %v496
    %v573 = vpop.f32.mrf.mxu0
    %v574 = vadd.f32 %v203, %v573
    %v575 = vpop.f32.mrf.mxu0
    %576 = vmatprep.mubr.f32.mxu0 0.0
    %577 = vmatmul.mubr.f32.gmra.mxu0 %v499
    %v578 = vpop.f32.mrf.mxu0
    %v579 = vadd.f32 %v204, %v578
    %v580 = vpop.f32.mrf.mxu0
    %581 = vdwg.mxu0
    %vm582 = vcmask 130048
    %v583 = vsel %vm582, %v574, -inf
    %584 = vmax.xlane.f32.xlu0 %v583
    %v585 = vpop.xlane.xlu0 %584
    %v586 = vsel %vm582, %v579, -inf
    %587 = vmax.xlane.f32.xlu0 %v586
    %v588 = vpop.xlane.xlu0 %587
    %v589 = vsub.f32 %v574, %v585
    %v590 = vsub.f32 %v579, %v588
    %v591 = vmul.f32 %v589, 1.442695
    %v592 = vpow.pop %v591
    %v593 = vmul.f32 %v590, 1.442695
    %v594 = vpow.pop %v593
    %v595 = vsel %vm582, %v592, 0.0
    %596 = vadd.xlane.f32.xlu0 %v595
    %v597 = vpop.xlane.xlu0 %596
    %v598 = vsel %vm582, %v594, 0.0
    %599 = vadd.xlane.f32.xlu0 %v598
    %v600 = vpop.xlane.xlu0 %599
    %v601 = vrcp.pop %v597
    %v602 = vmul.f32 %v592, %v601
    %v603 = vrcp.pop %v600
    %v604 = vmul.f32 %v594, %v603
    %v606 = vsel %vm582, %v602, 0
    %v609 = vsel %vm582, %v604, 0
    %611 = vmatprep.subr.mxu0 0.0
    %612 = vmatpush1.msra.mxu0 0.0
    %613 = vmatprep.subr.mxu0 0.0
    %614 = vmatpush1.msra.mxu0 0.0
    %615 = vmatprep.subr.mxu0 0.0
    %616 = vmatpush1.msra.mxu0 0.0
    %617 = vmatprep.subr.mxu0 0.0
    %618 = vmatpush1.msra.mxu0 0.0
    %619 = vmatprep.subr.mxu0 0.0
    %620 = vmatpush1.msra.mxu0 0.0
    %621 = vmatprep.subr.mxu0 0.0
    %622 = vmatpush1.msra.mxu0 0.0
    %623 = vmatprep.subr.mxu0 0.0
    %624 = vmatpush1.msra.mxu0 0.0
    %625 = vmatprep.subr.mxu0 0.0
    %626 = vmatpush1.msra.mxu0 0.0
    %627 = vmatprep.subr.mxu0 0.0
    %628 = vmatpush1.msra.mxu0 0.0
    %629 = vmatprep.subr.mxu0 0.0
    %630 = vmatpush1.msra.mxu0 0.0
    %631 = vmatprep.subr.mxu0 0.0
    %632 = vmatpush1.msra.mxu0 0.0
    %633 = vmatprep.subr.mxu0 0.0
    %634 = vmatpush1.msra.mxu0 0.0
    %635 = vmatprep.subr.mxu0 0.0
    %636 = vmatpush1.msra.mxu0 0.0
    %637 = vmatprep.subr.mxu0 0.0
    %638 = vmatpush1.msra.mxu0 0.0
    %639 = vmatprep.subr.mxu0 0.0
    %640 = vmatpush1.msra.mxu0 %v490
    %641 = vmatprep.subr.mxu0 0.0
    %642 = vmatpush1.msra.mxu0 %v485
    %643 = vmatprep.subr.mxu0 0.0
    %644 = vmatpush2.msra.mxu0 0.0
    %645 = vmatprep.subr.mxu0 0.0
    %646 = vmatpush2.msra.mxu0 0.0
    %647 = vmatprep.subr.mxu0 0.0
    %648 = vmatpush2.msra.mxu0 0.0
    %649 = vmatprep.subr.mxu0 0.0
    %650 = vmatpush2.msra.mxu0 0.0
    %651 = vmatprep.subr.mxu0 0.0
    %652 = vmatpush2.msra.mxu0 0.0
    %653 = vmatprep.subr.mxu0 0.0
    %654 = vmatpush2.msra.mxu0 0.0
    %655 = vmatprep.subr.mxu0 0.0
    %656 = vmatpush2.msra.mxu0 0.0
    %657 = vmatprep.subr.mxu0 0.0
    %658 = vmatpush2.msra.mxu0 0.0
    %659 = vmatprep.subr.mxu0 0.0
    %660 = vmatpush2.msra.mxu0 0.0
    %661 = vmatprep.subr.mxu0 0.0
    %662 = vmatpush2.msra.mxu0 0.0
    %663 = vmatprep.subr.mxu0 0.0
    %664 = vmatpush2.msra.mxu0 0.0
    %665 = vmatprep.subr.mxu0 0.0
    %666 = vmatpush2.msra.mxu0 0.0
    %667 = vmatprep.subr.mxu0 0.0
    %668 = vmatpush2.msra.mxu0 0.0
    %669 = vmatprep.subr.mxu0 0.0
    %670 = vmatpush2.msra.mxu0 0.0
    %671 = vmatprep.subr.mxu0 0.0
    %672 = vmatpush2.msra.mxu0 0.0
    %673 = vmatprep.subr.mxu0 0.0
    %674 = vmatpush2.msra.mxu0 0.0
    %675 = vmatprep.mubr.f32.mxu0 0.0
    %676 = vmatmul.mubr.f32.gmra.mxu0 %v606
    %v677 = vpop.f32.mrf.mxu0
    %v678 = vadd.f32 0.0, %v677
    %v679 = vpop.f32.mrf.mxu0
    %680 = vmatprep.mubr.f32.mxu0 0.0
    %681 = vmatmul.mubr.f32.gmra.mxu0 %v609
    %v682 = vpop.f32.mrf.mxu0
    %v683 = vadd.f32 0.0, %v682
    %v684 = vpop.f32.mrf.mxu0
    %685 = vdwg.mxu0
    %v686 = vmul.f32 %v678, %v207
    %v687 = vmul.f32 %v683, %v207
    %v688 = vadd.f32 %v686, 0.0
    %v689 = vadd.f32 %v687, 0.0
    %v690 = vmul.f32 %v331, %v212
    %v691 = vmul.f32 %v332, %v212
    %v693 = vsel %vm130, %v690, 0
    %v696 = vsel %vm130, %v691, 0
    %698 = vmatprep.subr.mxu0 0.0
    %699 = vmatpush1.xpose.msra.mxu0 0.0
    %700 = vmatprep.subr.mxu0 0.0
    %701 = vmatpush1.xpose.msra.mxu0 0.0
    %702 = vmatprep.subr.mxu0 0.0
    %703 = vmatpush1.xpose.msra.mxu0 0.0
    %704 = vmatprep.subr.mxu0 0.0
    %705 = vmatpush1.xpose.msra.mxu0 0.0
    %706 = vmatprep.subr.mxu0 0.0
    %707 = vmatpush1.xpose.msra.mxu0 0.0
    %708 = vmatprep.subr.mxu0 0.0
    %709 = vmatpush1.xpose.msra.mxu0 0.0
    %710 = vmatprep.subr.mxu0 0.0
    %711 = vmatpush1.xpose.msra.mxu0 0.0
    %712 = vmatprep.subr.mxu0 0.0
    %713 = vmatpush1.xpose.msra.mxu0 0.0
    %714 = vmatprep.subr.mxu0 0.0
    %715 = vmatpush1.xpose.msra.mxu0 0.0
    %716 = vmatprep.subr.mxu0 0.0
    %717 = vmatpush1.xpose.msra.mxu0 0.0
    %718 = vmatprep.subr.mxu0 0.0
    %719 = vmatpush1.xpose.msra.mxu0 0.0
    %720 = vmatprep.subr.mxu0 0.0
    %721 = vmatpush1.xpose.msra.mxu0 0.0
    %722 = vmatprep.subr.mxu0 0.0
    %723 = vmatpush1.xpose.msra.mxu0 0.0
    %724 = vmatprep.subr.mxu0 0.0
    %725 = vmatpush1.xpose.msra.mxu0 0.0
    %726 = vmatprep.subr.mxu0 0.0
    %727 = vmatpush1.xpose.msra.mxu0 %v505
    %728 = vmatprep.subr.mxu0 0.0
    %729 = vmatpush1.xpose.msra.mxu0 %v502
    %730 = vmatprep.subr.mxu0 0.0
    %731 = vmatpush2.xpose.msra.mxu0 0.0
    %732 = vmatprep.subr.mxu0 0.0
    %733 = vmatpush2.xpose.msra.mxu0 0.0
    %734 = vmatprep.subr.mxu0 0.0
    %735 = vmatpush2.xpose.msra.mxu0 0.0
    %736 = vmatprep.subr.mxu0 0.0
    %737 = vmatpush2.xpose.msra.mxu0 0.0
    %738 = vmatprep.subr.mxu0 0.0
    %739 = vmatpush2.xpose.msra.mxu0 0.0
    %740 = vmatprep.subr.mxu0 0.0
    %741 = vmatpush2.xpose.msra.mxu0 0.0
    %742 = vmatprep.subr.mxu0 0.0
    %743 = vmatpush2.xpose.msra.mxu0 0.0
    %744 = vmatprep.subr.mxu0 0.0
    %745 = vmatpush2.xpose.msra.mxu0 0.0
    %746 = vmatprep.subr.mxu0 0.0
    %747 = vmatpush2.xpose.msra.mxu0 0.0
    %748 = vmatprep.subr.mxu0 0.0
    %749 = vmatpush2.xpose.msra.mxu0 0.0
    %750 = vmatprep.subr.mxu0 0.0
    %751 = vmatpush2.xpose.msra.mxu0 0.0
    %752 = vmatprep.subr.mxu0 0.0
    %753 = vmatpush2.xpose.msra.mxu0 0.0
    %754 = vmatprep.subr.mxu0 0.0
    %755 = vmatpush2.xpose.msra.mxu0 0.0
    %756 = vmatprep.subr.mxu0 0.0
    %757 = vmatpush2.xpose.msra.mxu0 0.0
    %758 = vmatprep.subr.mxu0 0.0
    %759 = vmatpush2.xpose.msra.mxu0 0.0
    %760 = vmatprep.subr.mxu0 0.0
    %761 = vmatpush2.xpose.msra.mxu0 0.0
    %762 = vmatprep.mubr.f32.mxu0 0.0
    %763 = vmatmul.mubr.f32.gmra.mxu0 %v693
    %v764 = vpop.f32.mrf.mxu0
    %v765 = vadd.f32 %v203, %v764
    %v766 = vpop.f32.mrf.mxu0
    %767 = vmatprep.mubr.f32.mxu0 0.0
    %768 = vmatmul.mubr.f32.gmra.mxu0 %v696
    %v769 = vpop.f32.mrf.mxu0
    %v770 = vadd.f32 %v204, %v769
    %v771 = vpop.f32.mrf.mxu0
    %772 = vdwg.mxu0
    %v773 = vsel %vm582, %v765, -inf
    %774 = vmax.xlane.f32.xlu0 %v773
    %v775 = vpop.xlane.xlu0 %774
    %v776 = vsel %vm582, %v770, -inf
    %777 = vmax.xlane.f32.xlu0 %v776
    %v778 = vpop.xlane.xlu0 %777
    %v779 = vsub.f32 %v765, %v775
    %v780 = vsub.f32 %v770, %v778
    %v781 = vmul.f32 %v779, 1.442695
    %v782 = vpow.pop %v781
    %v783 = vmul.f32 %v780, 1.442695
    %v784 = vpow.pop %v783
    %v785 = vsel %vm582, %v782, 0.0
    %786 = vadd.xlane.f32.xlu0 %v785
    %v787 = vpop.xlane.xlu0 %786
    %v788 = vsel %vm582, %v784, 0.0
    %789 = vadd.xlane.f32.xlu0 %v788
    %v790 = vpop.xlane.xlu0 %789
    %v791 = vrcp.pop %v787
    %v792 = vmul.f32 %v782, %v791
    %v793 = vrcp.pop %v790
    %v794 = vmul.f32 %v784, %v793
    %v796 = vsel %vm582, %v792, 0
    %v799 = vsel %vm582, %v794, 0
    %801 = vmatprep.subr.mxu0 0.0
    %802 = vmatpush1.msra.mxu0 0.0
    %803 = vmatprep.subr.mxu0 0.0
    %804 = vmatpush1.msra.mxu0 0.0
    %805 = vmatprep.subr.mxu0 0.0
    %806 = vmatpush1.msra.mxu0 0.0
    %807 = vmatprep.subr.mxu0 0.0
    %808 = vmatpush1.msra.mxu0 0.0
    %809 = vmatprep.subr.mxu0 0.0
    %810 = vmatpush1.msra.mxu0 0.0
    %811 = vmatprep.subr.mxu0 0.0
    %812 = vmatpush1.msra.mxu0 0.0
    %813 = vmatprep.subr.mxu0 0.0
    %814 = vmatpush1.msra.mxu0 0.0
    %815 = vmatprep.subr.mxu0 0.0
    %816 = vmatpush1.msra.mxu0 0.0
    %817 = vmatprep.subr.mxu0 0.0
    %818 = vmatpush1.msra.mxu0 0.0
    %819 = vmatprep.subr.mxu0 0.0
    %820 = vmatpush1.msra.mxu0 0.0
    %821 = vmatprep.subr.mxu0 0.0
    %822 = vmatpush1.msra.mxu0 0.0
    %823 = vmatprep.subr.mxu0 0.0
    %824 = vmatpush1.msra.mxu0 0.0
    %825 = vmatprep.subr.mxu0 0.0
    %826 = vmatpush1.msra.mxu0 0.0
    %827 = vmatprep.subr.mxu0 0.0
    %828 = vmatpush1.msra.mxu0 0.0
    %829 = vmatprep.subr.mxu0 0.0
    %830 = vmatpush1.msra.mxu0 %v490
    %831 = vmatprep.subr.mxu0 0.0
    %832 = vmatpush1.msra.mxu0 %v485
    %833 = vmatprep.subr.mxu0 0.0
    %834 = vmatpush2.msra.mxu0 0.0
    %835 = vmatprep.subr.mxu0 0.0
    %836 = vmatpush2.msra.mxu0 0.0
    %837 = vmatprep.subr.mxu0 0.0
    %838 = vmatpush2.msra.mxu0 0.0
    %839 = vmatprep.subr.mxu0 0.0
    %840 = vmatpush2.msra.mxu0 0.0
    %841 = vmatprep.subr.mxu0 0.0
    %842 = vmatpush2.msra.mxu0 0.0
    %843 = vmatprep.subr.mxu0 0.0
    %844 = vmatpush2.msra.mxu0 0.0
    %845 = vmatprep.subr.mxu0 0.0
    %846 = vmatpush2.msra.mxu0 0.0
    %847 = vmatprep.subr.mxu0 0.0
    %848 = vmatpush2.msra.mxu0 0.0
    %849 = vmatprep.subr.mxu0 0.0
    %850 = vmatpush2.msra.mxu0 0.0
    %851 = vmatprep.subr.mxu0 0.0
    %852 = vmatpush2.msra.mxu0 0.0
    %853 = vmatprep.subr.mxu0 0.0
    %854 = vmatpush2.msra.mxu0 0.0
    %855 = vmatprep.subr.mxu0 0.0
    %856 = vmatpush2.msra.mxu0 0.0
    %857 = vmatprep.subr.mxu0 0.0
    %858 = vmatpush2.msra.mxu0 0.0
    %859 = vmatprep.subr.mxu0 0.0
    %860 = vmatpush2.msra.mxu0 0.0
    %861 = vmatprep.subr.mxu0 0.0
    %862 = vmatpush2.msra.mxu0 0.0
    %863 = vmatprep.subr.mxu0 0.0
    %864 = vmatpush2.msra.mxu0 0.0
    %865 = vmatprep.mubr.f32.mxu0 0.0
    %866 = vmatmul.mubr.f32.gmra.mxu0 %v796
    %v867 = vpop.f32.mrf.mxu0
    %v868 = vadd.f32 0.0, %v867
    %v869 = vpop.f32.mrf.mxu0
    %870 = vmatprep.mubr.f32.mxu0 0.0
    %871 = vmatmul.mubr.f32.gmra.mxu0 %v799
    %v872 = vpop.f32.mrf.mxu0
    %v873 = vadd.f32 0.0, %v872
    %v874 = vpop.f32.mrf.mxu0
    %875 = vdwg.mxu0
    %v876 = vmul.f32 %v868, %v212
    %v877 = vmul.f32 %v873, %v212
    %v878 = vadd.f32 %v688, %v876
    %v879 = vadd.f32 %v689, %v877
    %v880 = vld [vmem:[%s1 + $0x1b] sm:$0x1]
    %v881 = vlaneseq
    %v882 = vshrl.u32 %v881, 7
    %v883 = vsub.s32 0, %v882
    %v884 = vrot.slane %v880, %v883
    %v886 = vsel %vm130, %v878, 0
    %v889 = vsel %vm130, %v879, 0
    %891 = vmatprep.subr.mxu0 0.0
    %892 = vmatpush1.msra.mxu0 0.0
    %893 = vmatprep.subr.mxu0 0.0
    %894 = vmatpush1.msra.mxu0 0.0
    %895 = vmatprep.subr.mxu0 0.0
    %896 = vmatpush1.msra.mxu0 0.0
    %897 = vmatprep.subr.mxu0 0.0
    %898 = vmatpush1.msra.mxu0 0.0
    %899 = vmatprep.subr.mxu0 0.0
    %900 = vmatpush1.msra.mxu0 0.0
    %901 = vmatprep.subr.mxu0 0.0
    %902 = vmatpush1.msra.mxu0 0.0
    %903 = vmatprep.subr.mxu0 0.0
    %904 = vmatpush1.msra.mxu0 0.0
    %905 = vmatprep.subr.mxu0 0.0
    %906 = vmatpush1.msra.mxu0 0.0
    %907 = vmatprep.subr.mxu0 0.0
    %908 = vmatpush1.msra.mxu0 0.0
    %909 = vmatprep.subr.mxu0 0.0
    %910 = vmatpush1.msra.mxu0 0.0
    %911 = vmatprep.subr.mxu0 0.0
    %912 = vmatpush1.msra.mxu0 0.0
    %913 = vmatprep.subr.mxu0 0.0
    %914 = vmatpush1.msra.mxu0 0.0
    %915 = vmatprep.subr.mxu0 0.0
    %916 = vmatpush1.msra.mxu0 %v232
    %917 = vmatprep.subr.mxu0 0.0
    %918 = vmatpush1.msra.mxu0 %v231
    %919 = vmatprep.subr.mxu0 0.0
    %920 = vmatpush1.msra.mxu0 %v230
    %921 = vmatprep.subr.mxu0 0.0
    %922 = vmatpush1.msra.mxu0 %v229
    %923 = vmatprep.subr.mxu0 0.0
    %924 = vmatpush2.msra.mxu0 0.0
    %925 = vmatprep.subr.mxu0 0.0
    %926 = vmatpush2.msra.mxu0 0.0
    %927 = vmatprep.subr.mxu0 0.0
    %928 = vmatpush2.msra.mxu0 0.0
    %929 = vmatprep.subr.mxu0 0.0
    %930 = vmatpush2.msra.mxu0 0.0
    %931 = vmatprep.subr.mxu0 0.0
    %932 = vmatpush2.msra.mxu0 0.0
    %933 = vmatprep.subr.mxu0 0.0
    %934 = vmatpush2.msra.mxu0 0.0
    %935 = vmatprep.subr.mxu0 0.0
    %936 = vmatpush2.msra.mxu0 0.0
    %937 = vmatprep.subr.mxu0 0.0
    %938 = vmatpush2.msra.mxu0 0.0
    %939 = vmatprep.subr.mxu0 0.0
    %940 = vmatpush2.msra.mxu0 0.0
    %941 = vmatprep.subr.mxu0 0.0
    %942 = vmatpush2.msra.mxu0 0.0
    %943 = vmatprep.subr.mxu0 0.0
    %944 = vmatpush2.msra.mxu0 0.0
    %945 = vmatprep.subr.mxu0 0.0
    %946 = vmatpush2.msra.mxu0 0.0
    %947 = vmatprep.subr.mxu0 0.0
    %948 = vmatpush2.msra.mxu0 0.0
    %949 = vmatprep.subr.mxu0 0.0
    %950 = vmatpush2.msra.mxu0 0.0
    %951 = vmatprep.subr.mxu0 0.0
    %952 = vmatpush2.msra.mxu0 0.0
    %953 = vmatprep.subr.mxu0 0.0
    %954 = vmatpush2.msra.mxu0 0.0
    %955 = vmatprep.mubr.f32.mxu0 0.0
    %956 = vmatmul.mubr.f32.gmra.mxu0 %v886
    %v957 = vpop.f32.mrf.mxu0
    %v958 = vadd.f32 %v884, %v957
    %v959 = vpop.f32.mrf.mxu0
    %960 = vmatprep.mubr.f32.mxu0 0.0
    %961 = vmatmul.mubr.f32.gmra.mxu0 %v889
    %v962 = vpop.f32.mrf.mxu0
    %v963 = vadd.f32 %v884, %v962
    %v964 = vpop.f32.mrf.mxu0
    %965 = vdwg.mxu0
    %v966 = vadd.f32 %v168, %v958
    %v967 = vadd.f32 %v169, %v963
    %v968 = vld [vmem:[%s1 + $0x1e] sm:$0x1]
    %v969 = vld [vmem:[%s1 + $0x1f] sm:$0x1]
    %v970 = vsel %vm130, %v966, 0.0
    %971 = vadd.xlane.f32.xlu0 %v970
    %v972 = vpop.xlane.xlu0 %971
    %v973 = vsel %vm130, %v967, 0.0
    %974 = vadd.xlane.f32.xlu0 %v973
    %v975 = vpop.xlane.xlu0 %974
    %v976 = vmul.f32 %v972, %v137
    %v977 = vmul.f32 %v975, %v137
    %v978 = vsub.f32 %v966, %v976
    %v979 = vsub.f32 %v967, %v977
    %v980 = vmul.f32 %v978, %v978
    %v981 = vmul.f32 %v979, %v979
    %v982 = vsel %vm130, %v980, 0.0
    %983 = vadd.xlane.f32.xlu0 %v982
    %v984 = vpop.xlane.xlu0 %983
    %v985 = vsel %vm130, %v981, 0.0
    %986 = vadd.xlane.f32.xlu0 %v985
    %v987 = vpop.xlane.xlu0 %986
    %v988 = vmul.f32 %v984, %v137
    %v989 = vmul.f32 %v987, %v137
    %v990 = vadd.f32 %v988, 1e-12
    %v991 = vadd.f32 %v989, 1e-12
    %v992 = vrsqrt.pop %v990
    %v993 = vrsqrt.pop %v991
    %v994 = vmul.f32 %v978, %v992
    %v995 = vmul.f32 %v979, %v993
    %v996 = vlaneseq
    %v997 = vshrl.u32 %v996, 7
    %v998 = vsub.s32 0, %v997
    %v999 = vrot.slane %v968, %v998
    %v1000 = vmul.f32 %v994, %v999
    %v1001 = vmul.f32 %v995, %v999
    %v1002 = vlaneseq
    %v1003 = vshrl.u32 %v1002, 7
    %v1004 = vsub.s32 0, %v1003
    %v1005 = vrot.slane %v969, %v1004
    %v1006 = vadd.f32 %v1000, %v1005
    %v1007 = vadd.f32 %v1001, %v1005
    %v1008 = vld [vmem:[%s1 + $0x1c] sm:$0x1]
    %v1009 = vlaneseq
    %v1010 = vshrl.u32 %v1009, 7
    %v1011 = vsub.s32 0, %v1010
    %v1012 = vrot.slane %v1008, %v1011
    %v1014 = vsel %vm130, %v1006, 0
    %v1017 = vsel %vm130, %v1007, 0
    %1019 = vmatprep.subr.mxu0 0.0
    %1020 = vmatpush1.msra.mxu0 0.0
    %1021 = vmatprep.subr.mxu0 0.0
    %1022 = vmatpush1.msra.mxu0 0.0
    %1023 = vmatprep.subr.mxu0 0.0
    %1024 = vmatpush1.msra.mxu0 0.0
    %1025 = vmatprep.subr.mxu0 0.0
    %1026 = vmatpush1.msra.mxu0 0.0
    %1027 = vmatprep.subr.mxu0 0.0
    %1028 = vmatpush1.msra.mxu0 0.0
    %1029 = vmatprep.subr.mxu0 0.0
    %1030 = vmatpush1.msra.mxu0 0.0
    %1031 = vmatprep.subr.mxu0 0.0
    %1032 = vmatpush1.msra.mxu0 0.0
    %1033 = vmatprep.subr.mxu0 0.0
    %1034 = vmatpush1.msra.mxu0 0.0
    %1035 = vmatprep.subr.mxu0 0.0
    %1036 = vmatpush1.msra.mxu0 0.0
    %1037 = vmatprep.subr.mxu0 0.0
    %1038 = vmatpush1.msra.mxu0 0.0
    %1039 = vmatprep.subr.mxu0 0.0
    %1040 = vmatpush1.msra.mxu0 0.0
    %1041 = vmatprep.subr.mxu0 0.0
    %1042 = vmatpush1.msra.mxu0 0.0
    %1043 = vmatprep.subr.mxu0 0.0
    %1044 = vmatpush1.msra.mxu0 %v236
    %1045 = vmatprep.subr.mxu0 0.0
    %1046 = vmatpush1.msra.mxu0 %v235
    %1047 = vmatprep.subr.mxu0 0.0
    %1048 = vmatpush1.msra.mxu0 %v234
    %1049 = vmatprep.subr.mxu0 0.0
    %1050 = vmatpush1.msra.mxu0 %v233
    %1051 = vmatprep.subr.mxu0 0.0
    %1052 = vmatpush2.msra.mxu0 0.0
    %1053 = vmatprep.subr.mxu0 0.0
    %1054 = vmatpush2.msra.mxu0 0.0
    %1055 = vmatprep.subr.mxu0 0.0
    %1056 = vmatpush2.msra.mxu0 0.0
    %1057 = vmatprep.subr.mxu0 0.0
    %1058 = vmatpush2.msra.mxu0 0.0
    %1059 = vmatprep.subr.mxu0 0.0
    %1060 = vmatpush2.msra.mxu0 0.0
    %1061 = vmatprep.subr.mxu0 0.0
    %1062 = vmatpush2.msra.mxu0 0.0
    %1063 = vmatprep.subr.mxu0 0.0
    %1064 = vmatpush2.msra.mxu0 0.0
    %1065 = vmatprep.subr.mxu0 0.0
    %1066 = vmatpush2.msra.mxu0 0.0
    %1067 = vmatprep.subr.mxu0 0.0
    %1068 = vmatpush2.msra.mxu0 0.0
    %1069 = vmatprep.subr.mxu0 0.0
    %1070 = vmatpush2.msra.mxu0 0.0
    %1071 = vmatprep.subr.mxu0 0.0
    %1072 = vmatpush2.msra.mxu0 0.0
    %1073 = vmatprep.subr.mxu0 0.0
    %1074 = vmatpush2.msra.mxu0 0.0
    %1075 = vmatprep.subr.mxu0 0.0
    %1076 = vmatpush2.msra.mxu0 0.0
    %1077 = vmatprep.subr.mxu0 0.0
    %1078 = vmatpush2.msra.mxu0 0.0
    %1079 = vmatprep.subr.mxu0 0.0
    %1080 = vmatpush2.msra.mxu0 0.0
    %1081 = vmatprep.subr.mxu0 0.0
    %1082 = vmatpush2.msra.mxu0 0.0
    %1083 = vmatprep.mubr.f32.mxu0 0.0
    %1084 = vmatmul.mubr.f32.gmra.mxu0 %v1014
    %v1085 = vpop.f32.mrf.mxu0
    %v1086 = vadd.f32 %v1012, %v1085
    %v1087 = vpop.f32.mrf.mxu0
    %1088 = vmatprep.mubr.f32.mxu0 0.0
    %1089 = vmatmul.mubr.f32.gmra.mxu0 %v1017
    %v1090 = vpop.f32.mrf.mxu0
    %v1091 = vadd.f32 %v1012, %v1090
    %v1092 = vpop.f32.mrf.mxu0
    %1093 = vdwg.mxu0
    %v1094 = vmul.f32 %v1086, 0.5
    %v1095 = vmul.f32 %v1091, 0.5
    %v1096 = vmul.f32 %v1086, 0.044715
    %v1097 = vmul.f32 %v1091, 0.044715
    %v1098 = vmul.f32 %v1096, %v1086
    %v1099 = vmul.f32 %v1097, %v1091
    %v1100 = vmul.f32 %v1098, %v1086
    %v1101 = vmul.f32 %v1099, %v1091
    %v1102 = vadd.f32 %v1086, %v1100
    %v1103 = vadd.f32 %v1091, %v1101
    %v1104 = vmul.f32 %v1102, 0.7978846
    %v1105 = vmul.f32 %v1103, 0.7978846
    %v1106 = vtanh.pop %v1104
    %v1107 = vtanh.pop %v1105
    %v1108 = vadd.f32 %v1106, 1.0
    %v1109 = vadd.f32 %v1107, 1.0
    %v1110 = vmul.f32 %v1094, %v1108
    %v1111 = vmul.f32 %v1095, %v1109
    %v1112 = vld [vmem:[%s1 + $0x1d] sm:$0x1]
    %v1113 = vlaneseq
    %v1114 = vshrl.u32 %v1113, 7
    %v1115 = vsub.s32 0, %v1114
    %v1116 = vrot.slane %v1112, %v1115
    %vm1117 = vcmask 523264
    %v1119 = vsel %vm1117, %v1110, 0
    %v1122 = vsel %vm1117, %v1111, 0
    %1124 = vmatprep.subr.mxu0 0.0
    %1125 = vmatpush1.msra.mxu0 0.0
    %1126 = vmatprep.subr.mxu0 0.0
    %1127 = vmatpush1.msra.mxu0 0.0
    %1128 = vmatprep.subr.mxu0 0.0
    %1129 = vmatpush1.msra.mxu0 0.0
    %1130 = vmatprep.subr.mxu0 0.0
    %1131 = vmatpush1.msra.mxu0 0.0
    %1132 = vmatprep.subr.mxu0 0.0
    %1133 = vmatpush1.msra.mxu0 0.0
    %1134 = vmatprep.subr.mxu0 0.0
    %1135 = vmatpush1.msra.mxu0 0.0
    %1136 = vmatprep.subr.mxu0 0.0
    %1137 = vmatpush1.msra.mxu0 0.0
    %1138 = vmatprep.subr.mxu0 0.0
    %1139 = vmatpush1.msra.mxu0 0.0
    %1140 = vmatprep.subr.mxu0 0.0
    %1141 = vmatpush1.msra.mxu0 %v244
    %1142 = vmatprep.subr.mxu0 0.0
    %1143 = vmatpush1.msra.mxu0 %v243
    %1144 = vmatprep.subr.mxu0 0.0
    %1145 = vmatpush1.msra.mxu0 %v242
    %1146 = vmatprep.subr.mxu0 0.0
    %1147 = vmatpush1.msra.mxu0 %v241
    %1148 = vmatprep.subr.mxu0 0.0
    %1149 = vmatpush1.msra.mxu0 %v240
    %1150 = vmatprep.subr.mxu0 0.0
    %1151 = vmatpush1.msra.mxu0 %v239
    %1152 = vmatprep.subr.mxu0 0.0
    %1153 = vmatpush1.msra.mxu0 %v238
    %1154 = vmatprep.subr.mxu0 0.0
    %1155 = vmatpush1.msra.mxu0 %v237
    %1156 = vmatprep.subr.mxu0 0.0
    %1157 = vmatpush2.msra.mxu0 0.0
    %1158 = vmatprep.subr.mxu0 0.0
    %1159 = vmatpush2.msra.mxu0 0.0
    %1160 = vmatprep.subr.mxu0 0.0
    %1161 = vmatpush2.msra.mxu0 0.0
    %1162 = vmatprep.subr.mxu0 0.0
    %1163 = vmatpush2.msra.mxu0 0.0
    %1164 = vmatprep.subr.mxu0 0.0
    %1165 = vmatpush2.msra.mxu0 0.0
    %1166 = vmatprep.subr.mxu0 0.0
    %1167 = vmatpush2.msra.mxu0 0.0
    %1168 = vmatprep.subr.mxu0 0.0
    %1169 = vmatpush2.msra.mxu0 0.0
    %1170 = vmatprep.subr.mxu0 0.0
    %1171 = vmatpush2.msra.mxu0 0.0
    %1172 = vmatprep.subr.mxu0 0.0
    %1173 = vmatpush2.msra.mxu0 0.0
    %1174 = vmatprep.subr.mxu0 0.0
    %1175 = vmatpush2.msra.mxu0 0.0
    %1176 = vmatprep.subr.mxu0 0.0
    %1177 = vmatpush2.msra.mxu0 0.0
    %1178 = vmatprep.subr.mxu0 0.0
    %1179 = vmatpush2.msra.mxu0 0.0
    %1180 = vmatprep.subr.mxu0 0.0
    %1181 = vmatpush2.msra.mxu0 0.0
    %1182 = vmatprep.subr.mxu0 0.0
    %1183 = vmatpush2.msra.mxu0 0.0
    %1184 = vmatprep.subr.mxu0 0.0
    %1185 = vmatpush2.msra.mxu0 0.0
    %1186 = vmatprep.subr.mxu0 0.0
    %1187 = vmatpush2.msra.mxu0 0.0
    %1188 = vmatprep.mubr.f32.mxu0 0.0
    %1189 = vmatmul.mubr.f32.gmra.mxu0 %v1119
    %v1190 = vpop.f32.mrf.mxu0
    %v1191 = vadd.f32 %v1116, %v1190
    %v1192 = vpop.f32.mrf.mxu0
    %1193 = vmatprep.mubr.f32.mxu0 0.0
    %1194 = vmatmul.mubr.f32.gmra.mxu0 %v1122
    %v1195 = vpop.f32.mrf.mxu0
    %v1196 = vadd.f32 %v1116, %v1195
    %v1197 = vpop.f32.mrf.mxu0
    %1198 = vdwg.mxu0
    %v1199 = vadd.f32 %v1006, %v1191
    %v1200 = vadd.f32 %v1007, %v1196
    %v1201 = vld [vmem:[%s1 + $0x20] sm:$0x1]
    %v1202 = vld [vmem:[%s1 + $0x21] sm:$0x1]
    %v1203 = vsel %vm130, %v1199, 0.0
    %1204 = vadd.xlane.f32.xlu0 %v1203
    %v1205 = vpop.xlane.xlu0 %1204
    %v1206 = vsel %vm130, %v1200, 0.0
    %1207 = vadd.xlane.f32.xlu0 %v1206
    %v1208 = vpop.xlane.xlu0 %1207
    %v1209 = vmul.f32 %v1205, %v137
    %v1210 = vmul.f32 %v1208, %v137
    %v1211 = vsub.f32 %v1199, %v1209
    %v1212 = vsub.f32 %v1200, %v1210
    %v1213 = vmul.f32 %v1211, %v1211
    %v1214 = vmul.f32 %v1212, %v1212
    %v1215 = vsel %vm130, %v1213, 0.0
    %1216 = vadd.xlane.f32.xlu0 %v1215
    %v1217 = vpop.xlane.xlu0 %1216
    %v1218 = vsel %vm130, %v1214, 0.0
    %1219 = vadd.xlane.f32.xlu0 %v1218
    %v1220 = vpop.xlane.xlu0 %1219
    %v1221 = vmul.f32 %v1217, %v137
    %v1222 = vmul.f32 %v1220, %v137
    %v1223 = vadd.f32 %v1221, 1e-12
    %v1224 = vadd.f32 %v1222, 1e-12
    %v1225 = vrsqrt.pop %v1223
    %v1226 = vrsqrt.pop %v1224
    %v1227 = vmul.f32 %v1211, %v1225
    %v1228 = vmul.f32 %v1212, %v1226
    %v1229 = vlaneseq
    %v1230 = vshrl.u32 %v1229, 7
    %v1231 = vsub.s32 0, %v1230
    %v1232 = vrot.slane %v1201, %v1231
    %v1233 = vmul.f32 %v1227, %v1232
    %v1234 = vmul.f32 %v1228, %v1232
    %v1235 = vlaneseq
    %v1236 = vshrl.u32 %v1235, 7
    %v1237 = vsub.s32 0, %v1236
    %v1238 = vrot.slane %v1202, %v1237
    %v1239 = vadd.f32 %v1233, %v1238
    %v1240 = vadd.f32 %v1234, %v1238
    %v1241 = vld [vmem:[%s1 + $0x1e8] sm:$0xff]
    %v1242 = vld [vmem:[%s1 + $0x1f0] sm:$0xff]
    %v1243 = vld [vmem:[%s1 + $0x1f8] sm:$0xff]
    %v1244 = vld [vmem:[%s1 + $0x200] sm:$0xff]
    %v1245 = vld [vmem:[%s1 + $0x208] sm:$0xff]
    %v1246 = vld [vmem:[%s1 + $0x210] sm:$0xff]
    %v1247 = vld [vmem:[%s1 + $0x218] sm:$0xff]
    %v1248 = vld [vmem:[%s1 + $0x220] sm:$0xff]
    %v1249 = vld [vmem:[%s1 + $0x228] sm:$0xff]
    %v1250 = vld [vmem:[%s1 + $0x230] sm:$0xff]
    %v1251 = vld [vmem:[%s1 + $0x238] sm:$0xff]
    %v1252 = vld [vmem:[%s1 + $0x240] sm:$0xff]
    %v1253 = vld [vmem:[%s1 + $0x248] sm:$0xff]
    %v1254 = vld [vmem:[%s1 + $0x250] sm:$0xff]
    %v1255 = vld [vmem:[%s1 + $0x258] sm:$0xff]
    %v1256 = vld [vmem:[%s1 + $0x260] sm:$0xff]
    %v1257 = vld [vmem:[%s1 + $0x108] sm:$0xff]
    %v1258 = vld [vmem:[%s1 + $0x110] sm:$0xff]
    %v1259 = vld [vmem:[%s1 + $0x118] sm:$0xff]
    %v1260 = vld [vmem:[%s1 + $0x120] sm:$0xff]
    %v1261 = vld [vmem:[%s1 + $0x128] sm:$0xff]
    %v1262 = vld [vmem:[%s1 + $0x130] sm:$0xff]
    %v1263 = vld [vmem:[%s1 + $0x138] sm:$0xff]
    %v1264 = vld [vmem:[%s1 + $0x140] sm:$0xff]
    %v1265 = vld [vmem:[%s1 + $0x148] sm:$0xff]
    %v1266 = vld [vmem:[%s1 + $0x150] sm:$0xff]
    %v1267 = vld [vmem:[%s1 + $0x158] sm:$0xff]
    %v1268 = vld [vmem:[%s1 + $0x160] sm:$0xff]
    %v1269 = vld [vmem:[%s1 + $0x28] sm:$0x1]
    %v1270 = vlaneseq
    %v1271 = vshrl.u32 %v1270, 7
    %v1272 = vsub.s32 0, %v1271
    %v1273 = vrot.slane %v1269, %v1272
    %v1275 = vsel %vm130, %v1239, 0
    %v1278 = vsel %vm130, %v1240, 0
    %1280 = vmatprep.subr.mxu0 0.0
    %1281 = vmatpush1.msra.mxu0 0.0
    %1282 = vmatprep.subr.mxu0 0.0
    %1283 = vmatpush1.msra.mxu0 0.0
    %1284 = vmatprep.subr.mxu0 0.0
    %1285 = vmatpush1.msra.mxu0 0.0
    %1286 = vmatprep.subr.mxu0 0.0
    %1287 = vmatpush1.msra.mxu0 0.0
    %1288 = vmatprep.subr.mxu0 0.0
    %1289 = vmatpush1.msra.mxu0 0.0
    %1290 = vmatprep.subr.mxu0 0.0
    %1291 = vmatpush1.msra.mxu0 0.0
    %1292 = vmatprep.subr.mxu0 0.0
    %1293 = vmatpush1.msra.mxu0 0.0
    %1294 = vmatprep.subr.mxu0 0.0
    %1295 = vmatpush1.msra.mxu0 0.0
    %1296 = vmatprep.subr.mxu0 0.0
    %1297 = vmatpush1.msra.mxu0 0.0
    %1298 = vmatprep.subr.mxu0 0.0
    %1299 = vmatpush1.msra.mxu0 0.0
    %1300 = vmatprep.subr.mxu0 0.0
    %1301 = vmatpush1.msra.mxu0 0.0
    %1302 = vmatprep.subr.mxu0 0.0
    %1303 = vmatpush1.msra.mxu0 0.0
    %1304 = vmatprep.subr.mxu0 0.0
    %1305 = vmatpush1.msra.mxu0 %v1244
    %1306 = vmatprep.subr.mxu0 0.0
    %1307 = vmatpush1.msra.mxu0 %v1243
    %1308 = vmatprep.subr.mxu0 0.0
    %1309 = vmatpush1.msra.mxu0 %v1242
    %1310 = vmatprep.subr.mxu0 0.0
    %1311 = vmatpush1.msra.mxu0 %v1241
    %1312 = vmatprep.subr.mxu0 0.0
    %1313 = vmatpush2.msra.mxu0 0.0
    %1314 = vmatprep.subr.mxu0 0.0
    %1315 = vmatpush2.msra.mxu0 0.0
    %1316 = vmatprep.subr.mxu0 0.0
    %1317 = vmatpush2.msra.mxu0 0.0
    %1318 = vmatprep.subr.mxu0 0.0
    %1319 = vmatpush2.msra.mxu0 0.0
    %1320 = vmatprep.subr.mxu0 0.0
    %1321 = vmatpush2.msra.mxu0 0.0
    %1322 = vmatprep.subr.mxu0 0.0
    %1323 = vmatpush2.msra.mxu0 0.0
    %1324 = vmatprep.subr.mxu0 0.0
    %1325 = vmatpush2.msra.mxu0 0.0
    %1326 = vmatprep.subr.mxu0 0.0
    %1327 = vmatpush2.msra.mxu0 0.0
    %1328 = vmatprep.subr.mxu0 0.0
    %1329 = vmatpush2.msra.mxu0 0.0
    %1330 = vmatprep.subr.mxu0 0.0
    %1331 = vmatpush2.msra.mxu0 0.0
    %1332 = vmatprep.subr.mxu0 0.0
    %1333 = vmatpush2.msra.mxu0 0.0
    %1334 = vmatprep.subr.mxu0 0.0
    %1335 = vmatpush2.msra.mxu0 0.0
    %1336 = vmatprep.subr.mxu0 0.0
    %1337 = vmatpush2.msra.mxu0 0.0
    %1338 = vmatprep.subr.mxu0 0.0
    %1339 = vmatpush2.msra.mxu0 0.0
    %1340 = vmatprep.subr.mxu0 0.0
    %1341 = vmatpush2.msra.mxu0 0.0
    %1342 = vmatprep.subr.mxu0 0.0
    %1343 = vmatpush2.msra.mxu0 0.0
    %1344 = vmatprep.mubr.f32.mxu0 0.0
    %1345 = vmatmul.mubr.f32.gmra.mxu0 %v1275
    %v1346 = vpop.f32.mrf.mxu0
    %v1347 = vadd.f32 %v1273, %v1346
    %v1348 = vpop.f32.mrf.mxu0
    %1349 = vmatprep.mubr.f32.mxu0 0.0
    %1350 = vmatmul.mubr.f32.gmra.mxu0 %v1278
    %v1351 = vpop.f32.mrf.mxu0
    %v1352 = vadd.f32 %v1273, %v1351
    %v1353 = vpop.f32.mrf.mxu0
    %1354 = vdwg.mxu0
    %v1355 = vmul.f32 %v1347, 0.25
    %v1356 = vmul.f32 %v1352, 0.25
    %v1357 = vld [vmem:[%s1 + $0x29] sm:$0x1]
    %v1358 = vlaneseq
    %v1359 = vshrl.u32 %v1358, 7
    %v1360 = vsub.s32 0, %v1359
    %v1361 = vrot.slane %v1357, %v1360
    %1362 = vmatprep.subr.mxu0 0.0
    %1363 = vmatpush1.msra.mxu0 0.0
    %1364 = vmatprep.subr.mxu0 0.0
    %1365 = vmatpush1.msra.mxu0 0.0
    %1366 = vmatprep.subr.mxu0 0.0
    %1367 = vmatpush1.msra.mxu0 0.0
    %1368 = vmatprep.subr.mxu0 0.0
    %1369 = vmatpush1.msra.mxu0 0.0
    %1370 = vmatprep.subr.mxu0 0.0
    %1371 = vmatpush1.msra.mxu0 0.0
    %1372 = vmatprep.subr.mxu0 0.0
    %1373 = vmatpush1.msra.mxu0 0.0
    %1374 = vmatprep.subr.mxu0 0.0
    %1375 = vmatpush1.msra.mxu0 0.0
    %1376 = vmatprep.subr.mxu0 0.0
    %1377 = vmatpush1.msra.mxu0 0.0
    %1378 = vmatprep.subr.mxu0 0.0
    %1379 = vmatpush1.msra.mxu0 0.0
    %1380 = vmatprep.subr.mxu0 0.0
    %1381 = vmatpush1.msra.mxu0 0.0
    %1382 = vmatprep.subr.mxu0 0.0
    %1383 = vmatpush1.msra.mxu0 0.0
    %1384 = vmatprep.subr.mxu0 0.0
    %1385 = vmatpush1.msra.mxu0 0.0
    %1386 = vmatprep.subr.mxu0 0.0
    %1387 = vmatpush1.msra.mxu0 %v1248
    %1388 = vmatprep.subr.mxu0 0.0
    %1389 = vmatpush1.msra.mxu0 %v1247
    %1390 = vmatprep.subr.mxu0 0.0
    %1391 = vmatpush1.msra.mxu0 %v1246
    %1392 = vmatprep.subr.mxu0 0.0
    %1393 = vmatpush1.msra.mxu0 %v1245
    %1394 = vmatprep.subr.mxu0 0.0
    %1395 = vmatpush2.msra.mxu0 0.0
    %1396 = vmatprep.subr.mxu0 0.0
    %1397 = vmatpush2.msra.mxu0 0.0
    %1398 = vmatprep.subr.mxu0 0.0
    %1399 = vmatpush2.msra.mxu0 0.0
    %1400 = vmatprep.subr.mxu0 0.0
    %1401 = vmatpush2.msra.mxu0 0.0
    %1402 = vmatprep.subr.mxu0 0.0
    %1403 = vmatpush2.msra.mxu0 0.0
    %1404 = vmatprep.subr.mxu0 0.0
    %1405 = vmatpush2.msra.mxu0 0.0
    %1406 = vmatprep.subr.mxu0 0.0
    %1407 = vmatpush2.msra.mxu0 0.0
    %1408 = vmatprep.subr.mxu0 0.0
    %1409 = vmatpush2.msra.mxu0 0.0
    %1410 = vmatprep.subr.mxu0 0.0
    %1411 = vmatpush2.msra.mxu0 0.0
    %1412 = vmatprep.subr.mxu0 0.0
    %1413 = vmatpush2.msra.mxu0 0.0
    %1414 = vmatprep.subr.mxu0 0.0
    %1415 = vmatpush2.msra.mxu0 0.0
    %1416 = vmatprep.subr.mxu0 0.0
    %1417 = vmatpush2.msra.mxu0 0.0
    %1418 = vmatprep.subr.mxu0 0.0
    %1419 = vmatpush2.msra.mxu0 0.0
    %1420 = vmatprep.subr.mxu0 0.0
    %1421 = vmatpush2.msra.mxu0 0.0
    %1422 = vmatprep.subr.mxu0 0.0
    %1423 = vmatpush2.msra.mxu0 0.0
    %1424 = vmatprep.subr.mxu0 0.0
    %1425 = vmatpush2.msra.mxu0 0.0
    %1426 = vmatprep.mubr.f32.mxu0 0.0
    %1427 = vmatmul.mubr.f32.gmra.mxu0 %v1275
    %v1428 = vpop.f32.mrf.mxu0
    %v1429 = vadd.f32 %v1361, %v1428
    %v1430 = vpop.f32.mrf.mxu0
    %1431 = vmatprep.mubr.f32.mxu0 0.0
    %1432 = vmatmul.mubr.f32.gmra.mxu0 %v1278
    %v1433 = vpop.f32.mrf.mxu0
    %v1434 = vadd.f32 %v1361, %v1433
    %v1435 = vpop.f32.mrf.mxu0
    %1436 = vdwg.mxu0
    %v1437 = vld [vmem:[%s1 + $0x2a] sm:$0x1]
    %v1438 = vlaneseq
    %v1439 = vshrl.u32 %v1438, 7
    %v1440 = vsub.s32 0, %v1439
    %v1441 = vrot.slane %v1437, %v1440
    %1442 = vmatprep.subr.mxu0 0.0
    %1443 = vmatpush1.msra.mxu0 0.0
    %1444 = vmatprep.subr.mxu0 0.0
    %1445 = vmatpush1.msra.mxu0 0.0
    %1446 = vmatprep.subr.mxu0 0.0
    %1447 = vmatpush1.msra.mxu0 0.0
    %1448 = vmatprep.subr.mxu0 0.0
    %1449 = vmatpush1.msra.mxu0 0.0
    %1450 = vmatprep.subr.mxu0 0.0
    %1451 = vmatpush1.msra.mxu0 0.0
    %1452 = vmatprep.subr.mxu0 0.0
    %1453 = vmatpush1.msra.mxu0 0.0
    %1454 = vmatprep.subr.mxu0 0.0
    %1455 = vmatpush1.msra.mxu0 0.0
    %1456 = vmatprep.subr.mxu0 0.0
    %1457 = vmatpush1.msra.mxu0 0.0
    %1458 = vmatprep.subr.mxu0 0.0
    %1459 = vmatpush1.msra.mxu0 0.0
    %1460 = vmatprep.subr.mxu0 0.0
    %1461 = vmatpush1.msra.mxu0 0.0
    %1462 = vmatprep.subr.mxu0 0.0
    %1463 = vmatpush1.msra.mxu0 0.0
    %1464 = vmatprep.subr.mxu0 0.0
    %1465 = vmatpush1.msra.mxu0 0.0
    %1466 = vmatprep.subr.mxu0 0.0
    %1467 = vmatpush1.msra.mxu0 %v1252
    %1468 = vmatprep.subr.mxu0 0.0
    %1469 = vmatpush1.msra.mxu0 %v1251
    %1470 = vmatprep.subr.mxu0 0.0
    %1471 = vmatpush1.msra.mxu0 %v1250
    %1472 = vmatprep.subr.mxu0 0.0
    %1473 = vmatpush1.msra.mxu0 %v1249
    %1474 = vmatprep.subr.mxu0 0.0
    %1475 = vmatpush2.msra.mxu0 0.0
    %1476 = vmatprep.subr.mxu0 0.0
    %1477 = vmatpush2.msra.mxu0 0.0
    %1478 = vmatprep.subr.mxu0 0.0
    %1479 = vmatpush2.msra.mxu0 0.0
    %1480 = vmatprep.subr.mxu0 0.0
    %1481 = vmatpush2.msra.mxu0 0.0
    %1482 = vmatprep.subr.mxu0 0.0
    %1483 = vmatpush2.msra.mxu0 0.0
    %1484 = vmatprep.subr.mxu0 0.0
    %1485 = vmatpush2.msra.mxu0 0.0
    %1486 = vmatprep.subr.mxu0 0.0
    %1487 = vmatpush2.msra.mxu0 0.0
    %1488 = vmatprep.subr.mxu0 0.0
    %1489 = vmatpush2.msra.mxu0 0.0
    %1490 = vmatprep.subr.mxu0 0.0
    %1491 = vmatpush2.msra.mxu0 0.0
    %1492 = vmatprep.subr.mxu0 0.0
    %1493 = vmatpush2.msra.mxu0 0.0
    %1494 = vmatprep.subr.mxu0 0.0
    %1495 = vmatpush2.msra.mxu0 0.0
    %1496 = vmatprep.subr.mxu0 0.0
    %1497 = vmatpush2.msra.mxu0 0.0
    %1498 = vmatprep.subr.mxu0 0.0
    %1499 = vmatpush2.msra.mxu0 0.0
    %1500 = vmatprep.subr.mxu0 0.0
    %1501 = vmatpush2.msra.mxu0 0.0
    %1502 = vmatprep.subr.mxu0 0.0
    %1503 = vmatpush2.msra.mxu0 0.0
    %1504 = vmatprep.subr.mxu0 0.0
    %1505 = vmatpush2.msra.mxu0 0.0
    %1506 = vmatprep.mubr.f32.mxu0 0.0
    %1507 = vmatmul.mubr.f32.gmra.mxu0 %v1275
    %v1508 = vpop.f32.mrf.mxu0
    %v1509 = vadd.f32 %v1441, %v1508
    %v1510 = vpop.f32.mrf.mxu0
    %1511 = vmatprep.mubr.f32.mxu0 0.0
    %1512 = vmatmul.mubr.f32.gmra.mxu0 %v1278
    %v1513 = vpop.f32.mrf.mxu0
    %v1514 = vadd.f32 %v1441, %v1513
    %v1515 = vpop.f32.mrf.mxu0
    %1516 = vdwg.mxu0
    %v1517 = vmul.f32 %v1355, %v207
    %v1518 = vmul.f32 %v1356, %v207
    %v1520 = vsel %vm130, %v1517, 0
    %v1523 = vsel %vm130, %v1518, 0
    %v1526 = vsel %vm130, %v1429, 0
    %v1529 = vsel %vm130, %v1434, 0
    %1531 = vmatprep.subr.mxu0 0.0
    %1532 = vmatpush1.xpose.msra.mxu0 0.0
    %1533 = vmatprep.subr.mxu0 0.0
    %1534 = vmatpush1.xpose.msra.mxu0 0.0
    %1535 = vmatprep.subr.mxu0 0.0
    %1536 = vmatpush1.xpose.msra.mxu0 0.0
    %1537 = vmatprep.subr.mxu0 0.0
    %1538 = vmatpush1.xpose.msra.mxu0 0.0
    %1539 = vmatprep.subr.mxu0 0.0
    %1540 = vmatpush1.xpose.msra.mxu0 0.0
    %1541 = vmatprep.subr.mxu0 0.0
    %1542 = vmatpush1.xpose.msra.mxu0 0.0
    %1543 = vmatprep.subr.mxu0 0.0
    %1544 = vmatpush1.xpose.msra.mxu0 0.0
    %1545 = vmatprep.subr.mxu0 0.0
    %1546 = vmatpush1.xpose.msra.mxu0 0.0
    %1547 = vmatprep.subr.mxu0 0.0
    %1548 = vmatpush1.xpose.msra.mxu0 0.0
    %1549 = vmatprep.subr.mxu0 0.0
    %1550 = vmatpush1.xpose.msra.mxu0 0.0
    %1551 = vmatprep.subr.mxu0 0.0
    %1552 = vmatpush1.xpose.msra.mxu0 0.0
    %1553 = vmatprep.subr.mxu0 0.0
    %1554 = vmatpush1.xpose.msra.mxu0 0.0
    %1555 = vmatprep.subr.mxu0 0.0
    %1556 = vmatpush1.xpose.msra.mxu0 0.0
    %1557 = vmatprep.subr.mxu0 0.0
    %1558 = vmatpush1.xpose.msra.mxu0 0.0
    %1559 = vmatprep.subr.mxu0 0.0
    %1560 = vmatpush1.xpose.msra.mxu0 %v1529
    %1561 = vmatprep.subr.mxu0 0.0
    %1562 = vmatpush1.xpose.msra.mxu0 %v1526
    %1563 = vmatprep.subr.mxu0 0.0
    %1564 = vmatpush2.xpose.msra.mxu0 0.0
    %1565 = vmatprep.subr.mxu0 0.0
    %1566 = vmatpush2.xpose.msra.mxu0 0.0
    %1567 = vmatprep.subr.mxu0 0.0
    %1568 = vmatpush2.xpose.msra.mxu0 0.0
    %1569 = vmatprep.subr.mxu0 0.0
    %1570 = vmatpush2.xpose.msra.mxu0 0.0
    %1571 = vmatprep.subr.mxu0 0.0
    %1572 = vmatpush2.xpose.msra.mxu0 0.0
    %1573 = vmatprep.subr.mxu0 0.0
    %1574 = vmatpush2.xpose.msra.mxu0 0.0
    %1575 = vmatprep.subr.mxu0 0.0
    %1576 = vmatpush2.xpose.msra.mxu0 0.0
    %1577 = vmatprep.subr.mxu0 0.0
    %1578 = vmatpush2.xpose.msra.mxu0 0.0
    %1579 = vmatprep.subr.mxu0 0.0
    %1580 = vmatpush2.xpose.msra.mxu0 0.0
    %1581 = vmatprep.subr.mxu0 0.0
    %1582 = vmatpush2.xpose.msra.mxu0 0.0
    %1583 = vmatprep.subr.mxu0 0.0
    %1584 = vmatpush2.xpose.msra.mxu0 0.0
    %1585 = vmatprep.subr.mxu0 0.0
    %1586 = vmatpush2.xpose.msra.mxu0 0.0
    %1587 = vmatprep.subr.mxu0 0.0
    %1588 = vmatpush2.xpose.msra.mxu0 0.0
    %1589 = vmatprep.subr.mxu0 0.0
    %1590 = vmatpush2.xpose.msra.mxu0 0.0
    %1591 = vmatprep.subr.mxu0 0.0
    %1592 = vmatpush2.xpose.msra.mxu0 0.0
    %1593 = vmatprep.subr.mxu0 0.0
    %1594 = vmatpush2.xpose.msra.mxu0 0.0
    %1595 = vmatprep.mubr.f32.mxu0 0.0
    %1596 = vmatmul.mubr.f32.gmra.mxu0 %v1520
    %v1597 = vpop.f32.mrf.mxu0
    %v1598 = vadd.f32 %v203, %v1597
    %v1599 = vpop.f32.mrf.mxu0
    %1600 = vmatprep.mubr.f32.mxu0 0.0
    %1601 = vmatmul.mubr.f32.gmra.mxu0 %v1523
    %v1602 = vpop.f32.mrf.mxu0
    %v1603 = vadd.f32 %v204, %v1602
    %v1604 = vpop.f32.mrf.mxu0
    %1605 = vdwg.mxu0
    %v1606 = vsel %vm582, %v1598, -inf
    %1607 = vmax.xlane.f32.xlu0 %v1606
    %v1608 = vpop.xlane.xlu0 %1607
    %v1609 = vsel %vm582, %v1603, -inf
    %1610 = vmax.xlane.f32.xlu0 %v1609
    %v1611 = vpop.xlane.xlu0 %1610
    %v1612 = vsub.f32 %v1598, %v1608
    %v1613 = vsub.f32 %v1603, %v1611
    %v1614 = vmul.f32 %v1612, 1.442695
    %v1615 = vpow.pop %v1614
    %v1616 = vmul.f32 %v1613, 1.442695
    %v1617 = vpow.pop %v1616
    %v1618 = vsel %vm582, %v1615, 0.0
    %1619 = vadd.xlane.f32.xlu0 %v1618
    %v1620 = vpop.xlane.xlu0 %1619
    %v1621 = vsel %vm582, %v1617, 0.0
    %1622 = vadd.xlane.f32.xlu0 %v1621
    %v1623 = vpop.xlane.xlu0 %1622
    %v1624 = vrcp.pop %v1620
    %v1625 = vmul.f32 %v1615, %v1624
    %v1626 = vrcp.pop %v1623
    %v1627 = vmul.f32 %v1617, %v1626
    %v1629 = vsel %vm582, %v1625, 0
    %v1632 = vsel %vm582, %v1627, 0
    %1634 = vmatprep.subr.mxu0 0.0
    %1635 = vmatpush1.msra.mxu0 0.0
    %1636 = vmatprep.subr.mxu0 0.0
    %1637 = vmatpush1.msra.mxu0 0.0
    %1638 = vmatprep.subr.mxu0 0.0
    %1639 = vmatpush1.msra.mxu0 0.0
    %1640 = vmatprep.subr.mxu0 0.0
    %1641 = vmatpush1.msra.mxu0 0.0
    %1642 = vmatprep.subr.mxu0 0.0
    %1643 = vmatpush1.msra.mxu0 0.0
    %1644 = vmatprep.subr.mxu0 0.0
    %1645 = vmatpush1.msra.mxu0 0.0
    %1646 = vmatprep.subr.mxu0 0.0
    %1647 = vmatpush1.msra.mxu0 0.0
    %1648 = vmatprep.subr.mxu0 0.0
    %1649 = vmatpush1.msra.mxu0 0.0
    %1650 = vmatprep.subr.mxu0 0.0
    %1651 = vmatpush1.msra.mxu0 0.0
    %1652 = vmatprep.subr.mxu0 0.0
    %1653 = vmatpush1.msra.mxu0 0.0
    %1654 = vmatprep.subr.mxu0 0.0
    %1655 = vmatpush1.msra.mxu0 0.0
    %1656 = vmatprep.subr.mxu0 0.0
    %1657 = vmatpush1.msra.mxu0 0.0
    %1658 = vmatprep.subr.mxu0 0.0
    %1659 = vmatpush1.msra.mxu0 0.0
    %1660 = vmatprep.subr.mxu0 0.0
    %1661 = vmatpush1.msra.mxu0 0.0
    %1662 = vmatprep.subr.mxu0 0.0
    %1663 = vmatpush1.msra.mxu0 %v1514
    %1664 = vmatprep.subr.mxu0 0.0
    %1665 = vmatpush1.msra.mxu0 %v1509
    %1666 = vmatprep.subr.mxu0 0.0
    %1667 = vmatpush2.msra.mxu0 0.0
    %1668 = vmatprep.subr.mxu0 0.0
    %1669 = vmatpush2.msra.mxu0 0.0
    %1670 = vmatprep.subr.mxu0 0.0
    %1671 = vmatpush2.msra.mxu0 0.0
    %1672 = vmatprep.subr.mxu0 0.0
    %1673 = vmatpush2.msra.mxu0 0.0
    %1674 = vmatprep.subr.mxu0 0.0
    %1675 = vmatpush2.msra.mxu0 0.0
    %1676 = vmatprep.subr.mxu0 0.0
    %1677 = vmatpush2.msra.mxu0 0.0
    %1678 = vmatprep.subr.mxu0 0.0
    %1679 = vmatpush2.msra.mxu0 0.0
    %1680 = vmatprep.subr.mxu0 0.0
    %1681 = vmatpush2.msra.mxu0 0.0
    %1682 = vmatprep.subr.mxu0 0.0
    %1683 = vmatpush2.msra.mxu0 0.0
    %1684 = vmatprep.subr.mxu0 0.0
    %1685 = vmatpush2.msra.mxu0 0.0
    %1686 = vmatprep.subr.mxu0 0.0
    %1687 = vmatpush2.msra.mxu0 0.0
    %1688 = vmatprep.subr.mxu0 0.0
    %1689 = vmatpush2.msra.mxu0 0.0
    %1690 = vmatprep.subr.mxu0 0.0
    %1691 = vmatpush2.msra.mxu0 0.0
    %1692 = vmatprep.subr.mxu0 0.0
    %1693 = vmatpush2.msra.mxu0 0.0
    %1694 = vmatprep.subr.mxu0 0.0
    %1695 = vmatpush2.msra.mxu0 0.0
    %1696 = vmatprep.subr.mxu0 0.0
    %1697 = vmatpush2.msra.mxu0 0.0
    %1698 = vmatprep.mubr.f32.mxu0 0.0
    %1699 = vmatmul.mubr.f32.gmra.mxu0 %v1629
    %v1700 = vpop.f32.mrf.mxu0
    %v1701 = vadd.f32 0.0, %v1700
    %v1702 = vpop.f32.mrf.mxu0
    %1703 = vmatprep.mubr.f32.mxu0 0.0
    %1704 = vmatmul.mubr.f32.gmra.mxu0 %v1632
    %v1705 = vpop.f32.mrf.mxu0
    %v1706 = vadd.f32 0.0, %v1705
    %v1707 = vpop.f32.mrf.mxu0
    %1708 = vdwg.mxu0
    %v1709 = vmul.f32 %v1701, %v207
    %v1710 = vmul.f32 %v1706, %v207
    %v1711 = vadd.f32 %v1709, 0.0
    %v1712 = vadd.f32 %v1710, 0.0
    %v1713 = vmul.f32 %v1355, %v212
    %v1714 = vmul.f32 %v1356, %v212
    %v1716 = vsel %vm130, %v1713, 0
    %v1719 = vsel %vm130, %v1714, 0
    %1721 = vmatprep.subr.mxu0 0.0
    %1722 = vmatpush1.xpose.msra.mxu0 0.0
    %1723 = vmatprep.subr.mxu0 0.0
    %1724 = vmatpush1.xpose.msra.mxu0 0.0
    %1725 = vmatprep.subr.mxu0 0.0
    %1726 = vmatpush1.xpose.msra.mxu0 0.0
    %1727 = vmatprep.subr.mxu0 0.0
    %1728 = vmatpush1.xpose.msra.mxu0 0.0
    %1729 = vmatprep.subr.mxu0 0.0
    %1730 = vmatpush1.xpose.msra.mxu0 0.0
    %1731 = vmatprep.subr.mxu0 0.0
    %1732 = vmatpush1.xpose.msra.mxu0 0.0
    %1733 = vmatprep.subr.mxu0 0.0
    %1734 = vmatpush1.xpose.msra.mxu0 0.0
    %1735 = vmatprep.subr.mxu0 0.0
    %1736 = vmatpush1.xpose.msra.mxu0 0.0
    %1737 = vmatprep.subr.mxu0 0.0
    %1738 = vmatpush1.xpose.msra.mxu0 0.0
    %1739 = vmatprep.subr.mxu0 0.0
    %1740 = vmatpush1.xpose.msra.mxu0 0.0
    %1741 = vmatprep.subr.mxu0 0.0
    %1742 = vmatpush1.xpose.msra.mxu0 0.0
    %1743 = vmatprep.subr.mxu0 0.0
    %1744 = vmatpush1.xpose.msra.mxu0 0.0
    %1745 = vmatprep.subr.mxu0 0.0
    %1746 = vmatpush1.xpose.msra.mxu0 0.0
    %1747 = vmatprep.subr.mxu0 0.0
    %1748 = vmatpush1.xpose.msra.mxu0 0.0
    %1749 = vmatprep.subr.mxu0 0.0
    %1750 = vmatpush1.xpose.msra.mxu0 %v1529
    %1751 = vmatprep.subr.mxu0 0.0
    %1752 = vmatpush1.xpose.msra.mxu0 %v1526
    %1753 = vmatprep.subr.mxu0 0.0
    %1754 = vmatpush2.xpose.msra.mxu0 0.0
    %1755 = vmatprep.subr.mxu0 0.0
    %1756 = vmatpush2.xpose.msra.mxu0 0.0
    %1757 = vmatprep.subr.mxu0 0.0
    %1758 = vmatpush2.xpose.msra.mxu0 0.0
    %1759 = vmatprep.subr.mxu0 0.0
    %1760 = vmatpush2.xpose.msra.mxu0 0.0
    %1761 = vmatprep.subr.mxu0 0.0
    %1762 = vmatpush2.xpose.msra.mxu0 0.0
    %1763 = vmatprep.subr.mxu0 0.0
    %1764 = vmatpush2.xpose.msra.mxu0 0.0
    %1765 = vmatprep.subr.mxu0 0.0
    %1766 = vmatpush2.xpose.msra.mxu0 0.0
    %1767 = vmatprep.subr.mxu0 0.0
    %1768 = vmatpush2.xpose.msra.mxu0 0.0
    %1769 = vmatprep.subr.mxu0 0.0
    %1770 = vmatpush2.xpose.msra.mxu0 0.0
    %1771 = vmatprep.subr.mxu0 0.0
    %1772 = vmatpush2.xpose.msra.mxu0 0.0
    %1773 = vmatprep.subr.mxu0 0.0
    %1774 = vmatpush2.xpose.msra.mxu0 0.0
    %1775 = vmatprep.subr.mxu0 0.0
    %1776 = vmatpush2.xpose.msra.mxu0 0.0
    %1777 = vmatprep.subr.mxu0 0.0
    %1778 = vmatpush2.xpose.msra.mxu0 0.0
    %1779 = vmatprep.subr.mxu0 0.0
    %1780 = vmatpush2.xpose.msra.mxu0 0.0
    %1781 = vmatprep.subr.mxu0 0.0
    %1782 = vmatpush2.xpose.msra.mxu0 0.0
    %1783 = vmatprep.subr.mxu0 0.0
    %1784 = vmatpush2.xpose.msra.mxu0 0.0
    %1785 = vmatprep.mubr.f32.mxu0 0.0
    %1786 = vmatmul.mubr.f32.gmra.mxu0 %v1716
    %v1787 = vpop.f32.mrf.mxu0
    %v1788 = vadd.f32 %v203, %v1787
    %v1789 = vpop.f32.mrf.mxu0
    %1790 = vmatprep.mubr.f32.mxu0 0.0
    %1791 = vmatmul.mubr.f32.gmra.mxu0 %v1719
    %v1792 = vpop.f32.mrf.mxu0
    %v1793 = vadd.f32 %v204, %v1792
    %v1794 = vpop.f32.mrf.mxu0
    %1795 = vdwg.mxu0
    %v1796 = vsel %vm582, %v1788, -inf
    %1797 = vmax.xlane.f32.xlu0 %v1796
    %v1798 = vpop.xlane.xlu0 %1797
    %v1799 = vsel %vm582, %v1793, -inf
    %1800 = vmax.xlane.f32.xlu0 %v1799
    %v1801 = vpop.xlane.xlu0 %1800
    %v1802 = vsub.f32 %v1788, %v1798
    %v1803 = vsub.f32 %v1793, %v1801
    %v1804 = vmul.f32 %v1802, 1.442695
    %v1805 = vpow.pop %v1804
    %v1806 = vmul.f32 %v1803, 1.442695
    %v1807 = vpow.pop %v1806
    %v1808 = vsel %vm582, %v1805, 0.0
    %1809 = vadd.xlane.f32.xlu0 %v1808
    %v1810 = vpop.xlane.xlu0 %1809
    %v1811 = vsel %vm582, %v1807, 0.0
    %1812 = vadd.xlane.f32.xlu0 %v1811
    %v1813 = vpop.xlane.xlu0 %1812
    %v1814 = vrcp.pop %v1810
    %v1815 = vmul.f32 %v1805, %v1814
    %v1816 = vrcp.pop %v1813
    %v1817 = vmul.f32 %v1807, %v1816
    %v1819 = vsel %vm582, %v1815, 0
    %v1822 = vsel %vm582, %v1817, 0
    %1824 = vmatprep.subr.mxu0 0.0
    %1825 = vmatpush1.msra.mxu0 0.0
    %1826 = vmatprep.subr.mxu0 0.0
    %1827 = vmatpush1.msra.mxu0 0.0
    %1828 = vmatprep.subr.mxu0 0.0
    %1829 = vmatpush1.msra.mxu0 0.0
    %1830 = vmatprep.subr.mxu0 0.0
    %1831 = vmatpush1.msra.mxu0 0.0
    %1832 = vmatprep.subr.mxu0 0.0
    %1833 = vmatpush1.msra.mxu0 0.0
    %1834 = vmatprep.subr.mxu0 0.0
    %1835 = vmatpush1.msra.mxu0 0.0
    %1836 = vmatprep.subr.mxu0 0.0
    %1837 = vmatpush1.msra.mxu0 0.0
    %1838 = vmatprep.subr.mxu0 0.0
    %1839 = vmatpush1.msra.mxu0 0.0
    %1840 = vmatprep.subr.mxu0 0.0
    %1841 = vmatpush1.msra.mxu0 0.0
    %1842 = vmatprep.subr.mxu0 0.0
    %1843 = vmatpush1.msra.mxu0 0.0
    %1844 = vmatprep.subr.mxu0 0.0
    %1845 = vmatpush1.msra.mxu0 0.0
    %1846 = vmatprep.subr.mxu0 0.0
    %1847 = vmatpush1.msra.mxu0 0.0
    %1848 = vmatprep.subr.mxu0 0.0
    %1849 = vmatpush1.msra.mxu0 0.0
    %1850 = vmatprep.subr.mxu0 0.0
    %1851 = vmatpush1.msra.mxu0 0.0
    %1852 = vmatprep.subr.mxu0 0.0
    %1853 = vmatpush1.msra.mxu0 %v1514
    %1854 = vmatprep.subr.mxu0 0.0
    %1855 = vmatpush1.msra.mxu0 %v1509
    %1856 = vmatprep.subr.mxu0 0.0
    %1857 = vmatpush2.msra.mxu0 0.0
    %1858 = vmatprep.subr.mxu0 0.0
    %1859 = vmatpush2.msra.mxu0 0.0
    %1860 = vmatprep.subr.mxu0 0.0
    %1861 = vmatpush2.msra.mxu0 0.0
    %1862 = vmatprep.subr.mxu0 0.0
    %1863 = vmatpush2.msra.mxu0 0.0
    %1864 = vmatprep.subr.mxu0 0.0
    %1865 = vmatpush2.msra.mxu0 0.0
    %1866 = vmatprep.subr.mxu0 0.0
    %1867 = vmatpush2.msra.mxu0 0.0
    %1868 = vmatprep.subr.mxu0 0.0
    %1869 = vmatpush2.msra.mxu0 0.0
    %1870 = vmatprep.subr.mxu0 0.0
    %1871 = vmatpush2.msra.mxu0 0.0
    %1872 = vmatprep.subr.mxu0 0.0
    %1873 = vmatpush2.msra.mxu0 0.0
    %1874 = vmatprep.subr.mxu0 0.0
    %1875 = vmatpush2.msra.mxu0 0.0
    %1876 = vmatprep.subr.mxu0 0.0
    %1877 = vmatpush2.msra.mxu0 0.0
    %1878 = vmatprep.subr.mxu0 0.0
    %1879 = vmatpush2.msra.mxu0 0.0
    %1880 = vmatprep.subr.mxu0 0.0
    %1881 = vmatpush2.msra.mxu0 0.0
    %1882 = vmatprep.subr.mxu0 0.0
    %1883 = vmatpush2.msra.mxu0 0.0
    %1884 = vmatprep.subr.mxu0 0.0
    %1885 = vmatpush2.msra.mxu0 0.0
    %1886 = vmatprep.subr.mxu0 0.0
    %1887 = vmatpush2.msra.mxu0 0.0
    %1888 = vmatprep.mubr.f32.mxu0 0.0
    %1889 = vmatmul.mubr.f32.gmra.mxu0 %v1819
    %v1890 = vpop.f32.mrf.mxu0
    %v1891 = vadd.f32 0.0, %v1890
    %v1892 = vpop.f32.mrf.mxu0
    %1893 = vmatprep.mubr.f32.mxu0 0.0
    %1894 = vmatmul.mubr.f32.gmra.mxu0 %v1822
    %v1895 = vpop.f32.mrf.mxu0
    %v1896 = vadd.f32 0.0, %v1895
    %v1897 = vpop.f32.mrf.mxu0
    %1898 = vdwg.mxu0
    %v1899 = vmul.f32 %v1891, %v212
    %v1900 = vmul.f32 %v1896, %v212
    %v1901 = vadd.f32 %v1711, %v1899
    %v1902 = vadd.f32 %v1712, %v1900
    %v1903 = vld [vmem:[%s1 + $0x2b] sm:$0x1]
    %v1904 = vlaneseq
    %v1905 = vshrl.u32 %v1904, 7
    %v1906 = vsub.s32 0, %v1905
    %v1907 = vrot.slane %v1903, %v1906
    %v1909 = vsel %vm130, %v1901, 0
    %v1912 = vsel %vm130, %v1902, 0
    %1914 = vmatprep.subr.mxu0 0.0
    %1915 = vmatpush1.msra.mxu0 0.0
    %1916 = vmatprep.subr.mxu0 0.0
    %1917 = vmatpush1.msra.mxu0 0.0
    %1918 = vmatprep.subr.mxu0 0.0
    %1919 = vmatpush1.msra.mxu0 0.0
    %1920 = vmatprep.subr.mxu0 0.0
    %1921 = vmatpush1.msra.mxu0 0.0
    %1922 = vmatprep.subr.mxu0 0.0
    %1923 = vmatpush1.msra.mxu0 0.0
    %1924 = vmatprep.subr.mxu0 0.0
    %1925 = vmatpush1.msra.mxu0 0.0
    %1926 = vmatprep.subr.mxu0 0.0
    %1927 = vmatpush1.msra.mxu0 0.0
    %1928 = vmatprep.subr.mxu0 0.0
    %1929 = vmatpush1.msra.mxu0 0.0
    %1930 = vmatprep.subr.mxu0 0.0
    %1931 = vmatpush1.msra.mxu0 0.0
    %1932 = vmatprep.subr.mxu0 0.0
    %1933 = vmatpush1.msra.mxu0 0.0
    %1934 = vmatprep.subr.mxu0 0.0
    %1935 = vmatpush1.msra.mxu0 0.0
    %1936 = vmatprep.subr.mxu0 0.0
    %1937 = vmatpush1.msra.mxu0 0.0
    %1938 = vmatprep.subr.mxu0 0.0
    %1939 = vmatpush1.msra.mxu0 %v1256
    %1940 = vmatprep.subr.mxu0 0.0
    %1941 = vmatpush1.msra.mxu0 %v1255
    %1942 = vmatprep.subr.mxu0 0.0
    %1943 = vmatpush1.msra.mxu0 %v1254
    %1944 = vmatprep.subr.mxu0 0.0
    %1945 = vmatpush1.msra.mxu0 %v1253
    %1946 = vmatprep.subr.mxu0 0.0
    %1947 = vmatpush2.msra.mxu0 0.0
    %1948 = vmatprep.subr.mxu0 0.0
    %1949 = vmatpush2.msra.mxu0 0.0
    %1950 = vmatprep.subr.mxu0 0.0
    %1951 = vmatpush2.msra.mxu0 0.0
    %1952 = vmatprep.subr.mxu0 0.0
    %1953 = vmatpush2.msra.mxu0 0.0
    %1954 = vmatprep.subr.mxu0 0.0
    %1955 = vmatpush2.msra.mxu0 0.0
    %1956 = vmatprep.subr.mxu0 0.0
    %1957 = vmatpush2.msra.mxu0 0.0
    %1958 = vmatprep.subr.mxu0 0.0
    %1959 = vmatpush2.msra.mxu0 0.0
    %1960 = vmatprep.subr.mxu0 0.0
    %1961 = vmatpush2.msra.mxu0 0.0
    %1962 = vmatprep.subr.mxu0 0.0
    %1963 = vmatpush2.msra.mxu0 0.0
    %1964 = vmatprep.subr.mxu0 0.0
    %1965 = vmatpush2.msra.mxu0 0.0
    %1966 = vmatprep.subr.mxu0 0.0
    %1967 = vmatpush2.msra.mxu0 0.0
    %1968 = vmatprep.subr.mxu0 0.0
    %1969 = vmatpush2.msra.mxu0 0.0
    %1970 = vmatprep.subr.mxu0 0.0
    %1971 = vmatpush2.msra.mxu0 0.0
    %1972 = vmatprep.subr.mxu0 0.0
    %1973 = vmatpush2.msra.mxu0 0.0
    %1974 = vmatprep.subr.mxu0 0.0
    %1975 = vmatpush2.msra.mxu0 0.0
    %1976 = vmatprep.subr.mxu0 0.0
    %1977 = vmatpush2.msra.mxu0 0.0
    %1978 = vmatprep.mubr.f32.mxu0 0.0
    %1979 = vmatmul.mubr.f32.gmra.mxu0 %v1909
    %v1980 = vpop.f32.mrf.mxu0
    %v1981 = vadd.f32 %v1907, %v1980
    %v1982 = vpop.f32.mrf.mxu0
    %1983 = vmatprep.mubr.f32.mxu0 0.0
    %1984 = vmatmul.mubr.f32.gmra.mxu0 %v1912
    %v1985 = vpop.f32.mrf.mxu0
    %v1986 = vadd.f32 %v1907, %v1985
    %v1987 = vpop.f32.mrf.mxu0
    %1988 = vdwg.mxu0
    %v1989 = vadd.f32 %v1239, %v1981
    %v1990 = vadd.f32 %v1240, %v1986
    %v1991 = vld [vmem:[%s1 + $0x2e] sm:$0x1]
    %v1992 = vld [vmem:[%s1 + $0x2f] sm:$0x1]
    %v1993 = vsel %vm130, %v1989, 0.0
    %1994 = vadd.xlane.f32.xlu0 %v1993
    %v1995 = vpop.xlane.xlu0 %1994
    %v1996 = vsel %vm130, %v1990, 0.0
    %1997 = vadd.xlane.f32.xlu0 %v1996
    %v1998 = vpop.xlane.xlu0 %1997
    %v1999 = vmul.f32 %v1995, %v137
    %v2000 = vmul.f32 %v1998, %v137
    %v2001 = vsub.f32 %v1989, %v1999
    %v2002 = vsub.f32 %v1990, %v2000
    %v2003 = vmul.f32 %v2001, %v2001
    %v2004 = vmul.f32 %v2002, %v2002
    %v2005 = vsel %vm130, %v2003, 0.0
    %2006 = vadd.xlane.f32.xlu0 %v2005
    %v2007 = vpop.xlane.xlu0 %2006
    %v2008 = vsel %vm130, %v2004, 0.0
    %2009 = vadd.xlane.f32.xlu0 %v2008
    %v2010 = vpop.xlane.xlu0 %2009
    %v2011 = vmul.f32 %v2007, %v137
    %v2012 = vmul.f32 %v2010, %v137
    %v2013 = vadd.f32 %v2011, 1e-12
    %v2014 = vadd.f32 %v2012, 1e-12
    %v2015 = vrsqrt.pop %v2013
    %v2016 = vrsqrt.pop %v2014
    %v2017 = vmul.f32 %v2001, %v2015
    %v2018 = vmul.f32 %v2002, %v2016
    %v2019 = vlaneseq
    %v2020 = vshrl.u32 %v2019, 7
    %v2021 = vsub.s32 0, %v2020
    %v2022 = vrot.slane %v1991, %v2021
    %v2023 = vmul.f32 %v2017, %v2022
    %v2024 = vmul.f32 %v2018, %v2022
    %v2025 = vlaneseq
    %v2026 = vshrl.u32 %v2025, 7
    %v2027 = vsub.s32 0, %v2026
    %v2028 = vrot.slane %v1992, %v2027
    %v2029 = vadd.f32 %v2023, %v2028
    %v2030 = vadd.f32 %v2024, %v2028
    %v2031 = vld [vmem:[%s1 + $0x2c] sm:$0x1]
    %v2032 = vlaneseq
    %v2033 = vshrl.u32 %v2032, 7
    %v2034 = vsub.s32 0, %v2033
    %v2035 = vrot.slane %v2031, %v2034
    %v2037 = vsel %vm130, %v2029, 0
    %v2040 = vsel %vm130, %v2030, 0
    %2042 = vmatprep.subr.mxu0 0.0
    %2043 = vmatpush1.msra.mxu0 0.0
    %2044 = vmatprep.subr.mxu0 0.0
    %2045 = vmatpush1.msra.mxu0 0.0
    %2046 = vmatprep.subr.mxu0 0.0
    %2047 = vmatpush1.msra.mxu0 0.0
    %2048 = vmatprep.subr.mxu0 0.0
    %2049 = vmatpush1.msra.mxu0 0.0
    %2050 = vmatprep.subr.mxu0 0.0
    %2051 = vmatpush1.msra.mxu0 0.0
    %2052 = vmatprep.subr.mxu0 0.0
    %2053 = vmatpush1.msra.mxu0 0.0
    %2054 = vmatprep.subr.mxu0 0.0
    %2055 = vmatpush1.msra.mxu0 0.0
    %2056 = vmatprep.subr.mxu0 0.0
    %2057 = vmatpush1.msra.mxu0 0.0
    %2058 = vmatprep.subr.mxu0 0.0
    %2059 = vmatpush1.msra.mxu0 0.0
    %2060 = vmatprep.subr.mxu0 0.0
    %2061 = vmatpush1.msra.mxu0 0.0
    %2062 = vmatprep.subr.mxu0 0.0
    %2063 = vmatpush1.msra.mxu0 0.0
    %2064 = vmatprep.subr.mxu0 0.0
    %2065 = vmatpush1.msra.mxu0 0.0
    %2066 = vmatprep.subr.mxu0 0.0
    %2067 = vmatpush1.msra.mxu0 %v1260
    %2068 = vmatprep.subr.mxu0 0.0
    %2069 = vmatpush1.msra.mxu0 %v1259
    %2070 = vmatprep.subr.mxu0 0.0
    %2071 = vmatpush1.msra.mxu0 %v1258
    %2072 = vmatprep.subr.mxu0 0.0
    %2073 = vmatpush1.msra.mxu0 %v1257
    %2074 = vmatprep.subr.mxu0 0.0
    %2075 = vmatpush2.msra.mxu0 0.0
    %2076 = vmatprep.subr.mxu0 0.0
    %2077 = vmatpush2.msra.mxu0 0.0
    %2078 = vmatprep.subr.mxu0 0.0
    %2079 = vmatpush2.msra.mxu0 0.0
    %2080 = vmatprep.subr.mxu0 0.0
    %2081 = vmatpush2.msra.mxu0 0.0
    %2082 = vmatprep.subr.mxu0 0.0
    %2083 = vmatpush2.msra.mxu0 0.0
    %2084 = vmatprep.subr.mxu0 0.0
    %2085 = vmatpush2.msra.mxu0 0.0
    %2086 = vmatprep.subr.mxu0 0.0
    %2087 = vmatpush2.msra.mxu0 0.0
    %2088 = vmatprep.subr.mxu0 0.0
    %2089 = vmatpush2.msra.mxu0 0.0
    %2090 = vmatprep.subr.mxu0 0.0
    %2091 = vmatpush2.msra.mxu0 0.0
    %2092 = vmatprep.subr.mxu0 0.0
    %2093 = vmatpush2.msra.mxu0 0.0
    %2094 = vmatprep.subr.mxu0 0.0
    %2095 = vmatpush2.msra.mxu0 0.0
    %2096 = vmatprep.subr.mxu0 0.0
    %2097 = vmatpush2.msra.mxu0 0.0
    %2098 = vmatprep.subr.mxu0 0.0
    %2099 = vmatpush2.msra.mxu0 0.0
    %2100 = vmatprep.subr.mxu0 0.0
    %2101 = vmatpush2.msra.mxu0 0.0
    %2102 = vmatprep.subr.mxu0 0.0
    %2103 = vmatpush2.msra.mxu0 0.0
    %2104 = vmatprep.subr.mxu0 0.0
    %2105 = vmatpush2.msra.mxu0 0.0
    %2106 = vmatprep.mubr.f32.mxu0 0.0
    %2107 = vmatmul.mubr.f32.gmra.mxu0 %v2037
    %v2108 = vpop.f32.mrf.mxu0
    %v2109 = vadd.f32 %v2035, %v2108
    %v2110 = vpop.f32.mrf.mxu0
    %2111 = vmatprep.mubr.f32.mxu0 0.0
    %2112 = vmatmul.mubr.f32.gmra.mxu0 %v2040
    %v2113 = vpop.f32.mrf.mxu0
    %v2114 = vadd.f32 %v2035, %v2113
    %v2115 = vpop.f32.mrf.mxu0
    %2116 = vdwg.mxu0
    %v2117 = vmul.f32 %v2109, 0.5
    %v2118 = vmul.f32 %v2114, 0.5
    %v2119 = vmul.f32 %v2109, 0.044715
    %v2120 = vmul.f32 %v2114, 0.044715
    %v2121 = vmul.f32 %v2119, %v2109
    %v2122 = vmul.f32 %v2120, %v2114
    %v2123 = vmul.f32 %v2121, %v2109
    %v2124 = vmul.f32 %v2122, %v2114
    %v2125 = vadd.f32 %v2109, %v2123
    %v2126 = vadd.f32 %v2114, %v2124
    %v2127 = vmul.f32 %v2125, 0.7978846
    %v2128 = vmul.f32 %v2126, 0.7978846
    %v2129 = vtanh.pop %v2127
    %v2130 = vtanh.pop %v2128
    %v2131 = vadd.f32 %v2129, 1.0
    %v2132 = vadd.f32 %v2130, 1.0
    %v2133 = vmul.f32 %v2117, %v2131
    %v2134 = vmul.f32 %v2118, %v2132
    %v2135 = vld [vmem:[%s1 + $0x2d] sm:$0x1]
    %v2136 = vlaneseq
    %v2137 = vshrl.u32 %v2136, 7
    %v2138 = vsub.s32 0, %v2137
    %v2139 = vrot.slane %v2135, %v2138
    %v2141 = vsel %vm1117, %v2133, 0
    %v2144 = vsel %vm1117, %v2134, 0
    %2146 = vmatprep.subr.mxu0 0.0
    %2147 = vmatpush1.msra.mxu0 0.0
    %2148 = vmatprep.subr.mxu0 0.0
    %2149 = vmatpush1.msra.mxu0 0.0
    %2150 = vmatprep.subr.mxu0 0.0
    %2151 = vmatpush1.msra.mxu0 0.0
    %2152 = vmatprep.subr.mxu0 0.0
    %2153 = vmatpush1.msra.mxu0 0.0
    %2154 = vmatprep.subr.mxu0 0.0
    %2155 = vmatpush1.msra.mxu0 0.0
    %2156 = vmatprep.subr.mxu0 0.0
    %2157 = vmatpush1.msra.mxu0 0.0
    %2158 = vmatprep.subr.mxu0 0.0
    %2159 = vmatpush1.msra.mxu0 0.0
    %2160 = vmatprep.subr.mxu0 0.0
    %2161 = vmatpush1.msra.mxu0 0.0
    %2162 = vmatprep.subr.mxu0 0.0
    %2163 = vmatpush1.msra.mxu0 %v1268
    %2164 = vmatprep.subr.mxu0 0.0
    %2165 = vmatpush1.msra.mxu0 %v1267
    %2166 = vmatprep.subr.mxu0 0.0
    %2167 = vmatpush1.msra.mxu0 %v1266
    %2168 = vmatprep.subr.mxu0 0.0
    %2169 = vmatpush1.msra.mxu0 %v1265
    %2170 = vmatprep.subr.mxu0 0.0
    %2171 = vmatpush1.msra.mxu0 %v1264
    %2172 = vmatprep.subr.mxu0 0.0
    %2173 = vmatpush1.msra.mxu0 %v1263
    %2174 = vmatprep.subr.mxu0 0.0
    %2175 = vmatpush1.msra.mxu0 %v1262
    %2176 = vmatprep.subr.mxu0 0.0
    %2177 = vmatpush1.msra.mxu0 %v1261
    %2178 = vmatprep.subr.mxu0 0.0
    %2179 = vmatpush2.msra.mxu0 0.0
    %2180 = vmatprep.subr.mxu0 0.0
    %2181 = vmatpush2.msra.mxu0 0.0
    %2182 = vmatprep.subr.mxu0 0.0
    %2183 = vmatpush2.msra.mxu0 0.0
    %2184 = vmatprep.subr.mxu0 0.0
    %2185 = vmatpush2.msra.mxu0 0.0
    %2186 = vmatprep.subr.mxu0 0.0
    %2187 = vmatpush2.msra.mxu0 0.0
    %2188 = vmatprep.subr.mxu0 0.0
    %2189 = vmatpush2.msra.mxu0 0.0
    %2190 = vmatprep.subr.mxu0 0.0
    %2191 = vmatpush2.msra.mxu0 0.0
    %2192 = vmatprep.subr.mxu0 0.0
    %2193 = vmatpush2.msra.mxu0 0.0
    %2194 = vmatprep.subr.mxu0 0.0
    %2195 = vmatpush2.msra.mxu0 0.0
    %2196 = vmatprep.subr.mxu0 0.0
    %2197 = vmatpush2.msra.mxu0 0.0
    %2198 = vmatprep.subr.mxu0 0.0
    %2199 = vmatpush2.msra.mxu0 0.0
    %2200 = vmatprep.subr.mxu0 0.0
    %2201 = vmatpush2.msra.mxu0 0.0
    %2202 = vmatprep.subr.mxu0 0.0
    %2203 = vmatpush2.msra.mxu0 0.0
    %2204 = vmatprep.subr.mxu0 0.0
    %2205 = vmatpush2.msra.mxu0 0.0
    %2206 = vmatprep.subr.mxu0 0.0
    %2207 = vmatpush2.msra.mxu0 0.0
    %2208 = vmatprep.subr.mxu0 0.0
    %2209 = vmatpush2.msra.mxu0 0.0
    %2210 = vmatprep.mubr.f32.mxu0 0.0
    %2211 = vmatmul.mubr.f32.gmra.mxu0 %v2141
    %v2212 = vpop.f32.mrf.mxu0
    %v2213 = vadd.f32 %v2139, %v2212
    %v2214 = vpop.f32.mrf.mxu0
    %2215 = vmatprep.mubr.f32.mxu0 0.0
    %2216 = vmatmul.mubr.f32.gmra.mxu0 %v2144
    %v2217 = vpop.f32.mrf.mxu0
    %v2218 = vadd.f32 %v2139, %v2217
    %v2219 = vpop.f32.mrf.mxu0
    %2220 = vdwg.mxu0
    %v2221 = vadd.f32 %v2029, %v2213
    %v2222 = vadd.f32 %v2030, %v2218
    %v2223 = vld [vmem:[%s1 + $0x30] sm:$0x1]
    %v2224 = vld [vmem:[%s1 + $0x31] sm:$0x1]
    %v2225 = vsel %vm130, %v2221, 0.0
    %2226 = vadd.xlane.f32.xlu0 %v2225
    %v2227 = vpop.xlane.xlu0 %2226
    %v2228 = vsel %vm130, %v2222, 0.0
    %2229 = vadd.xlane.f32.xlu0 %v2228
    %v2230 = vpop.xlane.xlu0 %2229
    %v2231 = vmul.f32 %v2227, %v137
    %v2232 = vmul.f32 %v2230, %v137
    %v2233 = vsub.f32 %v2221, %v2231
    %v2234 = vsub.f32 %v2222, %v2232
    %v2235 = vmul.f32 %v2233, %v2233
    %v2236 = vmul.f32 %v2234, %v2234
    %v2237 = vsel %vm130, %v2235, 0.0
    %2238 = vadd.xlane.f32.xlu0 %v2237
    %v2239 = vpop.xlane.xlu0 %2238
    %v2240 = vsel %vm130, %v2236, 0.0
    %2241 = vadd.xlane.f32.xlu0 %v2240
    %v2242 = vpop.xlane.xlu0 %2241
    %v2243 = vmul.f32 %v2239, %v137
    %v2244 = vmul.f32 %v2242, %v137
    %v2245 = vadd.f32 %v2243, 1e-12
    %v2246 = vadd.f32 %v2244, 1e-12
    %v2247 = vrsqrt.pop %v2245
    %v2248 = vrsqrt.pop %v2246
    %v2249 = vmul.f32 %v2233, %v2247
    %v2250 = vmul.f32 %v2234, %v2248
    %v2251 = vlaneseq
    %v2252 = vshrl.u32 %v2251, 7
    %v2253 = vsub.s32 0, %v2252
    %v2254 = vrot.slane %v2223, %v2253
    %v2255 = vmul.f32 %v2249, %v2254
    %v2256 = vmul.f32 %v2250, %v2254
    %v2257 = vlaneseq
    %v2258 = vshrl.u32 %v2257, 7
    %v2259 = vsub.s32 0, %v2258
    %v2260 = vrot.slane %v2224, %v2259
    %v2261 = vadd.f32 %v2255, %v2260
    %v2262 = vadd.f32 %v2256, %v2260
    %v2264 = vsel %vm582, %v216, 0
    %2266 = vmatprep.subr.mxu0 0.0
    %2267 = vmatpush1.msra.mxu0 0.0
    %2268 = vmatprep.subr.mxu0 0.0
    %2269 = vmatpush1.msra.mxu0 0.0
    %2270 = vmatprep.subr.mxu0 0.0
    %2271 = vmatpush1.msra.mxu0 0.0
    %2272 = vmatprep.subr.mxu0 0.0
    %2273 = vmatpush1.msra.mxu0 0.0
    %2274 = vmatprep.subr.mxu0 0.0
    %2275 = vmatpush1.msra.mxu0 0.0
    %2276 = vmatprep.subr.mxu0 0.0
    %2277 = vmatpush1.msra.mxu0 0.0
    %2278 = vmatprep.subr.mxu0 0.0
    %2279 = vmatpush1.msra.mxu0 0.0
    %2280 = vmatprep.subr.mxu0 0.0
    %2281 = vmatpush1.msra.mxu0 0.0
    %2282 = vmatprep.subr.mxu0 0.0
    %2283 = vmatpush1.msra.mxu0 0.0
    %2284 = vmatprep.subr.mxu0 0.0
    %2285 = vmatpush1.msra.mxu0 0.0
    %2286 = vmatprep.subr.mxu0 0.0
    %2287 = vmatpush1.msra.mxu0 0.0
    %2288 = vmatprep.subr.mxu0 0.0
    %2289 = vmatpush1.msra.mxu0 0.0
    %2290 = vmatprep.subr.mxu0 0.0
    %2291 = vmatpush1.msra.mxu0 0.0
    %2292 = vmatprep.subr.mxu0 0.0
    %2293 = vmatpush1.msra.mxu0 0.0
    %2294 = vmatprep.subr.mxu0 0.0
    %2295 = vmatpush1.msra.mxu0 %v2262
    %2296 = vmatprep.subr.mxu0 0.0
    %2297 = vmatpush1.msra.mxu0 %v2261
    %2298 = vmatprep.subr.mxu0 0.0
    %2299 = vmatpush2.msra.mxu0 0.0
    %2300 = vmatprep.subr.mxu0 0.0
    %2301 = vmatpush2.msra.mxu0 0.0
    %2302 = vmatprep.subr.mxu0 0.0
    %2303 = vmatpush2.msra.mxu0 0.0
    %2304 = vmatprep.subr.mxu0 0.0
    %2305 = vmatpush2.msra.mxu0 0.0
    %2306 = vmatprep.subr.mxu0 0.0
    %2307 = vmatpush2.msra.mxu0 0.0
    %2308 = vmatprep.subr.mxu0 0.0
    %2309 = vmatpush2.msra.mxu0 0.0
    %2310 = vmatprep.subr.mxu0 0.0
    %2311 = vmatpush2.msra.mxu0 0.0
    %2312 = vmatprep.subr.mxu0 0.0
    %2313 = vmatpush2.msra.mxu0 0.0
    %2314 = vmatprep.subr.mxu0 0.0
    %2315 = vmatpush2.msra.mxu0 0.0
    %2316 = vmatprep.subr.mxu0 0.0
    %2317 = vmatpush2.msra.mxu0 0.0
    %2318 = vmatprep.subr.mxu0 0.0
    %2319 = vmatpush2.msra.mxu0 0.0
    %2320 = vmatprep.subr.mxu0 0.0
    %2321 = vmatpush2.msra.mxu0 0.0
    %2322 = vmatprep.subr.mxu0 0.0
    %2323 = vmatpush2.msra.mxu0 0.0
    %2324 = vmatprep.subr.mxu0 0.0
    %2325 = vmatpush2.msra.mxu0 0.0
    %2326 = vmatprep.subr.mxu0 0.0
    %2327 = vmatpush2.msra.mxu0 0.0
    %2328 = vmatprep.subr.mxu0 0.0
    %2329 = vmatpush2.msra.mxu0 0.0
    %2330 = vmatprep.mubr.f32.mxu0 0.0
    %2331 = vmatmul.mubr.f32.gmra.mxu0 %v2264
    %v2332 = vpop.f32.mrf.mxu0
    %v2333 = vadd.f32 0.0, %v2332
    %v2334 = vpop.f32.mrf.mxu0
    %2335 = vdwg.mxu0
    %v2336 = vld [vmem:[%s1 + $0x268] sm:$0xff]
    %v2337 = vld [vmem:[%s1 + $0x270] sm:$0xff]
    %v2338 = vld [vmem:[%s1 + $0x278] sm:$0xff]
    %v2339 = vld [vmem:[%s1 + $0x280] sm:$0xff]
    %v2340 = vld [vmem:[%s1 + $0x38] sm:$0x1]
    %v2341 = vlaneseq
    %v2342 = vshrl.u32 %v2341, 7
    %v2343 = vsub.s32 0, %v2342
    %v2344 = vrot.slane %v2340, %v2343
    %v2346 = vsel %vm130, %v2333, 0
    %2348 = vmatprep.subr.mxu0 0.0
    %2349 = vmatpush1.msra.mxu0 0.0
    %2350 = vmatprep.subr.mxu0 0.0
    %2351 = vmatpush1.msra.mxu0 0.0
    %2352 = vmatprep.subr.mxu0 0.0
    %2353 = vmatpush1.msra.mxu0 0.0
    %2354 = vmatprep.subr.mxu0 0.0
    %2355 = vmatpush1.msra.mxu0 0.0
    %2356 = vmatprep.subr.mxu0 0.0
    %2357 = vmatpush1.msra.mxu0 0.0
    %2358 = vmatprep.subr.mxu0 0.0
    %2359 = vmatpush1.msra.mxu0 0.0
    %2360 = vmatprep.subr.mxu0 0.0
    %2361 = vmatpush1.msra.mxu0 0.0
    %2362 = vmatprep.subr.mxu0 0.0
    %2363 = vmatpush1.msra.mxu0 0.0
    %2364 = vmatprep.subr.mxu0 0.0
    %2365 = vmatpush1.msra.mxu0 0.0
    %2366 = vmatprep.subr.mxu0 0.0
    %2367 = vmatpush1.msra.mxu0 0.0
    %2368 = vmatprep.subr.mxu0 0.0
    %2369 = vmatpush1.msra.mxu0 0.0
    %2370 = vmatprep.subr.mxu0 0.0
    %2371 = vmatpush1.msra.mxu0 0.0
    %2372 = vmatprep.subr.mxu0 0.0
    %2373 = vmatpush1.msra.mxu0 %v2339
    %2374 = vmatprep.subr.mxu0 0.0
    %2375 = vmatpush1.msra.mxu0 %v2338
    %2376 = vmatprep.subr.mxu0 0.0
    %2377 = vmatpush1.msra.mxu0 %v2337
    %2378 = vmatprep.subr.mxu0 0.0
    %2379 = vmatpush1.msra.mxu0 %v2336
    %2380 = vmatprep.subr.mxu0 0.0
    %2381 = vmatpush2.msra.mxu0 0.0
    %2382 = vmatprep.subr.mxu0 0.0
    %2383 = vmatpush2.msra.mxu0 0.0
    %2384 = vmatprep.subr.mxu0 0.0
    %2385 = vmatpush2.msra.mxu0 0.0
    %2386 = vmatprep.subr.mxu0 0.0
    %2387 = vmatpush2.msra.mxu0 0.0
    %2388 = vmatprep.subr.mxu0 0.0
    %2389 = vmatpush2.msra.mxu0 0.0
    %2390 = vmatprep.subr.mxu0 0.0
    %2391 = vmatpush2.msra.mxu0 0.0
    %2392 = vmatprep.subr.mxu0 0.0
    %2393 = vmatpush2.msra.mxu0 0.0
    %2394 = vmatprep.subr.mxu0 0.0
    %2395 = vmatpush2.msra.mxu0 0.0
    %2396 = vmatprep.subr.mxu0 0.0
    %2397 = vmatpush2.msra.mxu0 0.0
    %2398 = vmatprep.subr.mxu0 0.0
    %2399 = vmatpush2.msra.mxu0 0.0
    %2400 = vmatprep.subr.mxu0 0.0
    %2401 = vmatpush2.msra.mxu0 0.0
    %2402 = vmatprep.subr.mxu0 0.0
    %2403 = vmatpush2.msra.mxu0 0.0
    %2404 = vmatprep.subr.mxu0 0.0
    %2405 = vmatpush2.msra.mxu0 0.0
    %2406 = vmatprep.subr.mxu0 0.0
    %2407 = vmatpush2.msra.mxu0 0.0
    %2408 = vmatprep.subr.mxu0 0.0
    %2409 = vmatpush2.msra.mxu0 0.0
    %2410 = vmatprep.subr.mxu0 0.0
    %2411 = vmatpush2.msra.mxu0 0.0
    %2412 = vmatprep.mubr.f32.mxu0 0.0
    %2413 = vmatmul.mubr.f32.gmra.mxu0 %v2346
    %v2414 = vpop.f32.mrf.mxu0
    %v2415 = vadd.f32 %v2344, %v2414
    %v2416 = vpop.f32.mrf.mxu0
    %2417 = vdwg.mxu0
    %v2418 = vtanh.pop %v2415
    %v2419 = vrot.slane %v2333, 6
    %vm2421 = vcmask 1041408
    %v2422 = vsel %vm2421, %v2418, %v2419
    %v2423 = vld [vmem:[%s1 + $0x288] sm:$0xff]
    %v2424 = vld [vmem:[%s1 + $0x290] sm:$0xff]
    %v2425 = vld [vmem:[%s1 + $0x298] sm:$0xff]
    %v2426 = vld [vmem:[%s1 + $0x2a0] sm:$0xff]
    %v2427 = vld [vmem:[%s1 + $0x39] sm:$0x1]
    %v2428 = vlaneseq
    %v2429 = vshrl.u32 %v2428, 7
    %v2430 = vsub.s32 0, %v2429
    %v2431 = vrot.slane %v2427, %v2430
    %v2433 = vsel %vm130, %v2422, 0
    %2435 = vmatprep.subr.mxu0 0.0
    %2436 = vmatpush1.msra.mxu0 0.0
    %2437 = vmatprep.subr.mxu0 0.0
    %2438 = vmatpush1.msra.mxu0 0.0
    %2439 = vmatprep.subr.mxu0 0.0
    %2440 = vmatpush1.msra.mxu0 0.0
    %2441 = vmatprep.subr.mxu0 0.0
    %2442 = vmatpush1.msra.mxu0 0.0
    %2443 = vmatprep.subr.mxu0 0.0
    %2444 = vmatpush1.msra.mxu0 0.0
    %2445 = vmatprep.subr.mxu0 0.0
    %2446 = vmatpush1.msra.mxu0 0.0
    %2447 = vmatprep.subr.mxu0 0.0
    %2448 = vmatpush1.msra.mxu0 0.0
    %2449 = vmatprep.subr.mxu0 0.0
    %2450 = vmatpush1.msra.mxu0 0.0
    %2451 = vmatprep.subr.mxu0 0.0
    %2452 = vmatpush1.msra.mxu0 0.0
    %2453 = vmatprep.subr.mxu0 0.0
    %2454 = vmatpush1.msra.mxu0 0.0
    %2455 = vmatprep.subr.mxu0 0.0
    %2456 = vmatpush1.msra.mxu0 0.0
    %2457 = vmatprep.subr.mxu0 0.0
    %2458 = vmatpush1.msra.mxu0 0.0
    %2459 = vmatprep.subr.mxu0 0.0
    %2460 = vmatpush1.msra.mxu0 %v2426
    %2461 = vmatprep.subr.mxu0 0.0
    %2462 = vmatpush1.msra.mxu0 %v2425
    %2463 = vmatprep.subr.mxu0 0.0
    %2464 = vmatpush1.msra.mxu0 %v2424
    %2465 = vmatprep.subr.mxu0 0.0
    %2466 = vmatpush1.msra.mxu0 %v2423
    %2467 = vmatprep.subr.mxu0 0.0
    %2468 = vmatpush2.msra.mxu0 0.0
    %2469 = vmatprep.subr.mxu0 0.0
    %2470 = vmatpush2.msra.mxu0 0.0
    %2471 = vmatprep.subr.mxu0 0.0
    %2472 = vmatpush2.msra.mxu0 0.0
    %2473 = vmatprep.subr.mxu0 0.0
    %2474 = vmatpush2.msra.mxu0 0.0
    %2475 = vmatprep.subr.mxu0 0.0
    %2476 = vmatpush2.msra.mxu0 0.0
    %2477 = vmatprep.subr.mxu0 0.0
    %2478 = vmatpush2.msra.mxu0 0.0
    %2479 = vmatprep.subr.mxu0 0.0
    %2480 = vmatpush2.msra.mxu0 0.0
    %2481 = vmatprep.subr.mxu0 0.0
    %2482 = vmatpush2.msra.mxu0 0.0
    %2483 = vmatprep.subr.mxu0 0.0
    %2484 = vmatpush2.msra.mxu0 0.0
    %2485 = vmatprep.subr.mxu0 0.0
    %2486 = vmatpush2.msra.mxu0 0.0
    %2487 = vmatprep.subr.mxu0 0.0
    %2488 = vmatpush2.msra.mxu0 0.0
    %2489 = vmatprep.subr.mxu0 0.0
    %2490 = vmatpush2.msra.mxu0 0.0
    %2491 = vmatprep.subr.mxu0 0.0
    %2492 = vmatpush2.msra.mxu0 0.0
    %2493 = vmatprep.subr.mxu0 0.0
    %2494 = vmatpush2.msra.mxu0 0.0
    %2495 = vmatprep.subr.mxu0 0.0
    %2496 = vmatpush2.msra.mxu0 0.0
    %2497 = vmatprep.subr.mxu0 0.0
    %2498 = vmatpush2.msra.mxu0 0.0
    %2499 = vmatprep.mubr.f32.mxu0 0.0
    %2500 = vmatmul.mubr.f32.gmra.mxu0 %v2433
    %v2501 = vpop.f32.mrf.mxu0
    %v2502 = vadd.f32 %v2431, %v2501
    %v2503 = vpop.f32.mrf.mxu0
    %2504 = vdwg.mxu0
    %2505 = vset.pattern.permute.xlu0 18
    %2506 = vperm.xlu0 %2505, %v16
    %v2507 = vpop.permute.xlu0 %2506
    %vm2508 = vcmp.eq.s32.totalorder %v31, %v2507
    %vm2509 = vcmask 9216
    %v2510 = vsel %vm2509, %v2502, -inf
    %2511 = vmax.xlane.f32.xlu0 %v2510
    %v2512 = vpop.xlane.xlu0 %2511
    %v2513 = vsub.f32 %v2502, %v2512
    %v2514 = vmul.f32 %v2513, 1.442695
    %v2515 = vpow.pop %v2514
    %v2516 = vsel %vm2509, %v2515, 0.0
    %2517 = vadd.xlane.f32.xlu0 %v2516
    %v2518 = vpop.xlane.xlu0 %2517
    %v2519 = vlog2.pop %v2518
    %v2520 = vmul.f32 %v2519, 0.6931472
    %v2521 = vadd.f32 %v2520, %v2512
    %v2522 = vsel %vm2508, %v2502, 0.0
    %v2523 = vsel %vm2509, %v2522, 0.0
    %2524 = vadd.xlane.f32.xlu0 %v2523
    %v2525 = vpop.xlane.xlu0 %2524
    %v2526 = vsub.f32 %v2521, %v2525
    %v2527 = vsel %vm2421, %v2526, 0.0
    %v2528 = vrot.slane %v2527, 4
    %v2529 = vadd.f32 %v2527, %v2528
    %v2530 = vrot.slane %v2529, 2
    %v2531 = vadd.f32 %v2529, %v2530
    %v2532 = vrot.slane %v2531, 1
    %v2533 = vadd.f32 %v2531, %v2532
    %v2534 = vmul.f32 %v2533, 0.5
    %2535 = vset.pattern.permute.xlu0 17
    %2536 = vperm.xlu0 %2535, %v16
    %v2537 = vpop.permute.xlu0 %2536
    %vm2538 = vcmp.eq.s32.totalorder %v31, %v2537
    %vm2539 = vcmask 35858
    %v2540 = vsel %vm2539, %v2502, -inf
    %2541 = vmax.xlane.f32.xlu0 %v2540
    %v2542 = vpop.xlane.xlu0 %2541
    %v2543 = vsub.f32 %v2502, %v2542
    %v2544 = vmul.f32 %v2543, 1.442695
    %v2545 = vpow.pop %v2544
    %2547 = vrot.lane.b32.xlu0 %v2545, 126
    %v2548 = vpop.permute.xlu0 %2547
    %vm2550 = vcmask 19458
    %v2551 = vsel %vm2550, %v2548, 0.0
    %2552 = vadd.xlane.f32.xlu0 %v2551
    %v2553 = vpop.xlane.xlu0 %2552
    %v2554 = vlog2.pop %v2553
    %v2555 = vmul.f32 %v2554, 0.6931472
    %v2556 = vadd.f32 %v2555, %v2542
    %v2558 = vrot.slane %v2502, 2
    %2559 = vrot.lane.b32.xlu0 %v2558, 126
    %v2560 = vpop.permute.xlu0 %2559
    %v2562 = vsel %vm2538, %v2560, 0.0
    %vm2563 = vcmask 17408
    %v2564 = vsel %vm2563, %v2562, 0.0
    %2565 = vadd.xlane.f32.xlu0 %v2564
    %v2566 = vpop.xlane.xlu0 %2565
    %v2568 = vrot.slane %v2566, 6
    %v2570 = vsub.f32 %v2556, %v2568
    %v2572 = vrot.slane %v2570, 2
    %vm2574 = vcmask 1024
    %v2575 = vsel %vm2574, %v2572, 0.0
    %v2576 = vrot.slane %v2575, 4
    %v2577 = vadd.f32 %v2575, %v2576
    %v2578 = vrot.slane %v2577, 2
    %v2579 = vadd.f32 %v2577, %v2578
    %v2580 = vrot.slane %v2579, 1
    %v2581 = vadd.f32 %v2579, %v2580
    %v2582 = vmul.f32 %v2581, 0.5
    %v2583 = vsel %vm2421, %v2502, 0.0
    %vm2584 = vcmask 15360
    %v2585 = vsel %vm2584, %v2583, 0.0
    %vm2586 = vcmp.eq.s32.totalorder %v171, 0
    %vm2587 = vcmp.eq.s32.totalorder %v31, 8
    %vm2588 = vmand %vm2586, %vm2587
    %v2589 = vsel %vm2588, %v2534, 0.0
    %v2590 = vadd.f32 %v2585, %v2589
    %vm2591 = vcmp.eq.s32.totalorder %v31, 9
    %vm2592 = vmand %vm2586, %vm2591
    %2594 = vset.pattern.permute.xlu0 0
    %2595 = vperm.xlu0 %2594, %v2582
    %v2596 = vpop.permute.xlu0 %2595
    %v2598 = vsel %vm2592, %v2596, 0.0
    %v2599 = vadd.f32 %v2590, %v2598
    %2600 = vst [vmem:[#allocation2] sm:$0xff] %v2599
    // Predicated region
    $region10: #{tpu_custom_call.1} parent=1 // pred_check
      _
    $region11: #{tpu_custom_call.1} parent=1 // pred_check_branch
      %2602 = sbr.rel (0) target = $region13
    $region12: #{tpu_custom_call.1} parent=1 // pred_region
      %s2604 = ssub.s32 128, 128
      %2605 = vsyncadd [#allocation3], %s2604
      %s2607 = sshll.u32 [#allocation2], 4
      %s2608 = int_to_ptr.vmem [resolvable:$true] %s2607
      %2610 = dma.vmem_to_hbm [thread:$0]  %s2608, 128, %s2, [#allocation3]
    $region13: #{tpu_custom_call.1} parent=1 // pred_fallthru
      _
    // Predicated region
    $region14: #{tpu_custom_call.1} parent=1 // pred_check
      _
    $region15: #{tpu_custom_call.1} parent=1 // pred_check_branch
      %2612 = sbr.rel (0) target = $region17
    $region16: #{tpu_custom_call.1} parent=1 // pred_region
      %2613 = dma.done [#allocation3], 128
    $region17: #{tpu_custom_call.1} parent=1 // pred_fallthru
      _
    %2614 = vsyncpa [#allocation3], 1

</llo_original>
